<compile_context>
chip_gen: v6e
topology: v6e:2x2x1
jax: 0.10.0
libtpu: 0.0.40
codegen_flags: <defaults>
</compile_context>

<pallas_src>
import numpy as np
import jax
import jax.numpy as jnp
from jax.experimental import pallas as pl
from jax.experimental.pallas import tpu as pltpu

EPS = 1e-5

# Model geometry.
N_BATCH = 2
H0 = W0 = 16            # input spatial
C0, C1, C2 = 4, 8, 16   # channels: input, conv1 out, conv2 out
H1 = W1 = 8             # after pool1
H2 = W2 = 4             # after pool2
FC1_IN, FC1_OUT, FC2_OUT = C2 * H2 * W2, 32, 10
FC_ROWS = 8             # batch rows padded up to a full sublane tile
OUT_PAD = 128           # FC2 output padded to a full lane tile


# ---------------------------------------------------------------------------
# Fused kernel.  Activation layouts (rows, cols):
#   a0 : (N*16, 16*4)  rows = n*16+h, cols = w*4+c
#   y1 : (N*16, 16*8)  p1 : (N*8, 8*8)
#   y2 : (N*8,  8*16)  p2 : (N*4, 4*16)
#   fc : (8, 32) / (8, 128)   (rows >= N are dead padding)
# ---------------------------------------------------------------------------
def fused_forward_kernel(a0_ref, r1_ref, m1_ref, b1_ref, sr1_ref, tc1_ref,
                         r2_ref, m2_ref, b2_ref, sr2_ref, tc2_ref,
                         sf_ref, w1p_ref, bfc1_ref, w2p_ref, bfc2_ref, o_ref):
    dot = lambda a, b: jnp.dot(a, b, preferred_element_type=jnp.float32)

    a0 = a0_ref[...]                                              # (32, 64)

    # -- conv block 1: Conv2d(4->8,3x3,p1) + BN(folded) + ReLU ---------------
    y1 = dot(dot(r1_ref[0], a0), m1_ref[0])
    y1 = y1 + dot(dot(r1_ref[1], a0), m1_ref[1])
    y1 = y1 + dot(dot(r1_ref[2], a0), m1_ref[2])
    y1 = jnp.maximum(y1 + b1_ref[...], 0.0)                       # (32, 128)
    # MaxPool2d(2,2): even/odd row selection, then even/odd col-group selection
    y1r = jnp.maximum(dot(sr1_ref[0], y1), dot(sr1_ref[1], y1))   # (16, 128)
    p1 = jnp.maximum(dot(y1r, tc1_ref[0]), dot(y1r, tc1_ref[1]))  # (16, 64)
    # Dropout: eval-mode identity.

    # -- conv block 2: Conv2d(8->16,3x3,p1) + BN(folded) + ReLU --------------
    y2 = dot(dot(r2_ref[0], p1), m2_ref[0])
    y2 = y2 + dot(dot(r2_ref[1], p1), m2_ref[1])
    y2 = y2 + dot(dot(r2_ref[2], p1), m2_ref[2])
    y2 = jnp.maximum(y2 + b2_ref[...], 0.0)                       # (16, 128)
    y2r = jnp.maximum(dot(sr2_ref[0], y2), dot(sr2_ref[1], y2))   # (8, 128)
    p2 = jnp.maximum(dot(y2r, tc2_ref[0]), dot(y2r, tc2_ref[1]))  # (8, 64)

    # -- flatten (NCHW order folded into W1P) + Linear + BN(folded) + ReLU ---
    h = dot(dot(sf_ref[0], p2), w1p_ref[0])
    h = h + dot(dot(sf_ref[1], p2), w1p_ref[1])
    h = h + dot(dot(sf_ref[2], p2), w1p_ref[2])
    h = h + dot(dot(sf_ref[3], p2), w1p_ref[3])
    h = jnp.maximum(h + bfc1_ref[...], 0.0)                       # (8, 32)

    # -- final Linear(32->10), zero-padded to 128 output lanes ---------------
    o_ref[...] = dot(h, w2p_ref[...]) + bfc2_ref[...]             # (8, 128)


def _full_spec(shape):
    ndim = len(shape)
    return pl.BlockSpec(shape, lambda i: (0,) * ndim)


def model_cnn_forward(x_nchw, consts):
    """x_nchw: (N, 4, 16, 16) float32. consts: tuple from build_kernel_constants."""
    n = x_nchw.shape[0]
    # NCHW -> (rows = n*H + h, cols = w*C + c): one tiny transpose+reshape in XLA.
    a0 = jnp.transpose(x_nchw.astype(jnp.float32), (0, 2, 3, 1)).reshape(
        n * H0, W0 * C0)
    inputs = (a0,) + tuple(consts)
    out = pl.pallas_call(
        fused_forward_kernel,
        grid=(1,),
        in_specs=[_full_spec(v.shape) for v in inputs],
        out_specs=_full_spec((FC_ROWS, OUT_PAD)),
        out_shape=jax.ShapeDtypeStruct((FC_ROWS, OUT_PAD), jnp.float32),
        compiler_params=pltpu.CompilerParams(
            dimension_semantics=("arbitrary",)),
    )(*inputs)
    return out[:n, :FC2_OUT]


# ---------------------------------------------------------------------------
# Init-time constant construction (BN fold, banded conv weights, pool/flatten
# selection matrices).  Pure pre-compute: zero runtime cost.
# ---------------------------------------------------------------------------
def build_kernel_constants(params, n_batch):
    (w1, b1, g1, be1, mu1, v1), (w2, b2, g2, be2, mu2, v2) = params["conv"]
    wf1, bf1, gf1, bef1, muf1, vf1 = params["fc"][0]
    wf2, bf2 = params["fc"][1]

    # Fold eval-mode BatchNorm into weights / biases.
    s1 = g1 * jax.lax.rsqrt(v1 + EPS)
    w1f, b1f = w1 * s1[:, None, None, None], (b1 - mu1) * s1 + be1
    s2 = g2 * jax.lax.rsqrt(v2 + EPS)
    w2f, b2f = w2 * s2[:, None, None, None], (b2 - mu2) * s2 + be2
    sfc = gf1 * jax.lax.rsqrt(vf1 + EPS)
    wf1f, bf1f = wf1 * sfc[:, None], (bf1 - muf1) * sfc + bef1

    def shift_rows(nrows):
        # (3, N*nrows, N*nrows): per-tap vertical shift with zero padding,
        # block-diagonal over batch.
        r = np.zeros((3, n_batch * nrows, n_batch * nrows), np.float32)
        for di in range(3):
            for n in range(n_batch):
                for ho in range(nrows):
                    hi = ho + di - 1
                    if 0 <= hi < nrows:
                        r[di, n * nrows + ho, n * nrows + hi] = 1.0
        return jnp.asarray(r)

    def banded_weights(wf, width):
        # (Cout,Cin,3,3) -> 3 banded matrices (width*Cin, width*Cout);
        # horizontal zero padding is folded into the band clipping.
        band = np.zeros((width, 3, width), np.float32)
        for wo in range(width):
            for dj in range(3):
                wi = wo + dj - 1
                if 0 <= wi < width:
                    band[wi, dj, wo] = 1.0
        cout, cin = wf.shape[0], wf.shape[1]
        mats = [jnp.einsum("xdy,kcd->xcyk", band, wf[:, :, di, :])
                  .reshape(width * cin, width * cout) for di in range(3)]
        return jnp.stack(mats)

    def pool_rows(hp_out):
        # (2, N*hp_out, N*2*hp_out): even / odd row selectors.
        s = np.zeros((2, n_batch * hp_out, n_batch * 2 * hp_out), np.float32)
        for p in range(2):
            for n in range(n_batch):
                for hp in range(hp_out):
                    s[p, n * hp_out + hp, n * 2 * hp_out + 2 * hp + p] = 1.0
        return jnp.asarray(s)

    def pool_cols(wp_out, c):
        # (2, 2*wp_out*c, wp_out*c): even / odd column-group selectors.
        t = np.zeros((2, 2 * wp_out * c, wp_out * c), np.float32)
        for p in range(2):
            for wp in range(wp_out):
                for ch in range(c):
                    t[p, (2 * wp + p) * c + ch, wp * c + ch] = 1.0
        return jnp.asarray(t)

    r1 = shift_rows(H0)                                  # (3, 32, 32)
    m1 = banded_weights(w1f, W0)                         # (3, 64, 128)
    b1row = jnp.tile(b1f, W0).reshape(1, W0 * C1)        # (1, 128)
    sr1 = pool_rows(H1)                                  # (2, 16, 32)
    tc1 = pool_cols(W1, C1)                              # (2, 128, 64)

    r2 = shift_rows(H1)                                  # (3, 16, 16)
    m2 = banded_weights(w2f, W1)                         # (3, 64, 128)
    b2row = jnp.tile(b2f, W1).reshape(1, W1 * C2)        # (1, 128)
    sr2 = pool_rows(H2)                                  # (2, 8, 16)
    tc2 = pool_cols(W2, C2)                              # (2, 128, 64)

    # FC1: fold the PyTorch NCHW flatten permutation into per-spatial-row weights.
    w1r = wf1f.reshape(FC1_OUT, C2, H2, W2)              # (j, co, h, w)
    w1p = jnp.transpose(w1r, (2, 3, 1, 0)).reshape(H2, W2 * C2, FC1_OUT)
    sf = np.zeros((H2, FC_ROWS, n_batch * H2), np.float32)
    for h in range(H2):
        for n in range(n_batch):
            sf[h, n, n * H2 + h] = 1.0
    sf = jnp.asarray(sf)
    bfc1row = bf1f.reshape(1, FC1_OUT)

    # FC2: pad 10 output features to a dense 128-lane slab.
    w2p = jnp.zeros((FC1_OUT, OUT_PAD), jnp.float32).at[:, :FC2_OUT].set(wf2.T)
    bfc2row = jnp.zeros((1, OUT_PAD), jnp.float32).at[0, :FC2_OUT].set(bf2)

    return (r1, m1, b1row, sr1, tc1, r2, m2, b2row, sr2, tc2,
            sf, w1p, bfc1row, w2p, bfc2row)


# ---------------------------------------------------------------------------
# Parameter init (PyTorch layouts: conv (O,I,kH,kW), linear (out,in)).
# ---------------------------------------------------------------------------
def init_params(key):
    def xavier(k, shape, fan_in, fan_out):
        limit = (6.0 / (fan_in + fan_out)) ** 0.5
        return jax.random.uniform(k, shape, jnp.float32, -limit, limit)

    def bn(k, c):
        kg, kb, km, kv = jax.random.split(k, 4)
        gamma = 1.0 + 0.1 * jax.random.uniform(kg, (c,), jnp.float32, -1.0, 1.0)
        beta = 0.1 * jax.random.uniform(kb, (c,), jnp.float32, -1.0, 1.0)
        mean = 0.1 * jax.random.uniform(km, (c,), jnp.float32, -1.0, 1.0)
        var = jax.random.uniform(kv, (c,), jnp.float32, 0.5, 1.5)
        return gamma, beta, mean, var

    ks = jax.random.split(key, 11)
    params = {"conv": [], "fc": []}
    w1 = xavier(ks[0], (C1, C0, 3, 3), C0 * 9, C1 * 9)
    b1 = jax.random.uniform(ks[1], (C1,), jnp.float32, -0.05, 0.05)
    params["conv"].append((w1, b1) + bn(ks[2], C1))
    w2 = xavier(ks[3], (C2, C1, 3, 3), C1 * 9, C2 * 9)
    b2 = jax.random.uniform(ks[4], (C2,), jnp.float32, -0.05, 0.05)
    params["conv"].append((w2, b2) + bn(ks[5], C2))
    wf1 = xavier(ks[6], (FC1_OUT, FC1_IN), FC1_IN, FC1_OUT)
    bf1 = jax.random.uniform(ks[7], (FC1_OUT,), jnp.float32, -0.05, 0.05)
    params["fc"].append((wf1, bf1) + bn(ks[8], FC1_OUT))
    wf2 = xavier(ks[9], (FC2_OUT, FC1_OUT), FC1_OUT, FC2_OUT)
    bf2 = jax.random.uniform(ks[10], (FC2_OUT,), jnp.float32, -0.05, 0.05)
    params["fc"].append((wf2, bf2))
    return params


# Pure-JAX reference (eval-mode ModelCNN forward) for a correctness check.
def reference_forward(x_nchw, params):
    hi = jax.lax.Precision.HIGHEST
    x = x_nchw.astype(jnp.float32)
    for w, b, g, be, mu, var in params["conv"]:
        y = jax.lax.conv_general_dilated(
            x, w, window_strides=(1, 1), padding=((1, 1), (1, 1)),
            dimension_numbers=("NCHW", "OIHW", "NCHW"), precision=hi)
        y = y + b[None, :, None, None]
        y = (y - mu[None, :, None, None]) * jax.lax.rsqrt(
            var[None, :, None, None] + EPS)
        y = y * g[None, :, None, None] + be[None, :, None, None]
        y = jnp.maximum(y, 0.0)
        x = jax.lax.reduce_window(y, -jnp.inf, jax.lax.max,
                                  (1, 1, 2, 2), (1, 1, 2, 2), "VALID")
    x = x.reshape(x.shape[0], -1)
    w, b, g, be, mu, var = params["fc"][0]
    x = jnp.matmul(x, w.T, precision=hi) + b
    x = (x - mu) * jax.lax.rsqrt(var + EPS) * g + be
    x = jnp.maximum(x, 0.0)
    w, b = params["fc"][1]
    return jnp.matmul(x, w.T, precision=hi) + b


if __name__ == "__main__":
    key = jax.random.PRNGKey(0)
    k_x, k_p = jax.random.split(key)
    params = init_params(k_p)
    consts = build_kernel_constants(params, N_BATCH)
    x = jax.random.normal(k_x, (N_BATCH, C0, H0, W0), jnp.float32)  # NCHW

    fwd = jax.jit(model_cnn_forward)
    out = jax.block_until_ready(fwd(x, consts))

    assert out.shape == (N_BATCH, FC2_OUT), out.shape
    assert bool(jnp.all(jnp.isfinite(out)))

    ref = reference_forward(x, params)
    assert bool(jnp.allclose(out, ref, rtol=2e-2, atol=2e-2)), (out, ref)
    print("KERNEL_OK")
</pallas_src>

<mosaic_0001>
module attributes {stable_mosaic.version = 11 : i64} {
  func.func @fused_forward_kernel(%arg0: i32, %arg1: memref<32x64xf32, #tpu.memory_space<vmem>>, %arg2: memref<3x32x32xf32, #tpu.memory_space<vmem>>, %arg3: memref<3x64x128xf32, #tpu.memory_space<vmem>>, %arg4: memref<1x128xf32, #tpu.memory_space<vmem>>, %arg5: memref<2x16x32xf32, #tpu.memory_space<vmem>>, %arg6: memref<2x128x64xf32, #tpu.memory_space<vmem>>, %arg7: memref<3x16x16xf32, #tpu.memory_space<vmem>>, %arg8: memref<3x64x128xf32, #tpu.memory_space<vmem>>, %arg9: memref<1x128xf32, #tpu.memory_space<vmem>>, %arg10: memref<2x8x16xf32, #tpu.memory_space<vmem>>, %arg11: memref<2x128x64xf32, #tpu.memory_space<vmem>>, %arg12: memref<4x8x8xf32, #tpu.memory_space<vmem>>, %arg13: memref<4x64x32xf32, #tpu.memory_space<vmem>>, %arg14: memref<1x32xf32, #tpu.memory_space<vmem>>, %arg15: memref<32x128xf32, #tpu.memory_space<vmem>>, %arg16: memref<1x128xf32, #tpu.memory_space<vmem>>, %arg17: memref<8x128xf32, #tpu.memory_space<vmem>>) attributes {dimension_semantics = [#tpu.dimension_semantics<arbitrary>], iteration_bounds = array<i64: 1>, scalar_prefetch = 0 : i64, scratch_operands = 0 : i64, tpu.core_type = #tpu.core_type<tc>, window_params = [{pipeline_mode = #tpu.pipeline_mode<synchronous>, transform_indices = @transform_0, window_bounds = array<i64: 32, 64>}, {pipeline_mode = #tpu.pipeline_mode<synchronous>, transform_indices = @transform_1, window_bounds = array<i64: 3, 32, 32>}, {pipeline_mode = #tpu.pipeline_mode<synchronous>, transform_indices = @transform_2, window_bounds = array<i64: 3, 64, 128>}, {pipeline_mode = #tpu.pipeline_mode<synchronous>, transform_indices = @transform_3, window_bounds = array<i64: 1, 128>}, {pipeline_mode = #tpu.pipeline_mode<synchronous>, transform_indices = @transform_4, window_bounds = array<i64: 2, 16, 32>}, {pipeline_mode = #tpu.pipeline_mode<synchronous>, transform_indices = @transform_5, window_bounds = array<i64: 2, 128, 64>}, {pipeline_mode = #tpu.pipeline_mode<synchronous>, transform_indices = @transform_6, window_bounds = array<i64: 3, 16, 16>}, {pipeline_mode = #tpu.pipeline_mode<synchronous>, transform_indices = @transform_7, window_bounds = array<i64: 3, 64, 128>}, {pipeline_mode = #tpu.pipeline_mode<synchronous>, transform_indices = @transform_8, window_bounds = array<i64: 1, 128>}, {pipeline_mode = #tpu.pipeline_mode<synchronous>, transform_indices = @transform_9, window_bounds = array<i64: 2, 8, 16>}, {pipeline_mode = #tpu.pipeline_mode<synchronous>, transform_indices = @transform_10, window_bounds = array<i64: 2, 128, 64>}, {pipeline_mode = #tpu.pipeline_mode<synchronous>, transform_indices = @transform_11, window_bounds = array<i64: 4, 8, 8>}, {pipeline_mode = #tpu.pipeline_mode<synchronous>, transform_indices = @transform_12, window_bounds = array<i64: 4, 64, 32>}, {pipeline_mode = #tpu.pipeline_mode<synchronous>, transform_indices = @transform_13, window_bounds = array<i64: 1, 32>}, {pipeline_mode = #tpu.pipeline_mode<synchronous>, transform_indices = @transform_14, window_bounds = array<i64: 32, 128>}, {pipeline_mode = #tpu.pipeline_mode<synchronous>, transform_indices = @transform_15, window_bounds = array<i64: 1, 128>}, {pipeline_mode = #tpu.pipeline_mode<synchronous>, transform_indices = @transform_16, window_bounds = array<i64: 8, 128>}]} {
    %c0 = arith.constant 0 : index
    %c0_0 = arith.constant 0 : index
    %0 = vector.load %arg1[%c0, %c0_0] : memref<32x64xf32, #tpu.memory_space<vmem>>, vector<32x64xf32>
    %c0_1 = arith.constant 0 : index
    %c0_2 = arith.constant 0 : index
    %c0_3 = arith.constant 0 : index
    %1 = vector.load %arg2[%c0_1, %c0_2, %c0_3] : memref<3x32x32xf32, #tpu.memory_space<vmem>>, vector<1x32x32xf32>
    %2 = vector.shape_cast %1 : vector<1x32x32xf32> to vector<32x32xf32>
    %cst = arith.constant dense<0.000000e+00> : vector<32x64xf32>
    %3 = tpu.matmul %2, %0, %cst {dimension_numbers = #tpu.dot_dimension_numbers<[1], [0], [0], [1], [0, 0, 1, 1], [], []>} : vector<32x32xf32>, vector<32x64xf32>, vector<32x64xf32> -> vector<32x64xf32>
    %c0_4 = arith.constant 0 : index
    %c0_5 = arith.constant 0 : index
    %c0_6 = arith.constant 0 : index
    %4 = vector.load %arg3[%c0_4, %c0_5, %c0_6] : memref<3x64x128xf32, #tpu.memory_space<vmem>>, vector<1x64x128xf32>
    %5 = vector.shape_cast %4 : vector<1x64x128xf32> to vector<64x128xf32>
    %cst_7 = arith.constant dense<0.000000e+00> : vector<32x128xf32>
    %6 = tpu.matmul %3, %5, %cst_7 {dimension_numbers = #tpu.dot_dimension_numbers<[1], [0], [0], [1], [0, 0, 1, 1], [], []>} : vector<32x64xf32>, vector<64x128xf32>, vector<32x128xf32> -> vector<32x128xf32>
    %c1 = arith.constant 1 : index
    %c0_8 = arith.constant 0 : index
    %c0_9 = arith.constant 0 : index
    %7 = vector.load %arg2[%c1, %c0_8, %c0_9] : memref<3x32x32xf32, #tpu.memory_space<vmem>>, vector<1x32x32xf32>
    %8 = vector.shape_cast %7 : vector<1x32x32xf32> to vector<32x32xf32>
    %cst_10 = arith.constant dense<0.000000e+00> : vector<32x64xf32>
    %9 = tpu.matmul %8, %0, %cst_10 {dimension_numbers = #tpu.dot_dimension_numbers<[1], [0], [0], [1], [0, 0, 1, 1], [], []>} : vector<32x32xf32>, vector<32x64xf32>, vector<32x64xf32> -> vector<32x64xf32>
    %c1_11 = arith.constant 1 : index
    %c0_12 = arith.constant 0 : index
    %c0_13 = arith.constant 0 : index
    %10 = vector.load %arg3[%c1_11, %c0_12, %c0_13] : memref<3x64x128xf32, #tpu.memory_space<vmem>>, vector<1x64x128xf32>
    %11 = vector.shape_cast %10 : vector<1x64x128xf32> to vector<64x128xf32>
    %cst_14 = arith.constant dense<0.000000e+00> : vector<32x128xf32>
    %12 = tpu.matmul %9, %11, %cst_14 {dimension_numbers = #tpu.dot_dimension_numbers<[1], [0], [0], [1], [0, 0, 1, 1], [], []>} : vector<32x64xf32>, vector<64x128xf32>, vector<32x128xf32> -> vector<32x128xf32>
    %13 = arith.addf %6, %12 : vector<32x128xf32>
    %c2 = arith.constant 2 : index
    %c0_15 = arith.constant 0 : index
    %c0_16 = arith.constant 0 : index
    %14 = vector.load %arg2[%c2, %c0_15, %c0_16] : memref<3x32x32xf32, #tpu.memory_space<vmem>>, vector<1x32x32xf32>
    %15 = vector.shape_cast %14 : vector<1x32x32xf32> to vector<32x32xf32>
    %cst_17 = arith.constant dense<0.000000e+00> : vector<32x64xf32>
    %16 = tpu.matmul %15, %0, %cst_17 {dimension_numbers = #tpu.dot_dimension_numbers<[1], [0], [0], [1], [0, 0, 1, 1], [], []>} : vector<32x32xf32>, vector<32x64xf32>, vector<32x64xf32> -> vector<32x64xf32>
    %c2_18 = arith.constant 2 : index
    %c0_19 = arith.constant 0 : index
    %c0_20 = arith.constant 0 : index
    %17 = vector.load %arg3[%c2_18, %c0_19, %c0_20] : memref<3x64x128xf32, #tpu.memory_space<vmem>>, vector<1x64x128xf32>
    %18 = vector.shape_cast %17 : vector<1x64x128xf32> to vector<64x128xf32>
    %cst_21 = arith.constant dense<0.000000e+00> : vector<32x128xf32>
    %19 = tpu.matmul %16, %18, %cst_21 {dimension_numbers = #tpu.dot_dimension_numbers<[1], [0], [0], [1], [0, 0, 1, 1], [], []>} : vector<32x64xf32>, vector<64x128xf32>, vector<32x128xf32> -> vector<32x128xf32>
    %20 = arith.addf %13, %19 : vector<32x128xf32>
    %c0_22 = arith.constant 0 : index
    %c0_23 = arith.constant 0 : index
    %21 = vector.load %arg4[%c0_22, %c0_23] : memref<1x128xf32, #tpu.memory_space<vmem>>, vector<1x128xf32>
    %22 = vector.broadcast %21 : vector<1x128xf32> to vector<32x128xf32>
    %23 = arith.addf %20, %22 : vector<32x128xf32>
    %cst_24 = arith.constant 0.000000e+00 : f32
    %24 = vector.broadcast %cst_24 : f32 to vector<32x128xf32>
    %25 = arith.maximumf %23, %24 : vector<32x128xf32>
    %c0_25 = arith.constant 0 : index
    %c0_26 = arith.constant 0 : index
    %c0_27 = arith.constant 0 : index
    %26 = vector.load %arg5[%c0_25, %c0_26, %c0_27] : memref<2x16x32xf32, #tpu.memory_space<vmem>>, vector<1x16x32xf32>
    %27 = vector.shape_cast %26 : vector<1x16x32xf32> to vector<16x32xf32>
    %cst_28 = arith.constant dense<0.000000e+00> : vector<16x128xf32>
    %28 = tpu.matmul %27, %25, %cst_28 {dimension_numbers = #tpu.dot_dimension_numbers<[1], [0], [0], [1], [0, 0, 1, 1], [], []>} : vector<16x32xf32>, vector<32x128xf32>, vector<16x128xf32> -> vector<16x128xf32>
    %c1_29 = arith.constant 1 : index
    %c0_30 = arith.constant 0 : index
    %c0_31 = arith.constant 0 : index
    %29 = vector.load %arg5[%c1_29, %c0_30, %c0_31] : memref<2x16x32xf32, #tpu.memory_space<vmem>>, vector<1x16x32xf32>
    %30 = vector.shape_cast %29 : vector<1x16x32xf32> to vector<16x32xf32>
    %cst_32 = arith.constant dense<0.000000e+00> : vector<16x128xf32>
    %31 = tpu.matmul %30, %25, %cst_32 {dimension_numbers = #tpu.dot_dimension_numbers<[1], [0], [0], [1], [0, 0, 1, 1], [], []>} : vector<16x32xf32>, vector<32x128xf32>, vector<16x128xf32> -> vector<16x128xf32>
    %32 = arith.maximumf %28, %31 : vector<16x128xf32>
    %c0_33 = arith.constant 0 : index
    %c0_34 = arith.constant 0 : index
    %c0_35 = arith.constant 0 : index
    %33 = vector.load %arg6[%c0_33, %c0_34, %c0_35] : memref<2x128x64xf32, #tpu.memory_space<vmem>>, vector<1x128x64xf32>
    %34 = vector.shape_cast %33 : vector<1x128x64xf32> to vector<128x64xf32>
    %cst_36 = arith.constant dense<0.000000e+00> : vector<16x64xf32>
    %35 = tpu.matmul %32, %34, %cst_36 {dimension_numbers = #tpu.dot_dimension_numbers<[1], [0], [0], [1], [0, 0, 1, 1], [], []>} : vector<16x128xf32>, vector<128x64xf32>, vector<16x64xf32> -> vector<16x64xf32>
    %c1_37 = arith.constant 1 : index
    %c0_38 = arith.constant 0 : index
    %c0_39 = arith.constant 0 : index
    %36 = vector.load %arg6[%c1_37, %c0_38, %c0_39] : memref<2x128x64xf32, #tpu.memory_space<vmem>>, vector<1x128x64xf32>
    %37 = vector.shape_cast %36 : vector<1x128x64xf32> to vector<128x64xf32>
    %cst_40 = arith.constant dense<0.000000e+00> : vector<16x64xf32>
    %38 = tpu.matmul %32, %37, %cst_40 {dimension_numbers = #tpu.dot_dimension_numbers<[1], [0], [0], [1], [0, 0, 1, 1], [], []>} : vector<16x128xf32>, vector<128x64xf32>, vector<16x64xf32> -> vector<16x64xf32>
    %39 = arith.maximumf %35, %38 : vector<16x64xf32>
    %c0_41 = arith.constant 0 : index
    %c0_42 = arith.constant 0 : index
    %c0_43 = arith.constant 0 : index
    %40 = vector.load %arg7[%c0_41, %c0_42, %c0_43] : memref<3x16x16xf32, #tpu.memory_space<vmem>>, vector<1x16x16xf32>
    %41 = vector.shape_cast %40 : vector<1x16x16xf32> to vector<16x16xf32>
    %cst_44 = arith.constant dense<0.000000e+00> : vector<16x64xf32>
    %42 = tpu.matmul %41, %39, %cst_44 {dimension_numbers = #tpu.dot_dimension_numbers<[1], [0], [0], [1], [0, 0, 1, 1], [], []>} : vector<16x16xf32>, vector<16x64xf32>, vector<16x64xf32> -> vector<16x64xf32>
    %c0_45 = arith.constant 0 : index
    %c0_46 = arith.constant 0 : index
    %c0_47 = arith.constant 0 : index
    %43 = vector.load %arg8[%c0_45, %c0_46, %c0_47] : memref<3x64x128xf32, #tpu.memory_space<vmem>>, vector<1x64x128xf32>
    %44 = vector.shape_cast %43 : vector<1x64x128xf32> to vector<64x128xf32>
    %cst_48 = arith.constant dense<0.000000e+00> : vector<16x128xf32>
    %45 = tpu.matmul %42, %44, %cst_48 {dimension_numbers = #tpu.dot_dimension_numbers<[1], [0], [0], [1], [0, 0, 1, 1], [], []>} : vector<16x64xf32>, vector<64x128xf32>, vector<16x128xf32> -> vector<16x128xf32>
    %c1_49 = arith.constant 1 : index
    %c0_50 = arith.constant 0 : index
    %c0_51 = arith.constant 0 : index
    %46 = vector.load %arg7[%c1_49, %c0_50, %c0_51] : memref<3x16x16xf32, #tpu.memory_space<vmem>>, vector<1x16x16xf32>
    %47 = vector.shape_cast %46 : vector<1x16x16xf32> to vector<16x16xf32>
    %cst_52 = arith.constant dense<0.000000e+00> : vector<16x64xf32>
    %48 = tpu.matmul %47, %39, %cst_52 {dimension_numbers = #tpu.dot_dimension_numbers<[1], [0], [0], [1], [0, 0, 1, 1], [], []>} : vector<16x16xf32>, vector<16x64xf32>, vector<16x64xf32> -> vector<16x64xf32>
    %c1_53 = arith.constant 1 : index
    %c0_54 = arith.constant 0 : index
    %c0_55 = arith.constant 0 : index
    %49 = vector.load %arg8[%c1_53, %c0_54, %c0_55] : memref<3x64x128xf32, #tpu.memory_space<vmem>>, vector<1x64x128xf32>
    %50 = vector.shape_cast %49 : vector<1x64x128xf32> to vector<64x128xf32>
    %cst_56 = arith.constant dense<0.000000e+00> : vector<16x128xf32>
    %51 = tpu.matmul %48, %50, %cst_56 {dimension_numbers = #tpu.dot_dimension_numbers<[1], [0], [0], [1], [0, 0, 1, 1], [], []>} : vector<16x64xf32>, vector<64x128xf32>, vector<16x128xf32> -> vector<16x128xf32>
    %52 = arith.addf %45, %51 : vector<16x128xf32>
    %c2_57 = arith.constant 2 : index
    %c0_58 = arith.constant 0 : index
    %c0_59 = arith.constant 0 : index
    %53 = vector.load %arg7[%c2_57, %c0_58, %c0_59] : memref<3x16x16xf32, #tpu.memory_space<vmem>>, vector<1x16x16xf32>
    %54 = vector.shape_cast %53 : vector<1x16x16xf32> to vector<16x16xf32>
    %cst_60 = arith.constant dense<0.000000e+00> : vector<16x64xf32>
    %55 = tpu.matmul %54, %39, %cst_60 {dimension_numbers = #tpu.dot_dimension_numbers<[1], [0], [0], [1], [0, 0, 1, 1], [], []>} : vector<16x16xf32>, vector<16x64xf32>, vector<16x64xf32> -> vector<16x64xf32>
    %c2_61 = arith.constant 2 : index
    %c0_62 = arith.constant 0 : index
    %c0_63 = arith.constant 0 : index
    %56 = vector.load %arg8[%c2_61, %c0_62, %c0_63] : memref<3x64x128xf32, #tpu.memory_space<vmem>>, vector<1x64x128xf32>
    %57 = vector.shape_cast %56 : vector<1x64x128xf32> to vector<64x128xf32>
    %cst_64 = arith.constant dense<0.000000e+00> : vector<16x128xf32>
    %58 = tpu.matmul %55, %57, %cst_64 {dimension_numbers = #tpu.dot_dimension_numbers<[1], [0], [0], [1], [0, 0, 1, 1], [], []>} : vector<16x64xf32>, vector<64x128xf32>, vector<16x128xf32> -> vector<16x128xf32>
    %59 = arith.addf %52, %58 : vector<16x128xf32>
    %c0_65 = arith.constant 0 : index
    %c0_66 = arith.constant 0 : index
    %60 = vector.load %arg9[%c0_65, %c0_66] : memref<1x128xf32, #tpu.memory_space<vmem>>, vector<1x128xf32>
    %61 = vector.broadcast %60 : vector<1x128xf32> to vector<16x128xf32>
    %62 = arith.addf %59, %61 : vector<16x128xf32>
    %cst_67 = arith.constant 0.000000e+00 : f32
    %63 = vector.broadcast %cst_67 : f32 to vector<16x128xf32>
    %64 = arith.maximumf %62, %63 : vector<16x128xf32>
    %c0_68 = arith.constant 0 : index
    %c0_69 = arith.constant 0 : index
    %c0_70 = arith.constant 0 : index
    %65 = vector.load %arg10[%c0_68, %c0_69, %c0_70] : memref<2x8x16xf32, #tpu.memory_space<vmem>>, vector<1x8x16xf32>
    %66 = vector.shape_cast %65 : vector<1x8x16xf32> to vector<8x16xf32>
    %cst_71 = arith.constant dense<0.000000e+00> : vector<8x128xf32>
    %67 = tpu.matmul %66, %64, %cst_71 {dimension_numbers = #tpu.dot_dimension_numbers<[1], [0], [0], [1], [0, 0, 1, 1], [], []>} : vector<8x16xf32>, vector<16x128xf32>, vector<8x128xf32> -> vector<8x128xf32>
    %c1_72 = arith.constant 1 : index
    %c0_73 = arith.constant 0 : index
    %c0_74 = arith.constant 0 : index
    %68 = vector.load %arg10[%c1_72, %c0_73, %c0_74] : memref<2x8x16xf32, #tpu.memory_space<vmem>>, vector<1x8x16xf32>
    %69 = vector.shape_cast %68 : vector<1x8x16xf32> to vector<8x16xf32>
    %cst_75 = arith.constant dense<0.000000e+00> : vector<8x128xf32>
    %70 = tpu.matmul %69, %64, %cst_75 {dimension_numbers = #tpu.dot_dimension_numbers<[1], [0], [0], [1], [0, 0, 1, 1], [], []>} : vector<8x16xf32>, vector<16x128xf32>, vector<8x128xf32> -> vector<8x128xf32>
    %71 = arith.maximumf %67, %70 : vector<8x128xf32>
    %c0_76 = arith.constant 0 : index
    %c0_77 = arith.constant 0 : index
    %c0_78 = arith.constant 0 : index
    %72 = vector.load %arg11[%c0_76, %c0_77, %c0_78] : memref<2x128x64xf32, #tpu.memory_space<vmem>>, vector<1x128x64xf32>
    %73 = vector.shape_cast %72 : vector<1x128x64xf32> to vector<128x64xf32>
    %cst_79 = arith.constant dense<0.000000e+00> : vector<8x64xf32>
    %74 = tpu.matmul %71, %73, %cst_79 {dimension_numbers = #tpu.dot_dimension_numbers<[1], [0], [0], [1], [0, 0, 1, 1], [], []>} : vector<8x128xf32>, vector<128x64xf32>, vector<8x64xf32> -> vector<8x64xf32>
    %c1_80 = arith.constant 1 : index
    %c0_81 = arith.constant 0 : index
    %c0_82 = arith.constant 0 : index
    %75 = vector.load %arg11[%c1_80, %c0_81, %c0_82] : memref<2x128x64xf32, #tpu.memory_space<vmem>>, vector<1x128x64xf32>
    %76 = vector.shape_cast %75 : vector<1x128x64xf32> to vector<128x64xf32>
    %cst_83 = arith.constant dense<0.000000e+00> : vector<8x64xf32>
    %77 = tpu.matmul %71, %76, %cst_83 {dimension_numbers = #tpu.dot_dimension_numbers<[1], [0], [0], [1], [0, 0, 1, 1], [], []>} : vector<8x128xf32>, vector<128x64xf32>, vector<8x64xf32> -> vector<8x64xf32>
    %78 = arith.maximumf %74, %77 : vector<8x64xf32>
    %c0_84 = arith.constant 0 : index
    %c0_85 = arith.constant 0 : index
    %c0_86 = arith.constant 0 : index
    %79 = vector.load %arg12[%c0_84, %c0_85, %c0_86] : memref<4x8x8xf32, #tpu.memory_space<vmem>>, vector<1x8x8xf32>
    %80 = vector.shape_cast %79 : vector<1x8x8xf32> to vector<8x8xf32>
    %cst_87 = arith.constant dense<0.000000e+00> : vector<8x64xf32>
    %81 = tpu.matmul %80, %78, %cst_87 {dimension_numbers = #tpu.dot_dimension_numbers<[1], [0], [0], [1], [0, 0, 1, 1], [], []>} : vector<8x8xf32>, vector<8x64xf32>, vector<8x64xf32> -> vector<8x64xf32>
    %c0_88 = arith.constant 0 : index
    %c0_89 = arith.constant 0 : index
    %c0_90 = arith.constant 0 : index
    %82 = vector.load %arg13[%c0_88, %c0_89, %c0_90] : memref<4x64x32xf32, #tpu.memory_space<vmem>>, vector<1x64x32xf32>
    %83 = vector.shape_cast %82 : vector<1x64x32xf32> to vector<64x32xf32>
    %cst_91 = arith.constant dense<0.000000e+00> : vector<8x32xf32>
    %84 = tpu.matmul %81, %83, %cst_91 {dimension_numbers = #tpu.dot_dimension_numbers<[1], [0], [0], [1], [0, 0, 1, 1], [], []>} : vector<8x64xf32>, vector<64x32xf32>, vector<8x32xf32> -> vector<8x32xf32>
    %c1_92 = arith.constant 1 : index
    %c0_93 = arith.constant 0 : index
    %c0_94 = arith.constant 0 : index
    %85 = vector.load %arg12[%c1_92, %c0_93, %c0_94] : memref<4x8x8xf32, #tpu.memory_space<vmem>>, vector<1x8x8xf32>
    %86 = vector.shape_cast %85 : vector<1x8x8xf32> to vector<8x8xf32>
    %cst_95 = arith.constant dense<0.000000e+00> : vector<8x64xf32>
    %87 = tpu.matmul %86, %78, %cst_95 {dimension_numbers = #tpu.dot_dimension_numbers<[1], [0], [0], [1], [0, 0, 1, 1], [], []>} : vector<8x8xf32>, vector<8x64xf32>, vector<8x64xf32> -> vector<8x64xf32>
    %c1_96 = arith.constant 1 : index
    %c0_97 = arith.constant 0 : index
    %c0_98 = arith.constant 0 : index
    %88 = vector.load %arg13[%c1_96, %c0_97, %c0_98] : memref<4x64x32xf32, #tpu.memory_space<vmem>>, vector<1x64x32xf32>
    %89 = vector.shape_cast %88 : vector<1x64x32xf32> to vector<64x32xf32>
    %cst_99 = arith.constant dense<0.000000e+00> : vector<8x32xf32>
    %90 = tpu.matmul %87, %89, %cst_99 {dimension_numbers = #tpu.dot_dimension_numbers<[1], [0], [0], [1], [0, 0, 1, 1], [], []>} : vector<8x64xf32>, vector<64x32xf32>, vector<8x32xf32> -> vector<8x32xf32>
    %91 = arith.addf %84, %90 : vector<8x32xf32>
    %c2_100 = arith.constant 2 : index
    %c0_101 = arith.constant 0 : index
    %c0_102 = arith.constant 0 : index
    %92 = vector.load %arg12[%c2_100, %c0_101, %c0_102] : memref<4x8x8xf32, #tpu.memory_space<vmem>>, vector<1x8x8xf32>
    %93 = vector.shape_cast %92 : vector<1x8x8xf32> to vector<8x8xf32>
    %cst_103 = arith.constant dense<0.000000e+00> : vector<8x64xf32>
    %94 = tpu.matmul %93, %78, %cst_103 {dimension_numbers = #tpu.dot_dimension_numbers<[1], [0], [0], [1], [0, 0, 1, 1], [], []>} : vector<8x8xf32>, vector<8x64xf32>, vector<8x64xf32> -> vector<8x64xf32>
    %c2_104 = arith.constant 2 : index
    %c0_105 = arith.constant 0 : index
    %c0_106 = arith.constant 0 : index
    %95 = vector.load %arg13[%c2_104, %c0_105, %c0_106] : memref<4x64x32xf32, #tpu.memory_space<vmem>>, vector<1x64x32xf32>
    %96 = vector.shape_cast %95 : vector<1x64x32xf32> to vector<64x32xf32>
    %cst_107 = arith.constant dense<0.000000e+00> : vector<8x32xf32>
    %97 = tpu.matmul %94, %96, %cst_107 {dimension_numbers = #tpu.dot_dimension_numbers<[1], [0], [0], [1], [0, 0, 1, 1], [], []>} : vector<8x64xf32>, vector<64x32xf32>, vector<8x32xf32> -> vector<8x32xf32>
    %98 = arith.addf %91, %97 : vector<8x32xf32>
    %c3 = arith.constant 3 : index
    %c0_108 = arith.constant 0 : index
    %c0_109 = arith.constant 0 : index
    %99 = vector.load %arg12[%c3, %c0_108, %c0_109] : memref<4x8x8xf32, #tpu.memory_space<vmem>>, vector<1x8x8xf32>
    %100 = vector.shape_cast %99 : vector<1x8x8xf32> to vector<8x8xf32>
    %cst_110 = arith.constant dense<0.000000e+00> : vector<8x64xf32>
    %101 = tpu.matmul %100, %78, %cst_110 {dimension_numbers = #tpu.dot_dimension_numbers<[1], [0], [0], [1], [0, 0, 1, 1], [], []>} : vector<8x8xf32>, vector<8x64xf32>, vector<8x64xf32> -> vector<8x64xf32>
    %c3_111 = arith.constant 3 : index
    %c0_112 = arith.constant 0 : index
    %c0_113 = arith.constant 0 : index
    %102 = vector.load %arg13[%c3_111, %c0_112, %c0_113] : memref<4x64x32xf32, #tpu.memory_space<vmem>>, vector<1x64x32xf32>
    %103 = vector.shape_cast %102 : vector<1x64x32xf32> to vector<64x32xf32>
    %cst_114 = arith.constant dense<0.000000e+00> : vector<8x32xf32>
    %104 = tpu.matmul %101, %103, %cst_114 {dimension_numbers = #tpu.dot_dimension_numbers<[1], [0], [0], [1], [0, 0, 1, 1], [], []>} : vector<8x64xf32>, vector<64x32xf32>, vector<8x32xf32> -> vector<8x32xf32>
    %105 = arith.addf %98, %104 : vector<8x32xf32>
    %c0_115 = arith.constant 0 : index
    %c0_116 = arith.constant 0 : index
    %106 = vector.load %arg14[%c0_115, %c0_116] : memref<1x32xf32, #tpu.memory_space<vmem>>, vector<1x32xf32>
    %107 = vector.broadcast %106 : vector<1x32xf32> to vector<8x32xf32>
    %108 = arith.addf %105, %107 : vector<8x32xf32>
    %cst_117 = arith.constant 0.000000e+00 : f32
    %109 = vector.broadcast %cst_117 : f32 to vector<8x32xf32>
    %110 = arith.maximumf %108, %109 : vector<8x32xf32>
    %c0_118 = arith.constant 0 : index
    %c0_119 = arith.constant 0 : index
    %111 = vector.load %arg15[%c0_118, %c0_119] : memref<32x128xf32, #tpu.memory_space<vmem>>, vector<32x128xf32>
    %cst_120 = arith.constant dense<0.000000e+00> : vector<8x128xf32>
    %112 = tpu.matmul %110, %111, %cst_120 {dimension_numbers = #tpu.dot_dimension_numbers<[1], [0], [0], [1], [0, 0, 1, 1], [], []>} : vector<8x32xf32>, vector<32x128xf32>, vector<8x128xf32> -> vector<8x128xf32>
    %c0_121 = arith.constant 0 : index
    %c0_122 = arith.constant 0 : index
    %113 = vector.load %arg16[%c0_121, %c0_122] : memref<1x128xf32, #tpu.memory_space<vmem>>, vector<1x128xf32>
    %114 = vector.broadcast %113 : vector<1x128xf32> to vector<8x128xf32>
    %115 = arith.addf %112, %114 : vector<8x128xf32>
    %c0_123 = arith.constant 0 : index
    %c0_124 = arith.constant 0 : index
    %116 = vector.load %arg17[%c0_123, %c0_124] : memref<8x128xf32, #tpu.memory_space<vmem>>, vector<8x128xf32>
    tpu.vector_store %arg17[%c0_123, %c0_124], %115 {strides = array<i32>} : memref<8x128xf32, #tpu.memory_space<vmem>>, vector<8x128xf32>,
    return
  }
  func.func @transform_0(%arg0: i32) -> (i32, i32) {
    %c0_i32 = arith.constant 0 : i32
    %c0_i32_0 = arith.constant 0 : i32
    %c0_i32_1 = arith.constant 0 : i32
    return %c0_i32, %c0_i32_0 : i32, i32
  }
  func.func @transform_1(%arg0: i32) -> (i32, i32, i32) {
    %c0_i32 = arith.constant 0 : i32
    %c0_i32_0 = arith.constant 0 : i32
    %c0_i32_1 = arith.constant 0 : i32
    %c0_i32_2 = arith.constant 0 : i32
    return %c0_i32, %c0_i32_0, %c0_i32_1 : i32, i32, i32
  }
  func.func @transform_2(%arg0: i32) -> (i32, i32, i32) {
    %c0_i32 = arith.constant 0 : i32
    %c0_i32_0 = arith.constant 0 : i32
    %c0_i32_1 = arith.constant 0 : i32
    %c0_i32_2 = arith.constant 0 : i32
    return %c0_i32, %c0_i32_0, %c0_i32_1 : i32, i32, i32
  }
  func.func @transform_3(%arg0: i32) -> (i32, i32) {
    %c0_i32 = arith.constant 0 : i32
    %c0_i32_0 = arith.constant 0 : i32
    %c0_i32_1 = arith.constant 0 : i32
    return %c0_i32, %c0_i32_0 : i32, i32
  }
  func.func @transform_4(%arg0: i32) -> (i32, i32, i32) {
    %c0_i32 = arith.constant 0 : i32
    %c0_i32_0 = arith.constant 0 : i32
    %c0_i32_1 = arith.constant 0 : i32
    %c0_i32_2 = arith.constant 0 : i32
    return %c0_i32, %c0_i32_0, %c0_i32_1 : i32, i32, i32
  }
  func.func @transform_5(%arg0: i32) -> (i32, i32, i32) {
    %c0_i32 = arith.constant 0 : i32
    %c0_i32_0 = arith.constant 0 : i32
    %c0_i32_1 = arith.constant 0 : i32
    %c0_i32_2 = arith.constant 0 : i32
    return %c0_i32, %c0_i32_0, %c0_i32_1 : i32, i32, i32
  }
  func.func @transform_6(%arg0: i32) -> (i32, i32, i32) {
    %c0_i32 = arith.constant 0 : i32
    %c0_i32_0 = arith.constant 0 : i32
    %c0_i32_1 = arith.constant 0 : i32
    %c0_i32_2 = arith.constant 0 : i32
    return %c0_i32, %c0_i32_0, %c0_i32_1 : i32, i32, i32
  }
  func.func @transform_7(%arg0: i32) -> (i32, i32, i32) {
    %c0_i32 = arith.constant 0 : i32
    %c0_i32_0 = arith.constant 0 : i32
    %c0_i32_1 = arith.constant 0 : i32
    %c0_i32_2 = arith.constant 0 : i32
    return %c0_i32, %c0_i32_0, %c0_i32_1 : i32, i32, i32
  }
  func.func @transform_8(%arg0: i32) -> (i32, i32) {
    %c0_i32 = arith.constant 0 : i32
    %c0_i32_0 = arith.constant 0 : i32
    %c0_i32_1 = arith.constant 0 : i32
    return %c0_i32, %c0_i32_0 : i32, i32
  }
  func.func @transform_9(%arg0: i32) -> (i32, i32, i32) {
    %c0_i32 = arith.constant 0 : i32
    %c0_i32_0 = arith.constant 0 : i32
    %c0_i32_1 = arith.constant 0 : i32
    %c0_i32_2 = arith.constant 0 : i32
    return %c0_i32, %c0_i32_0, %c0_i32_1 : i32, i32, i32
  }
  func.func @transform_10(%arg0: i32) -> (i32, i32, i32) {
    %c0_i32 = arith.constant 0 : i32
    %c0_i32_0 = arith.constant 0 : i32
    %c0_i32_1 = arith.constant 0 : i32
    %c0_i32_2 = arith.constant 0 : i32
    return %c0_i32, %c0_i32_0, %c0_i32_1 : i32, i32, i32
  }
  func.func @transform_11(%arg0: i32) -> (i32, i32, i32) {
    %c0_i32 = arith.constant 0 : i32
    %c0_i32_0 = arith.constant 0 : i32
    %c0_i32_1 = arith.constant 0 : i32
    %c0_i32_2 = arith.constant 0 : i32
    return %c0_i32, %c0_i32_0, %c0_i32_1 : i32, i32, i32
  }
  func.func @transform_12(%arg0: i32) -> (i32, i32, i32) {
    %c0_i32 = arith.constant 0 : i32
    %c0_i32_0 = arith.constant 0 : i32
    %c0_i32_1 = arith.constant 0 : i32
    %c0_i32_2 = arith.constant 0 : i32
    return %c0_i32, %c0_i32_0, %c0_i32_1 : i32, i32, i32
  }
  func.func @transform_13(%arg0: i32) -> (i32, i32) {
    %c0_i32 = arith.constant 0 : i32
    %c0_i32_0 = arith.constant 0 : i32
    %c0_i32_1 = arith.constant 0 : i32
    return %c0_i32, %c0_i32_0 : i32, i32
  }
  func.func @transform_14(%arg0: i32) -> (i32, i32) {
    %c0_i32 = arith.constant 0 : i32
    %c0_i32_0 = arith.constant 0 : i32
    %c0_i32_1 = arith.constant 0 : i32
    return %c0_i32, %c0_i32_0 : i32, i32
  }
  func.func @transform_15(%arg0: i32) -> (i32, i32) {
    %c0_i32 = arith.constant 0 : i32
    %c0_i32_0 = arith.constant 0 : i32
    %c0_i32_1 = arith.constant 0 : i32
    return %c0_i32, %c0_i32_0 : i32, i32
  }
  func.func @transform_16(%arg0: i32) -> (i32, i32) {
    %c0_i32 = arith.constant 0 : i32
    %c0_i32_0 = arith.constant 0 : i32
    %c0_i32_1 = arith.constant 0 : i32
    return %c0_i32, %c0_i32_0 : i32, i32
  }
}

</mosaic_0001>

<llo_original>
// kernel: model_cnn_forward.1
$region0: #{model_cnn_forward.1}
  #allocation0 [shape = 'u32[]', space=smem, size = 0x4, offset = 0x4, fixed_abs, tag = 'smem constant byte address 0x4 - core index']
  #allocation1 [shape = 'u32[144,128]{1,0:T(1,128)}', space=vmem, size = 0x12000, scoped, tag = 'internal scratch']
  %s0 = inlined_call_operand.vmem [shape: f32[32,64], index: 0, kind: input, shape index: {}]
  %s1 = inlined_call_operand.vmem [shape: f32[3,32,32], index: 1, kind: input, shape index: {}]
  %s2 = inlined_call_operand.vmem [shape: f32[3,64,128], index: 2, kind: input, shape index: {}]
  %s3 = inlined_call_operand.vmem [shape: f32[1,128], index: 3, kind: input, shape index: {}]
  %s4 = inlined_call_operand.vmem [shape: f32[2,16,32], index: 4, kind: input, shape index: {}]
  %s5 = inlined_call_operand.vmem [shape: f32[2,128,64], index: 5, kind: input, shape index: {}]
  %s6 = inlined_call_operand.vmem [shape: f32[3,16,16], index: 6, kind: input, shape index: {}]
  %s7 = inlined_call_operand.vmem [shape: f32[3,64,128], index: 7, kind: input, shape index: {}]
  %s8 = inlined_call_operand.vmem [shape: f32[1,128], index: 8, kind: input, shape index: {}]
  %s9 = inlined_call_operand.vmem [shape: f32[2,8,16], index: 9, kind: input, shape index: {}]
  %s10 = inlined_call_operand.vmem [shape: f32[2,128,64], index: 10, kind: input, shape index: {}]
  %s11 = inlined_call_operand.vmem [shape: f32[4,8,8], index: 11, kind: input, shape index: {}]
  %s12 = inlined_call_operand.vmem [shape: f32[4,64,32], index: 12, kind: input, shape index: {}]
  %s13 = inlined_call_operand.vmem [shape: f32[1,32], index: 13, kind: input, shape index: {}]
  %s14 = inlined_call_operand.vmem [shape: f32[32,128], index: 14, kind: input, shape index: {}]
  %s15 = inlined_call_operand.vmem [shape: f32[1,128], index: 15, kind: input, shape index: {}]
  %s16 = inlined_call_operand.vmem [shape: f32[8,128], index: 16, kind: output, shape index: {}]
  %s17 = sld [smem:[#allocation0]]
  $region74: #{model_cnn_forward.1} parent=0
    _
  %s19 = ssub.s32 1, %s17
  %s20 = scalar_select 0, %s19, %s17
  // Predicated region
  $region2: #{model_cnn_forward.1} parent=0 // pred_check
    _
  $region3: #{model_cnn_forward.1} parent=0 // pred_check_branch
    %22 = sbr.rel (0) target = $region5
  $region4: #{model_cnn_forward.1} parent=0 // pred_region
    _
  $region5: #{model_cnn_forward.1} parent=0 // pred_fallthru
    _
  // Predicated region
  $region6: #{model_cnn_forward.1} parent=0 // pred_check
    _
  $region7: #{model_cnn_forward.1} parent=0 // pred_check_branch
    %24 = sbr.rel (0) target = $region9
  $region8: #{model_cnn_forward.1} parent=0 // pred_region
    _
  $region9: #{model_cnn_forward.1} parent=0 // pred_fallthru
    _
  // Predicated region
  $region10: #{model_cnn_forward.1} parent=0 // pred_check
    _
  $region11: #{model_cnn_forward.1} parent=0 // pred_check_branch
    %26 = sbr.rel (0) target = $region13
  $region12: #{model_cnn_forward.1} parent=0 // pred_region
    _
  $region13: #{model_cnn_forward.1} parent=0 // pred_fallthru
    _
  // Predicated region
  $region14: #{model_cnn_forward.1} parent=0 // pred_check
    _
  $region15: #{model_cnn_forward.1} parent=0 // pred_check_branch
    %28 = sbr.rel (0) target = $region17
  $region16: #{model_cnn_forward.1} parent=0 // pred_region
    _
  $region17: #{model_cnn_forward.1} parent=0 // pred_fallthru
    _
  // Predicated region
  $region18: #{model_cnn_forward.1} parent=0 // pred_check
    _
  $region19: #{model_cnn_forward.1} parent=0 // pred_check_branch
    %30 = sbr.rel (0) target = $region21
  $region20: #{model_cnn_forward.1} parent=0 // pred_region
    _
  $region21: #{model_cnn_forward.1} parent=0 // pred_fallthru
    _
  // Predicated region
  $region22: #{model_cnn_forward.1} parent=0 // pred_check
    _
  $region23: #{model_cnn_forward.1} parent=0 // pred_check_branch
    %32 = sbr.rel (0) target = $region25
  $region24: #{model_cnn_forward.1} parent=0 // pred_region
    _
  $region25: #{model_cnn_forward.1} parent=0 // pred_fallthru
    _
  // Predicated region
  $region26: #{model_cnn_forward.1} parent=0 // pred_check
    _
  $region27: #{model_cnn_forward.1} parent=0 // pred_check_branch
    %34 = sbr.rel (0) target = $region29
  $region28: #{model_cnn_forward.1} parent=0 // pred_region
    _
  $region29: #{model_cnn_forward.1} parent=0 // pred_fallthru
    _
  // Predicated region
  $region30: #{model_cnn_forward.1} parent=0 // pred_check
    _
  $region31: #{model_cnn_forward.1} parent=0 // pred_check_branch
    %36 = sbr.rel (0) target = $region33
  $region32: #{model_cnn_forward.1} parent=0 // pred_region
    _
  $region33: #{model_cnn_forward.1} parent=0 // pred_fallthru
    _
  // Predicated region
  $region34: #{model_cnn_forward.1} parent=0 // pred_check
    _
  $region35: #{model_cnn_forward.1} parent=0 // pred_check_branch
    %38 = sbr.rel (0) target = $region37
  $region36: #{model_cnn_forward.1} parent=0 // pred_region
    _
  $region37: #{model_cnn_forward.1} parent=0 // pred_fallthru
    _
  // Predicated region
  $region38: #{model_cnn_forward.1} parent=0 // pred_check
    _
  $region39: #{model_cnn_forward.1} parent=0 // pred_check_branch
    %40 = sbr.rel (0) target = $region41
  $region40: #{model_cnn_forward.1} parent=0 // pred_region
    _
  $region41: #{model_cnn_forward.1} parent=0 // pred_fallthru
    _
  // Predicated region
  $region42: #{model_cnn_forward.1} parent=0 // pred_check
    _
  $region43: #{model_cnn_forward.1} parent=0 // pred_check_branch
    %42 = sbr.rel (0) target = $region45
  $region44: #{model_cnn_forward.1} parent=0 // pred_region
    _
  $region45: #{model_cnn_forward.1} parent=0 // pred_fallthru
    _
  // Predicated region
  $region46: #{model_cnn_forward.1} parent=0 // pred_check
    _
  $region47: #{model_cnn_forward.1} parent=0 // pred_check_branch
    %44 = sbr.rel (0) target = $region49
  $region48: #{model_cnn_forward.1} parent=0 // pred_region
    _
  $region49: #{model_cnn_forward.1} parent=0 // pred_fallthru
    _
  // Predicated region
  $region50: #{model_cnn_forward.1} parent=0 // pred_check
    _
  $region51: #{model_cnn_forward.1} parent=0 // pred_check_branch
    %46 = sbr.rel (0) target = $region53
  $region52: #{model_cnn_forward.1} parent=0 // pred_region
    _
  $region53: #{model_cnn_forward.1} parent=0 // pred_fallthru
    _
  // Predicated region
  $region54: #{model_cnn_forward.1} parent=0 // pred_check
    _
  $region55: #{model_cnn_forward.1} parent=0 // pred_check_branch
    %48 = sbr.rel (0) target = $region57
  $region56: #{model_cnn_forward.1} parent=0 // pred_region
    _
  $region57: #{model_cnn_forward.1} parent=0 // pred_fallthru
    _
  // Predicated region
  $region58: #{model_cnn_forward.1} parent=0 // pred_check
    _
  $region59: #{model_cnn_forward.1} parent=0 // pred_check_branch
    %50 = sbr.rel (0) target = $region61
  $region60: #{model_cnn_forward.1} parent=0 // pred_region
    _
  $region61: #{model_cnn_forward.1} parent=0 // pred_fallthru
    _
  // Predicated region
  $region62: #{model_cnn_forward.1} parent=0 // pred_check
    _
  $region63: #{model_cnn_forward.1} parent=0 // pred_check_branch
    %52 = sbr.rel (0) target = $region65
  $region64: #{model_cnn_forward.1} parent=0 // pred_region
    _
  $region65: #{model_cnn_forward.1} parent=0 // pred_fallthru
    _
  %v53 = vld [vmem:[%s0] sm:$0xff]
  %v54 = vld [vmem:[%s0 + $0x8] sm:$0xff]
  %v55 = vld [vmem:[%s0 + $0x10] sm:$0xff]
  %v56 = vld [vmem:[%s0 + $0x18] sm:$0xff]
  %v57 = vld [vmem:[%s1] sm:$0xff]
  %v58 = vld [vmem:[%s1 + $0x8] sm:$0xff]
  %v59 = vld [vmem:[%s1 + $0x10] sm:$0xff]
  %v60 = vld [vmem:[%s1 + $0x18] sm:$0xff]
  %vm61 = vcmask 261120
  %v63 = vsel %vm61, %v57, 0
  %v66 = vsel %vm61, %v58, 0
  %v69 = vsel %vm61, %v59, 0
  %v72 = vsel %vm61, %v60, 0
  %74 = vmatprep.subr.mxu0 0.0
  %75 = vmatpush1.msra.mxu0 0.0
  %76 = vmatprep.subr.mxu0 0.0
  %77 = vmatpush1.msra.mxu0 0.0
  %78 = vmatprep.subr.mxu0 0.0
  %79 = vmatpush1.msra.mxu0 0.0
  %80 = vmatprep.subr.mxu0 0.0
  %81 = vmatpush1.msra.mxu0 0.0
  %82 = vmatprep.subr.mxu0 0.0
  %83 = vmatpush1.msra.mxu0 0.0
  %84 = vmatprep.subr.mxu0 0.0
  %85 = vmatpush1.msra.mxu0 0.0
  %86 = vmatprep.subr.mxu0 0.0
  %87 = vmatpush1.msra.mxu0 0.0
  %88 = vmatprep.subr.mxu0 0.0
  %89 = vmatpush1.msra.mxu0 0.0
  %90 = vmatprep.subr.mxu0 0.0
  %91 = vmatpush1.msra.mxu0 0.0
  %92 = vmatprep.subr.mxu0 0.0
  %93 = vmatpush1.msra.mxu0 0.0
  %94 = vmatprep.subr.mxu0 0.0
  %95 = vmatpush1.msra.mxu0 0.0
  %96 = vmatprep.subr.mxu0 0.0
  %97 = vmatpush1.msra.mxu0 0.0
  %98 = vmatprep.subr.mxu0 0.0
  %99 = vmatpush1.msra.mxu0 %v56
  %100 = vmatprep.subr.mxu0 0.0
  %101 = vmatpush1.msra.mxu0 %v55
  %102 = vmatprep.subr.mxu0 0.0
  %103 = vmatpush1.msra.mxu0 %v54
  %104 = vmatprep.subr.mxu0 0.0
  %105 = vmatpush1.msra.mxu0 %v53
  %106 = vmatprep.subr.mxu0 0.0
  %107 = vmatpush2.msra.mxu0 0.0
  %108 = vmatprep.subr.mxu0 0.0
  %109 = vmatpush2.msra.mxu0 0.0
  %110 = vmatprep.subr.mxu0 0.0
  %111 = vmatpush2.msra.mxu0 0.0
  %112 = vmatprep.subr.mxu0 0.0
  %113 = vmatpush2.msra.mxu0 0.0
  %114 = vmatprep.subr.mxu0 0.0
  %115 = vmatpush2.msra.mxu0 0.0
  %116 = vmatprep.subr.mxu0 0.0
  %117 = vmatpush2.msra.mxu0 0.0
  %118 = vmatprep.subr.mxu0 0.0
  %119 = vmatpush2.msra.mxu0 0.0
  %120 = vmatprep.subr.mxu0 0.0
  %121 = vmatpush2.msra.mxu0 0.0
  %122 = vmatprep.subr.mxu0 0.0
  %123 = vmatpush2.msra.mxu0 0.0
  %124 = vmatprep.subr.mxu0 0.0
  %125 = vmatpush2.msra.mxu0 0.0
  %126 = vmatprep.subr.mxu0 0.0
  %127 = vmatpush2.msra.mxu0 0.0
  %128 = vmatprep.subr.mxu0 0.0
  %129 = vmatpush2.msra.mxu0 0.0
  %130 = vmatprep.subr.mxu0 0.0
  %131 = vmatpush2.msra.mxu0 0.0
  %132 = vmatprep.subr.mxu0 0.0
  %133 = vmatpush2.msra.mxu0 0.0
  %134 = vmatprep.subr.mxu0 0.0
  %135 = vmatpush2.msra.mxu0 0.0
  %136 = vmatprep.subr.mxu0 0.0
  %137 = vmatpush2.msra.mxu0 0.0
  %138 = vmatprep.mubr.f32.mxu0 0.0
  %139 = vmatmul.mubr.f32.gmra.mxu0 %v63
  %v140 = vpop.f32.mrf.mxu0
  %v141 = vadd.f32 0.0, %v140
  %v142 = vpop.f32.mrf.mxu0
  %143 = vmatprep.mubr.f32.mxu0 0.0
  %144 = vmatmul.mubr.f32.gmra.mxu0 %v66
  %v145 = vpop.f32.mrf.mxu0
  %v146 = vadd.f32 0.0, %v145
  %v147 = vpop.f32.mrf.mxu0
  %148 = vmatprep.mubr.f32.mxu0 0.0
  %149 = vmatmul.mubr.f32.gmra.mxu0 %v69
  %v150 = vpop.f32.mrf.mxu0
  %v151 = vadd.f32 0.0, %v150
  %v152 = vpop.f32.mrf.mxu0
  %153 = vmatprep.mubr.f32.mxu0 0.0
  %154 = vmatmul.mubr.f32.gmra.mxu0 %v72
  %v155 = vpop.f32.mrf.mxu0
  %v156 = vadd.f32 0.0, %v155
  %v157 = vpop.f32.mrf.mxu0
  %158 = vdwg.mxu0
  %v159 = vld [vmem:[%s2] sm:$0xff]
  %v160 = vld [vmem:[%s2 + $0x8] sm:$0xff]
  %v161 = vld [vmem:[%s2 + $0x10] sm:$0xff]
  %v162 = vld [vmem:[%s2 + $0x18] sm:$0xff]
  %v163 = vld [vmem:[%s2 + $0x20] sm:$0xff]
  %v164 = vld [vmem:[%s2 + $0x28] sm:$0xff]
  %v165 = vld [vmem:[%s2 + $0x30] sm:$0xff]
  %v166 = vld [vmem:[%s2 + $0x38] sm:$0xff]
  %s167 = scalar_lea.vmem %s1, 32
  %v168 = vld [vmem:[%s167] sm:$0xff]
  %v169 = vld [vmem:[%s167 + $0x8] sm:$0xff]
  %v170 = vld [vmem:[%s167 + $0x10] sm:$0xff]
  %v171 = vld [vmem:[%s167 + $0x18] sm:$0xff]
  %v173 = vsel %vm61, %v168, 0
  %v176 = vsel %vm61, %v169, 0
  %v179 = vsel %vm61, %v170, 0
  %v182 = vsel %vm61, %v171, 0
  %184 = vmatprep.subr.mxu0 0.0
  %185 = vmatpush1.msra.mxu0 0.0
  %186 = vmatprep.subr.mxu0 0.0
  %187 = vmatpush1.msra.mxu0 0.0
  %188 = vmatprep.subr.mxu0 0.0
  %189 = vmatpush1.msra.mxu0 0.0
  %190 = vmatprep.subr.mxu0 0.0
  %191 = vmatpush1.msra.mxu0 0.0
  %192 = vmatprep.subr.mxu0 0.0
  %193 = vmatpush1.msra.mxu0 0.0
  %194 = vmatprep.subr.mxu0 0.0
  %195 = vmatpush1.msra.mxu0 0.0
  %196 = vmatprep.subr.mxu0 0.0
  %197 = vmatpush1.msra.mxu0 0.0
  %198 = vmatprep.subr.mxu0 0.0
  %199 = vmatpush1.msra.mxu0 0.0
  %200 = vmatprep.subr.mxu0 0.0
  %201 = vmatpush1.msra.mxu0 0.0
  %202 = vmatprep.subr.mxu0 0.0
  %203 = vmatpush1.msra.mxu0 0.0
  %204 = vmatprep.subr.mxu0 0.0
  %205 = vmatpush1.msra.mxu0 0.0
  %206 = vmatprep.subr.mxu0 0.0
  %207 = vmatpush1.msra.mxu0 0.0
  %208 = vmatprep.subr.mxu0 0.0
  %209 = vmatpush1.msra.mxu0 %v56
  %210 = vmatprep.subr.mxu0 0.0
  %211 = vmatpush1.msra.mxu0 %v55
  %212 = vmatprep.subr.mxu0 0.0
  %213 = vmatpush1.msra.mxu0 %v54
  %214 = vmatprep.subr.mxu0 0.0
  %215 = vmatpush1.msra.mxu0 %v53
  %216 = vmatprep.subr.mxu0 0.0
  %217 = vmatpush2.msra.mxu0 0.0
  %218 = vmatprep.subr.mxu0 0.0
  %219 = vmatpush2.msra.mxu0 0.0
  %220 = vmatprep.subr.mxu0 0.0
  %221 = vmatpush2.msra.mxu0 0.0
  %222 = vmatprep.subr.mxu0 0.0
  %223 = vmatpush2.msra.mxu0 0.0
  %224 = vmatprep.subr.mxu0 0.0
  %225 = vmatpush2.msra.mxu0 0.0
  %226 = vmatprep.subr.mxu0 0.0
  %227 = vmatpush2.msra.mxu0 0.0
  %228 = vmatprep.subr.mxu0 0.0
  %229 = vmatpush2.msra.mxu0 0.0
  %230 = vmatprep.subr.mxu0 0.0
  %231 = vmatpush2.msra.mxu0 0.0
  %232 = vmatprep.subr.mxu0 0.0
  %233 = vmatpush2.msra.mxu0 0.0
  %234 = vmatprep.subr.mxu0 0.0
  %235 = vmatpush2.msra.mxu0 0.0
  %236 = vmatprep.subr.mxu0 0.0
  %237 = vmatpush2.msra.mxu0 0.0
  %238 = vmatprep.subr.mxu0 0.0
  %239 = vmatpush2.msra.mxu0 0.0
  %240 = vmatprep.subr.mxu0 0.0
  %241 = vmatpush2.msra.mxu0 0.0
  %242 = vmatprep.subr.mxu0 0.0
  %243 = vmatpush2.msra.mxu0 0.0
  %244 = vmatprep.subr.mxu0 0.0
  %245 = vmatpush2.msra.mxu0 0.0
  %246 = vmatprep.subr.mxu0 0.0
  %247 = vmatpush2.msra.mxu0 0.0
  %248 = vmatprep.mubr.f32.mxu0 0.0
  %249 = vmatmul.mubr.f32.gmra.mxu0 %v173
  %v250 = vpop.f32.mrf.mxu0
  %v251 = vadd.f32 0.0, %v250
  %v252 = vpop.f32.mrf.mxu0
  %253 = vmatprep.mubr.f32.mxu0 0.0
  %254 = vmatmul.mubr.f32.gmra.mxu0 %v176
  %v255 = vpop.f32.mrf.mxu0
  %v256 = vadd.f32 0.0, %v255
  %v257 = vpop.f32.mrf.mxu0
  %258 = vmatprep.mubr.f32.mxu0 0.0
  %259 = vmatmul.mubr.f32.gmra.mxu0 %v179
  %v260 = vpop.f32.mrf.mxu0
  %v261 = vadd.f32 0.0, %v260
  %v262 = vpop.f32.mrf.mxu0
  %263 = vmatprep.mubr.f32.mxu0 0.0
  %264 = vmatmul.mubr.f32.gmra.mxu0 %v182
  %v265 = vpop.f32.mrf.mxu0
  %v266 = vadd.f32 0.0, %v265
  %v267 = vpop.f32.mrf.mxu0
  %268 = vdwg.mxu0
  %s269 = scalar_lea.vmem %s2, 64
  %v270 = vld [vmem:[%s269] sm:$0xff]
  %v271 = vld [vmem:[%s269 + $0x8] sm:$0xff]
  %v272 = vld [vmem:[%s269 + $0x10] sm:$0xff]
  %v273 = vld [vmem:[%s269 + $0x18] sm:$0xff]
  %v274 = vld [vmem:[%s269 + $0x20] sm:$0xff]
  %v275 = vld [vmem:[%s269 + $0x28] sm:$0xff]
  %v276 = vld [vmem:[%s269 + $0x30] sm:$0xff]
  %v277 = vld [vmem:[%s269 + $0x38] sm:$0xff]
  %vm278 = vcmask 523264
  %v280 = vsel %vm278, %v251, 0
  %v283 = vsel %vm278, %v256, 0
  %v286 = vsel %vm278, %v261, 0
  %v289 = vsel %vm278, %v266, 0
  %291 = vmatprep.subr.mxu0 0.0
  %292 = vmatpush1.msra.mxu0 0.0
  %293 = vmatprep.subr.mxu0 0.0
  %294 = vmatpush1.msra.mxu0 0.0
  %295 = vmatprep.subr.mxu0 0.0
  %296 = vmatpush1.msra.mxu0 0.0
  %297 = vmatprep.subr.mxu0 0.0
  %298 = vmatpush1.msra.mxu0 0.0
  %299 = vmatprep.subr.mxu0 0.0
  %300 = vmatpush1.msra.mxu0 0.0
  %301 = vmatprep.subr.mxu0 0.0
  %302 = vmatpush1.msra.mxu0 0.0
  %303 = vmatprep.subr.mxu0 0.0
  %304 = vmatpush1.msra.mxu0 0.0
  %305 = vmatprep.subr.mxu0 0.0
  %306 = vmatpush1.msra.mxu0 0.0
  %307 = vmatprep.subr.mxu0 0.0
  %308 = vmatpush1.msra.mxu0 %v277
  %309 = vmatprep.subr.mxu0 0.0
  %310 = vmatpush1.msra.mxu0 %v276
  %311 = vmatprep.subr.mxu0 0.0
  %312 = vmatpush1.msra.mxu0 %v275
  %313 = vmatprep.subr.mxu0 0.0
  %314 = vmatpush1.msra.mxu0 %v274
  %315 = vmatprep.subr.mxu0 0.0
  %316 = vmatpush1.msra.mxu0 %v273
  %317 = vmatprep.subr.mxu0 0.0
  %318 = vmatpush1.msra.mxu0 %v272
  %319 = vmatprep.subr.mxu0 0.0
  %320 = vmatpush1.msra.mxu0 %v271
  %321 = vmatprep.subr.mxu0 0.0
  %322 = vmatpush1.msra.mxu0 %v270
  %323 = vmatprep.subr.mxu0 0.0
  %324 = vmatpush2.msra.mxu0 0.0
  %325 = vmatprep.subr.mxu0 0.0
  %326 = vmatpush2.msra.mxu0 0.0
  %327 = vmatprep.subr.mxu0 0.0
  %328 = vmatpush2.msra.mxu0 0.0
  %329 = vmatprep.subr.mxu0 0.0
  %330 = vmatpush2.msra.mxu0 0.0
  %331 = vmatprep.subr.mxu0 0.0
  %332 = vmatpush2.msra.mxu0 0.0
  %333 = vmatprep.subr.mxu0 0.0
  %334 = vmatpush2.msra.mxu0 0.0
  %335 = vmatprep.subr.mxu0 0.0
  %336 = vmatpush2.msra.mxu0 0.0
  %337 = vmatprep.subr.mxu0 0.0
  %338 = vmatpush2.msra.mxu0 0.0
  %339 = vmatprep.subr.mxu0 0.0
  %340 = vmatpush2.msra.mxu0 0.0
  %341 = vmatprep.subr.mxu0 0.0
  %342 = vmatpush2.msra.mxu0 0.0
  %343 = vmatprep.subr.mxu0 0.0
  %344 = vmatpush2.msra.mxu0 0.0
  %345 = vmatprep.subr.mxu0 0.0
  %346 = vmatpush2.msra.mxu0 0.0
  %347 = vmatprep.subr.mxu0 0.0
  %348 = vmatpush2.msra.mxu0 0.0
  %349 = vmatprep.subr.mxu0 0.0
  %350 = vmatpush2.msra.mxu0 0.0
  %351 = vmatprep.subr.mxu0 0.0
  %352 = vmatpush2.msra.mxu0 0.0
  %353 = vmatprep.subr.mxu0 0.0
  %354 = vmatpush2.msra.mxu0 0.0
  %355 = vmatprep.mubr.f32.mxu0 0.0
  %356 = vmatmul.mubr.f32.gmra.mxu0 %v280
  %v357 = vpop.f32.mrf.mxu0
  %v358 = vadd.f32 0.0, %v357
  %v359 = vpop.f32.mrf.mxu0
  %360 = vmatprep.mubr.f32.mxu0 0.0
  %361 = vmatmul.mubr.f32.gmra.mxu0 %v283
  %v362 = vpop.f32.mrf.mxu0
  %v363 = vadd.f32 0.0, %v362
  %v364 = vpop.f32.mrf.mxu0
  %365 = vmatprep.mubr.f32.mxu0 0.0
  %366 = vmatmul.mubr.f32.gmra.mxu0 %v286
  %v367 = vpop.f32.mrf.mxu0
  %v368 = vadd.f32 0.0, %v367
  %v369 = vpop.f32.mrf.mxu0
  %370 = vmatprep.mubr.f32.mxu0 0.0
  %371 = vmatmul.mubr.f32.gmra.mxu0 %v289
  %v372 = vpop.f32.mrf.mxu0
  %v373 = vadd.f32 0.0, %v372
  %v374 = vpop.f32.mrf.mxu0
  %375 = vdwg.mxu0
  %v377 = vsel %vm278, %v141, 0
  %v380 = vsel %vm278, %v146, 0
  %v383 = vsel %vm278, %v151, 0
  %v386 = vsel %vm278, %v156, 0
  %388 = vmatprep.subr.mxu0 0.0
  %389 = vmatpush1.msra.mxu0 0.0
  %390 = vmatprep.subr.mxu0 0.0
  %391 = vmatpush1.msra.mxu0 0.0
  %392 = vmatprep.subr.mxu0 0.0
  %393 = vmatpush1.msra.mxu0 0.0
  %394 = vmatprep.subr.mxu0 0.0
  %395 = vmatpush1.msra.mxu0 0.0
  %396 = vmatprep.subr.mxu0 0.0
  %397 = vmatpush1.msra.mxu0 0.0
  %398 = vmatprep.subr.mxu0 0.0
  %399 = vmatpush1.msra.mxu0 0.0
  %400 = vmatprep.subr.mxu0 0.0
  %401 = vmatpush1.msra.mxu0 0.0
  %402 = vmatprep.subr.mxu0 0.0
  %403 = vmatpush1.msra.mxu0 0.0
  %404 = vmatprep.subr.mxu0 0.0
  %405 = vmatpush1.msra.mxu0 %v166
  %406 = vmatprep.subr.mxu0 0.0
  %407 = vmatpush1.msra.mxu0 %v165
  %408 = vmatprep.subr.mxu0 0.0
  %409 = vmatpush1.msra.mxu0 %v164
  %410 = vmatprep.subr.mxu0 0.0
  %411 = vmatpush1.msra.mxu0 %v163
  %412 = vmatprep.subr.mxu0 0.0
  %413 = vmatpush1.msra.mxu0 %v162
  %414 = vmatprep.subr.mxu0 0.0
  %415 = vmatpush1.msra.mxu0 %v161
  %416 = vmatprep.subr.mxu0 0.0
  %417 = vmatpush1.msra.mxu0 %v160
  %418 = vmatprep.subr.mxu0 0.0
  %419 = vmatpush1.msra.mxu0 %v159
  %420 = vmatprep.subr.mxu0 0.0
  %421 = vmatpush2.msra.mxu0 0.0
  %422 = vmatprep.subr.mxu0 0.0
  %423 = vmatpush2.msra.mxu0 0.0
  %424 = vmatprep.subr.mxu0 0.0
  %425 = vmatpush2.msra.mxu0 0.0
  %426 = vmatprep.subr.mxu0 0.0
  %427 = vmatpush2.msra.mxu0 0.0
  %428 = vmatprep.subr.mxu0 0.0
  %429 = vmatpush2.msra.mxu0 0.0
  %430 = vmatprep.subr.mxu0 0.0
  %431 = vmatpush2.msra.mxu0 0.0
  %432 = vmatprep.subr.mxu0 0.0
  %433 = vmatpush2.msra.mxu0 0.0
  %434 = vmatprep.subr.mxu0 0.0
  %435 = vmatpush2.msra.mxu0 0.0
  %436 = vmatprep.subr.mxu0 0.0
  %437 = vmatpush2.msra.mxu0 0.0
  %438 = vmatprep.subr.mxu0 0.0
  %439 = vmatpush2.msra.mxu0 0.0
  %440 = vmatprep.subr.mxu0 0.0
  %441 = vmatpush2.msra.mxu0 0.0
  %442 = vmatprep.subr.mxu0 0.0
  %443 = vmatpush2.msra.mxu0 0.0
  %444 = vmatprep.subr.mxu0 0.0
  %445 = vmatpush2.msra.mxu0 0.0
  %446 = vmatprep.subr.mxu0 0.0
  %447 = vmatpush2.msra.mxu0 0.0
  %448 = vmatprep.subr.mxu0 0.0
  %449 = vmatpush2.msra.mxu0 0.0
  %450 = vmatprep.subr.mxu0 0.0
  %451 = vmatpush2.msra.mxu0 0.0
  %452 = vmatprep.mubr.f32.mxu0 0.0
  %453 = vmatmul.mubr.f32.gmra.mxu0 %v377
  %v454 = vpop.f32.mrf.mxu0
  %v455 = vadd.f32 %v358, %v454
  %v456 = vpop.f32.mrf.mxu0
  %457 = vmatprep.mubr.f32.mxu0 0.0
  %458 = vmatmul.mubr.f32.gmra.mxu0 %v380
  %v459 = vpop.f32.mrf.mxu0
  %v460 = vadd.f32 %v363, %v459
  %v461 = vpop.f32.mrf.mxu0
  %462 = vmatprep.mubr.f32.mxu0 0.0
  %463 = vmatmul.mubr.f32.gmra.mxu0 %v383
  %v464 = vpop.f32.mrf.mxu0
  %v465 = vadd.f32 %v368, %v464
  %v466 = vpop.f32.mrf.mxu0
  %467 = vmatprep.mubr.f32.mxu0 0.0
  %468 = vmatmul.mubr.f32.gmra.mxu0 %v386
  %v469 = vpop.f32.mrf.mxu0
  %v470 = vadd.f32 %v373, %v469
  %v471 = vpop.f32.mrf.mxu0
  %472 = vdwg.mxu0
  %s473 = scalar_lea.vmem %s1, 64
  %v474 = vld [vmem:[%s473] sm:$0xff]
  %v475 = vld [vmem:[%s473 + $0x8] sm:$0xff]
  %v476 = vld [vmem:[%s473 + $0x10] sm:$0xff]
  %v477 = vld [vmem:[%s473 + $0x18] sm:$0xff]
  %v479 = vsel %vm61, %v474, 0
  %v482 = vsel %vm61, %v475, 0
  %v485 = vsel %vm61, %v476, 0
  %v488 = vsel %vm61, %v477, 0
  %490 = vmatprep.subr.mxu0 0.0
  %491 = vmatpush1.msra.mxu0 0.0
  %492 = vmatprep.subr.mxu0 0.0
  %493 = vmatpush1.msra.mxu0 0.0
  %494 = vmatprep.subr.mxu0 0.0
  %495 = vmatpush1.msra.mxu0 0.0
  %496 = vmatprep.subr.mxu0 0.0
  %497 = vmatpush1.msra.mxu0 0.0
  %498 = vmatprep.subr.mxu0 0.0
  %499 = vmatpush1.msra.mxu0 0.0
  %500 = vmatprep.subr.mxu0 0.0
  %501 = vmatpush1.msra.mxu0 0.0
  %502 = vmatprep.subr.mxu0 0.0
  %503 = vmatpush1.msra.mxu0 0.0
  %504 = vmatprep.subr.mxu0 0.0
  %505 = vmatpush1.msra.mxu0 0.0
  %506 = vmatprep.subr.mxu0 0.0
  %507 = vmatpush1.msra.mxu0 0.0
  %508 = vmatprep.subr.mxu0 0.0
  %509 = vmatpush1.msra.mxu0 0.0
  %510 = vmatprep.subr.mxu0 0.0
  %511 = vmatpush1.msra.mxu0 0.0
  %512 = vmatprep.subr.mxu0 0.0
  %513 = vmatpush1.msra.mxu0 0.0
  %514 = vmatprep.subr.mxu0 0.0
  %515 = vmatpush1.msra.mxu0 %v56
  %516 = vmatprep.subr.mxu0 0.0
  %517 = vmatpush1.msra.mxu0 %v55
  %518 = vmatprep.subr.mxu0 0.0
  %519 = vmatpush1.msra.mxu0 %v54
  %520 = vmatprep.subr.mxu0 0.0
  %521 = vmatpush1.msra.mxu0 %v53
  %522 = vmatprep.subr.mxu0 0.0
  %523 = vmatpush2.msra.mxu0 0.0
  %524 = vmatprep.subr.mxu0 0.0
  %525 = vmatpush2.msra.mxu0 0.0
  %526 = vmatprep.subr.mxu0 0.0
  %527 = vmatpush2.msra.mxu0 0.0
  %528 = vmatprep.subr.mxu0 0.0
  %529 = vmatpush2.msra.mxu0 0.0
  %530 = vmatprep.subr.mxu0 0.0
  %531 = vmatpush2.msra.mxu0 0.0
  %532 = vmatprep.subr.mxu0 0.0
  %533 = vmatpush2.msra.mxu0 0.0
  %534 = vmatprep.subr.mxu0 0.0
  %535 = vmatpush2.msra.mxu0 0.0
  %536 = vmatprep.subr.mxu0 0.0
  %537 = vmatpush2.msra.mxu0 0.0
  %538 = vmatprep.subr.mxu0 0.0
  %539 = vmatpush2.msra.mxu0 0.0
  %540 = vmatprep.subr.mxu0 0.0
  %541 = vmatpush2.msra.mxu0 0.0
  %542 = vmatprep.subr.mxu0 0.0
  %543 = vmatpush2.msra.mxu0 0.0
  %544 = vmatprep.subr.mxu0 0.0
  %545 = vmatpush2.msra.mxu0 0.0
  %546 = vmatprep.subr.mxu0 0.0
  %547 = vmatpush2.msra.mxu0 0.0
  %548 = vmatprep.subr.mxu0 0.0
  %549 = vmatpush2.msra.mxu0 0.0
  %550 = vmatprep.subr.mxu0 0.0
  %551 = vmatpush2.msra.mxu0 0.0
  %552 = vmatprep.subr.mxu0 0.0
  %553 = vmatpush2.msra.mxu0 0.0
  %554 = vmatprep.mubr.f32.mxu0 0.0
  %555 = vmatmul.mubr.f32.gmra.mxu0 %v479
  %v556 = vpop.f32.mrf.mxu0
  %v557 = vadd.f32 0.0, %v556
  %v558 = vpop.f32.mrf.mxu0
  %559 = vmatprep.mubr.f32.mxu0 0.0
  %560 = vmatmul.mubr.f32.gmra.mxu0 %v482
  %v561 = vpop.f32.mrf.mxu0
  %v562 = vadd.f32 0.0, %v561
  %v563 = vpop.f32.mrf.mxu0
  %564 = vmatprep.mubr.f32.mxu0 0.0
  %565 = vmatmul.mubr.f32.gmra.mxu0 %v485
  %v566 = vpop.f32.mrf.mxu0
  %v567 = vadd.f32 0.0, %v566
  %v568 = vpop.f32.mrf.mxu0
  %569 = vmatprep.mubr.f32.mxu0 0.0
  %570 = vmatmul.mubr.f32.gmra.mxu0 %v488
  %v571 = vpop.f32.mrf.mxu0
  %v572 = vadd.f32 0.0, %v571
  %v573 = vpop.f32.mrf.mxu0
  %574 = vdwg.mxu0
  %s575 = scalar_lea.vmem %s2, 128
  %v576 = vld [vmem:[%s575] sm:$0xff]
  %v577 = vld [vmem:[%s575 + $0x8] sm:$0xff]
  %v578 = vld [vmem:[%s575 + $0x10] sm:$0xff]
  %v579 = vld [vmem:[%s575 + $0x18] sm:$0xff]
  %v580 = vld [vmem:[%s575 + $0x20] sm:$0xff]
  %v581 = vld [vmem:[%s575 + $0x28] sm:$0xff]
  %v582 = vld [vmem:[%s575 + $0x30] sm:$0xff]
  %v583 = vld [vmem:[%s575 + $0x38] sm:$0xff]
  %v585 = vsel %vm278, %v557, 0
  %v588 = vsel %vm278, %v562, 0
  %v591 = vsel %vm278, %v567, 0
  %v594 = vsel %vm278, %v572, 0
  %596 = vmatprep.subr.mxu0 0.0
  %597 = vmatpush1.msra.mxu0 0.0
  %598 = vmatprep.subr.mxu0 0.0
  %599 = vmatpush1.msra.mxu0 0.0
  %600 = vmatprep.subr.mxu0 0.0
  %601 = vmatpush1.msra.mxu0 0.0
  %602 = vmatprep.subr.mxu0 0.0
  %603 = vmatpush1.msra.mxu0 0.0
  %604 = vmatprep.subr.mxu0 0.0
  %605 = vmatpush1.msra.mxu0 0.0
  %606 = vmatprep.subr.mxu0 0.0
  %607 = vmatpush1.msra.mxu0 0.0
  %608 = vmatprep.subr.mxu0 0.0
  %609 = vmatpush1.msra.mxu0 0.0
  %610 = vmatprep.subr.mxu0 0.0
  %611 = vmatpush1.msra.mxu0 0.0
  %612 = vmatprep.subr.mxu0 0.0
  %613 = vmatpush1.msra.mxu0 %v583
  %614 = vmatprep.subr.mxu0 0.0
  %615 = vmatpush1.msra.mxu0 %v582
  %616 = vmatprep.subr.mxu0 0.0
  %617 = vmatpush1.msra.mxu0 %v581
  %618 = vmatprep.subr.mxu0 0.0
  %619 = vmatpush1.msra.mxu0 %v580
  %620 = vmatprep.subr.mxu0 0.0
  %621 = vmatpush1.msra.mxu0 %v579
  %622 = vmatprep.subr.mxu0 0.0
  %623 = vmatpush1.msra.mxu0 %v578
  %624 = vmatprep.subr.mxu0 0.0
  %625 = vmatpush1.msra.mxu0 %v577
  %626 = vmatprep.subr.mxu0 0.0
  %627 = vmatpush1.msra.mxu0 %v576
  %628 = vmatprep.subr.mxu0 0.0
  %629 = vmatpush2.msra.mxu0 0.0
  %630 = vmatprep.subr.mxu0 0.0
  %631 = vmatpush2.msra.mxu0 0.0
  %632 = vmatprep.subr.mxu0 0.0
  %633 = vmatpush2.msra.mxu0 0.0
  %634 = vmatprep.subr.mxu0 0.0
  %635 = vmatpush2.msra.mxu0 0.0
  %636 = vmatprep.subr.mxu0 0.0
  %637 = vmatpush2.msra.mxu0 0.0
  %638 = vmatprep.subr.mxu0 0.0
  %639 = vmatpush2.msra.mxu0 0.0
  %640 = vmatprep.subr.mxu0 0.0
  %641 = vmatpush2.msra.mxu0 0.0
  %642 = vmatprep.subr.mxu0 0.0
  %643 = vmatpush2.msra.mxu0 0.0
  %644 = vmatprep.subr.mxu0 0.0
  %645 = vmatpush2.msra.mxu0 0.0
  %646 = vmatprep.subr.mxu0 0.0
  %647 = vmatpush2.msra.mxu0 0.0
  %648 = vmatprep.subr.mxu0 0.0
  %649 = vmatpush2.msra.mxu0 0.0
  %650 = vmatprep.subr.mxu0 0.0
  %651 = vmatpush2.msra.mxu0 0.0
  %652 = vmatprep.subr.mxu0 0.0
  %653 = vmatpush2.msra.mxu0 0.0
  %654 = vmatprep.subr.mxu0 0.0
  %655 = vmatpush2.msra.mxu0 0.0
  %656 = vmatprep.subr.mxu0 0.0
  %657 = vmatpush2.msra.mxu0 0.0
  %658 = vmatprep.subr.mxu0 0.0
  %659 = vmatpush2.msra.mxu0 0.0
  %660 = vmatprep.mubr.f32.mxu0 0.0
  %661 = vmatmul.mubr.f32.gmra.mxu0 %v585
  %v662 = vpop.f32.mrf.mxu0
  %v663 = vadd.f32 0.0, %v662
  %v664 = vpop.f32.mrf.mxu0
  %665 = vmatprep.mubr.f32.mxu0 0.0
  %666 = vmatmul.mubr.f32.gmra.mxu0 %v588
  %v667 = vpop.f32.mrf.mxu0
  %v668 = vadd.f32 0.0, %v667
  %v669 = vpop.f32.mrf.mxu0
  %670 = vmatprep.mubr.f32.mxu0 0.0
  %671 = vmatmul.mubr.f32.gmra.mxu0 %v591
  %v672 = vpop.f32.mrf.mxu0
  %v673 = vadd.f32 0.0, %v672
  %v674 = vpop.f32.mrf.mxu0
  %675 = vmatprep.mubr.f32.mxu0 0.0
  %676 = vmatmul.mubr.f32.gmra.mxu0 %v594
  %v677 = vpop.f32.mrf.mxu0
  %v678 = vadd.f32 0.0, %v677
  %v679 = vpop.f32.mrf.mxu0
  %680 = vdwg.mxu0
  %v681 = vadd.f32 %v455, %v663
  %v682 = vadd.f32 %v460, %v668
  %v683 = vadd.f32 %v465, %v673
  %v684 = vadd.f32 %v470, %v678
  %v685 = vld [vmem:[%s3] sm:$0x1]
  %v687 = vlaneseq
  %v688 = vshrl.u32 %v687, 7
  %v689 = vsub.s32 0, %v688
  %v690 = vrot.slane %v685, %v689
  %v692 = vadd.f32 %v681, %v690
  %v693 = vadd.f32 %v682, %v690
  %v694 = vadd.f32 %v683, %v690
  %v695 = vadd.f32 %v684, %v690
  %v696 = vmax.f32 %v692, 0.0
  %v697 = vmax.f32 %v693, 0.0
  %v698 = vmax.f32 %v694, 0.0
  %v699 = vmax.f32 %v695, 0.0
  %v700 = vld [vmem:[%s4] sm:$0xff]
  %v701 = vld [vmem:[%s4 + $0x8] sm:$0xff]
  %v703 = vsel %vm61, %v700, 0
  %v706 = vsel %vm61, %v701, 0
  %708 = vmatprep.subr.mxu0 0.0
  %709 = vmatpush1.msra.mxu0 0.0
  %710 = vmatprep.subr.mxu0 0.0
  %711 = vmatpush1.msra.mxu0 0.0
  %712 = vmatprep.subr.mxu0 0.0
  %713 = vmatpush1.msra.mxu0 0.0
  %714 = vmatprep.subr.mxu0 0.0
  %715 = vmatpush1.msra.mxu0 0.0
  %716 = vmatprep.subr.mxu0 0.0
  %717 = vmatpush1.msra.mxu0 0.0
  %718 = vmatprep.subr.mxu0 0.0
  %719 = vmatpush1.msra.mxu0 0.0
  %720 = vmatprep.subr.mxu0 0.0
  %721 = vmatpush1.msra.mxu0 0.0
  %722 = vmatprep.subr.mxu0 0.0
  %723 = vmatpush1.msra.mxu0 0.0
  %724 = vmatprep.subr.mxu0 0.0
  %725 = vmatpush1.msra.mxu0 0.0
  %726 = vmatprep.subr.mxu0 0.0
  %727 = vmatpush1.msra.mxu0 0.0
  %728 = vmatprep.subr.mxu0 0.0
  %729 = vmatpush1.msra.mxu0 0.0
  %730 = vmatprep.subr.mxu0 0.0
  %731 = vmatpush1.msra.mxu0 0.0
  %732 = vmatprep.subr.mxu0 0.0
  %733 = vmatpush1.msra.mxu0 %v699
  %734 = vmatprep.subr.mxu0 0.0
  %735 = vmatpush1.msra.mxu0 %v698
  %736 = vmatprep.subr.mxu0 0.0
  %737 = vmatpush1.msra.mxu0 %v697
  %738 = vmatprep.subr.mxu0 0.0
  %739 = vmatpush1.msra.mxu0 %v696
  %740 = vmatprep.subr.mxu0 0.0
  %741 = vmatpush2.msra.mxu0 0.0
  %742 = vmatprep.subr.mxu0 0.0
  %743 = vmatpush2.msra.mxu0 0.0
  %744 = vmatprep.subr.mxu0 0.0
  %745 = vmatpush2.msra.mxu0 0.0
  %746 = vmatprep.subr.mxu0 0.0
  %747 = vmatpush2.msra.mxu0 0.0
  %748 = vmatprep.subr.mxu0 0.0
  %749 = vmatpush2.msra.mxu0 0.0
  %750 = vmatprep.subr.mxu0 0.0
  %751 = vmatpush2.msra.mxu0 0.0
  %752 = vmatprep.subr.mxu0 0.0
  %753 = vmatpush2.msra.mxu0 0.0
  %754 = vmatprep.subr.mxu0 0.0
  %755 = vmatpush2.msra.mxu0 0.0
  %756 = vmatprep.subr.mxu0 0.0
  %757 = vmatpush2.msra.mxu0 0.0
  %758 = vmatprep.subr.mxu0 0.0
  %759 = vmatpush2.msra.mxu0 0.0
  %760 = vmatprep.subr.mxu0 0.0
  %761 = vmatpush2.msra.mxu0 0.0
  %762 = vmatprep.subr.mxu0 0.0
  %763 = vmatpush2.msra.mxu0 0.0
  %764 = vmatprep.subr.mxu0 0.0
  %765 = vmatpush2.msra.mxu0 0.0
  %766 = vmatprep.subr.mxu0 0.0
  %767 = vmatpush2.msra.mxu0 0.0
  %768 = vmatprep.subr.mxu0 0.0
  %769 = vmatpush2.msra.mxu0 0.0
  %770 = vmatprep.subr.mxu0 0.0
  %771 = vmatpush2.msra.mxu0 0.0
  %772 = vmatprep.mubr.f32.mxu0 0.0
  %773 = vmatmul.mubr.f32.gmra.mxu0 %v703
  %v774 = vpop.f32.mrf.mxu0
  %v775 = vadd.f32 0.0, %v774
  %v776 = vpop.f32.mrf.mxu0
  %777 = vmatprep.mubr.f32.mxu0 0.0
  %778 = vmatmul.mubr.f32.gmra.mxu0 %v706
  %v779 = vpop.f32.mrf.mxu0
  %v780 = vadd.f32 0.0, %v779
  %v781 = vpop.f32.mrf.mxu0
  %782 = vdwg.mxu0
  %s783 = scalar_lea.vmem %s4, 16
  %v784 = vld [vmem:[%s783] sm:$0xff]
  %v785 = vld [vmem:[%s783 + $0x8] sm:$0xff]
  %v787 = vsel %vm61, %v784, 0
  %v790 = vsel %vm61, %v785, 0
  %792 = vmatprep.subr.mxu0 0.0
  %793 = vmatpush1.msra.mxu0 0.0
  %794 = vmatprep.subr.mxu0 0.0
  %795 = vmatpush1.msra.mxu0 0.0
  %796 = vmatprep.subr.mxu0 0.0
  %797 = vmatpush1.msra.mxu0 0.0
  %798 = vmatprep.subr.mxu0 0.0
  %799 = vmatpush1.msra.mxu0 0.0
  %800 = vmatprep.subr.mxu0 0.0
  %801 = vmatpush1.msra.mxu0 0.0
  %802 = vmatprep.subr.mxu0 0.0
  %803 = vmatpush1.msra.mxu0 0.0
  %804 = vmatprep.subr.mxu0 0.0
  %805 = vmatpush1.msra.mxu0 0.0
  %806 = vmatprep.subr.mxu0 0.0
  %807 = vmatpush1.msra.mxu0 0.0
  %808 = vmatprep.subr.mxu0 0.0
  %809 = vmatpush1.msra.mxu0 0.0
  %810 = vmatprep.subr.mxu0 0.0
  %811 = vmatpush1.msra.mxu0 0.0
  %812 = vmatprep.subr.mxu0 0.0
  %813 = vmatpush1.msra.mxu0 0.0
  %814 = vmatprep.subr.mxu0 0.0
  %815 = vmatpush1.msra.mxu0 0.0
  %816 = vmatprep.subr.mxu0 0.0
  %817 = vmatpush1.msra.mxu0 %v699
  %818 = vmatprep.subr.mxu0 0.0
  %819 = vmatpush1.msra.mxu0 %v698
  %820 = vmatprep.subr.mxu0 0.0
  %821 = vmatpush1.msra.mxu0 %v697
  %822 = vmatprep.subr.mxu0 0.0
  %823 = vmatpush1.msra.mxu0 %v696
  %824 = vmatprep.subr.mxu0 0.0
  %825 = vmatpush2.msra.mxu0 0.0
  %826 = vmatprep.subr.mxu0 0.0
  %827 = vmatpush2.msra.mxu0 0.0
  %828 = vmatprep.subr.mxu0 0.0
  %829 = vmatpush2.msra.mxu0 0.0
  %830 = vmatprep.subr.mxu0 0.0
  %831 = vmatpush2.msra.mxu0 0.0
  %832 = vmatprep.subr.mxu0 0.0
  %833 = vmatpush2.msra.mxu0 0.0
  %834 = vmatprep.subr.mxu0 0.0
  %835 = vmatpush2.msra.mxu0 0.0
  %836 = vmatprep.subr.mxu0 0.0
  %837 = vmatpush2.msra.mxu0 0.0
  %838 = vmatprep.subr.mxu0 0.0
  %839 = vmatpush2.msra.mxu0 0.0
  %840 = vmatprep.subr.mxu0 0.0
  %841 = vmatpush2.msra.mxu0 0.0
  %842 = vmatprep.subr.mxu0 0.0
  %843 = vmatpush2.msra.mxu0 0.0
  %844 = vmatprep.subr.mxu0 0.0
  %845 = vmatpush2.msra.mxu0 0.0
  %846 = vmatprep.subr.mxu0 0.0
  %847 = vmatpush2.msra.mxu0 0.0
  %848 = vmatprep.subr.mxu0 0.0
  %849 = vmatpush2.msra.mxu0 0.0
  %850 = vmatprep.subr.mxu0 0.0
  %851 = vmatpush2.msra.mxu0 0.0
  %852 = vmatprep.subr.mxu0 0.0
  %853 = vmatpush2.msra.mxu0 0.0
  %854 = vmatprep.subr.mxu0 0.0
  %855 = vmatpush2.msra.mxu0 0.0
  %856 = vmatprep.mubr.f32.mxu0 0.0
  %857 = vmatmul.mubr.f32.gmra.mxu0 %v787
  %v858 = vpop.f32.mrf.mxu0
  %v859 = vadd.f32 0.0, %v858
  %v860 = vpop.f32.mrf.mxu0
  %861 = vmatprep.mubr.f32.mxu0 0.0
  %862 = vmatmul.mubr.f32.gmra.mxu0 %v790
  %v863 = vpop.f32.mrf.mxu0
  %v864 = vadd.f32 0.0, %v863
  %v865 = vpop.f32.mrf.mxu0
  %866 = vdwg.mxu0
  %v867 = vmax.f32 %v775, %v859
  %v868 = vmax.f32 %v780, %v864
  %v869 = vld [vmem:[%s5] sm:$0xff]
  %v870 = vld [vmem:[%s5 + $0x8] sm:$0xff]
  %v871 = vld [vmem:[%s5 + $0x10] sm:$0xff]
  %v872 = vld [vmem:[%s5 + $0x18] sm:$0xff]
  %v873 = vld [vmem:[%s5 + $0x20] sm:$0xff]
  %v874 = vld [vmem:[%s5 + $0x28] sm:$0xff]
  %v875 = vld [vmem:[%s5 + $0x30] sm:$0xff]
  %v876 = vld [vmem:[%s5 + $0x38] sm:$0xff]
  %v877 = vld [vmem:[%s5 + $0x40] sm:$0xff]
  %v878 = vld [vmem:[%s5 + $0x48] sm:$0xff]
  %v879 = vld [vmem:[%s5 + $0x50] sm:$0xff]
  %v880 = vld [vmem:[%s5 + $0x58] sm:$0xff]
  %v881 = vld [vmem:[%s5 + $0x60] sm:$0xff]
  %v882 = vld [vmem:[%s5 + $0x68] sm:$0xff]
  %v883 = vld [vmem:[%s5 + $0x70] sm:$0xff]
  %v884 = vld [vmem:[%s5 + $0x78] sm:$0xff]
  %885 = vmatprep.subr.mxu0 0.0
  %886 = vmatpush1.msra.mxu0 %v884
  %887 = vmatprep.subr.mxu0 0.0
  %888 = vmatpush1.msra.mxu0 %v883
  %889 = vmatprep.subr.mxu0 0.0
  %890 = vmatpush1.msra.mxu0 %v882
  %891 = vmatprep.subr.mxu0 0.0
  %892 = vmatpush1.msra.mxu0 %v881
  %893 = vmatprep.subr.mxu0 0.0
  %894 = vmatpush1.msra.mxu0 %v880
  %895 = vmatprep.subr.mxu0 0.0
  %896 = vmatpush1.msra.mxu0 %v879
  %897 = vmatprep.subr.mxu0 0.0
  %898 = vmatpush1.msra.mxu0 %v878
  %899 = vmatprep.subr.mxu0 0.0
  %900 = vmatpush1.msra.mxu0 %v877
  %901 = vmatprep.subr.mxu0 0.0
  %902 = vmatpush1.msra.mxu0 %v876
  %903 = vmatprep.subr.mxu0 0.0
  %904 = vmatpush1.msra.mxu0 %v875
  %905 = vmatprep.subr.mxu0 0.0
  %906 = vmatpush1.msra.mxu0 %v874
  %907 = vmatprep.subr.mxu0 0.0
  %908 = vmatpush1.msra.mxu0 %v873
  %909 = vmatprep.subr.mxu0 0.0
  %910 = vmatpush1.msra.mxu0 %v872
  %911 = vmatprep.subr.mxu0 0.0
  %912 = vmatpush1.msra.mxu0 %v871
  %913 = vmatprep.subr.mxu0 0.0
  %914 = vmatpush1.msra.mxu0 %v870
  %915 = vmatprep.subr.mxu0 0.0
  %916 = vmatpush1.msra.mxu0 %v869
  %917 = vmatprep.subr.mxu0 0.0
  %918 = vmatpush2.msra.mxu0 0.0
  %919 = vmatprep.subr.mxu0 0.0
  %920 = vmatpush2.msra.mxu0 0.0
  %921 = vmatprep.subr.mxu0 0.0
  %922 = vmatpush2.msra.mxu0 0.0
  %923 = vmatprep.subr.mxu0 0.0
  %924 = vmatpush2.msra.mxu0 0.0
  %925 = vmatprep.subr.mxu0 0.0
  %926 = vmatpush2.msra.mxu0 0.0
  %927 = vmatprep.subr.mxu0 0.0
  %928 = vmatpush2.msra.mxu0 0.0
  %929 = vmatprep.subr.mxu0 0.0
  %930 = vmatpush2.msra.mxu0 0.0
  %931 = vmatprep.subr.mxu0 0.0
  %932 = vmatpush2.msra.mxu0 0.0
  %933 = vmatprep.subr.mxu0 0.0
  %934 = vmatpush2.msra.mxu0 0.0
  %935 = vmatprep.subr.mxu0 0.0
  %936 = vmatpush2.msra.mxu0 0.0
  %937 = vmatprep.subr.mxu0 0.0
  %938 = vmatpush2.msra.mxu0 0.0
  %939 = vmatprep.subr.mxu0 0.0
  %940 = vmatpush2.msra.mxu0 0.0
  %941 = vmatprep.subr.mxu0 0.0
  %942 = vmatpush2.msra.mxu0 0.0
  %943 = vmatprep.subr.mxu0 0.0
  %944 = vmatpush2.msra.mxu0 0.0
  %945 = vmatprep.subr.mxu0 0.0
  %946 = vmatpush2.msra.mxu0 0.0
  %947 = vmatprep.subr.mxu0 0.0
  %948 = vmatpush2.msra.mxu0 0.0
  %949 = vmatprep.mubr.f32.mxu0 0.0
  %950 = vmatmul.mubr.f32.gmra.mxu0 %v867
  %v951 = vpop.f32.mrf.mxu0
  %v952 = vadd.f32 0.0, %v951
  %v953 = vpop.f32.mrf.mxu0
  %954 = vmatprep.mubr.f32.mxu0 0.0
  %955 = vmatmul.mubr.f32.gmra.mxu0 %v868
  %v956 = vpop.f32.mrf.mxu0
  %v957 = vadd.f32 0.0, %v956
  %v958 = vpop.f32.mrf.mxu0
  %959 = vdwg.mxu0
  %s960 = scalar_lea.vmem %s5, 128
  %v961 = vld [vmem:[%s960] sm:$0xff]
  %v962 = vld [vmem:[%s960 + $0x8] sm:$0xff]
  %v963 = vld [vmem:[%s960 + $0x10] sm:$0xff]
  %v964 = vld [vmem:[%s960 + $0x18] sm:$0xff]
  %v965 = vld [vmem:[%s960 + $0x20] sm:$0xff]
  %v966 = vld [vmem:[%s960 + $0x28] sm:$0xff]
  %v967 = vld [vmem:[%s960 + $0x30] sm:$0xff]
  %v968 = vld [vmem:[%s960 + $0x38] sm:$0xff]
  %v969 = vld [vmem:[%s960 + $0x40] sm:$0xff]
  %v970 = vld [vmem:[%s960 + $0x48] sm:$0xff]
  %v971 = vld [vmem:[%s960 + $0x50] sm:$0xff]
  %v972 = vld [vmem:[%s960 + $0x58] sm:$0xff]
  %v973 = vld [vmem:[%s960 + $0x60] sm:$0xff]
  %v974 = vld [vmem:[%s960 + $0x68] sm:$0xff]
  %v975 = vld [vmem:[%s960 + $0x70] sm:$0xff]
  %v976 = vld [vmem:[%s960 + $0x78] sm:$0xff]
  %977 = vmatprep.subr.mxu0 0.0
  %978 = vmatpush1.msra.mxu0 %v976
  %979 = vmatprep.subr.mxu0 0.0
  %980 = vmatpush1.msra.mxu0 %v975
  %981 = vmatprep.subr.mxu0 0.0
  %982 = vmatpush1.msra.mxu0 %v974
  %983 = vmatprep.subr.mxu0 0.0
  %984 = vmatpush1.msra.mxu0 %v973
  %985 = vmatprep.subr.mxu0 0.0
  %986 = vmatpush1.msra.mxu0 %v972
  %987 = vmatprep.subr.mxu0 0.0
  %988 = vmatpush1.msra.mxu0 %v971
  %989 = vmatprep.subr.mxu0 0.0
  %990 = vmatpush1.msra.mxu0 %v970
  %991 = vmatprep.subr.mxu0 0.0
  %992 = vmatpush1.msra.mxu0 %v969
  %993 = vmatprep.subr.mxu0 0.0
  %994 = vmatpush1.msra.mxu0 %v968
  %995 = vmatprep.subr.mxu0 0.0
  %996 = vmatpush1.msra.mxu0 %v967
  %997 = vmatprep.subr.mxu0 0.0
  %998 = vmatpush1.msra.mxu0 %v966
  %999 = vmatprep.subr.mxu0 0.0
  %1000 = vmatpush1.msra.mxu0 %v965
  %1001 = vmatprep.subr.mxu0 0.0
  %1002 = vmatpush1.msra.mxu0 %v964
  %1003 = vmatprep.subr.mxu0 0.0
  %1004 = vmatpush1.msra.mxu0 %v963
  %1005 = vmatprep.subr.mxu0 0.0
  %1006 = vmatpush1.msra.mxu0 %v962
  %1007 = vmatprep.subr.mxu0 0.0
  %1008 = vmatpush1.msra.mxu0 %v961
  %1009 = vmatprep.subr.mxu0 0.0
  %1010 = vmatpush2.msra.mxu0 0.0
  %1011 = vmatprep.subr.mxu0 0.0
  %1012 = vmatpush2.msra.mxu0 0.0
  %1013 = vmatprep.subr.mxu0 0.0
  %1014 = vmatpush2.msra.mxu0 0.0
  %1015 = vmatprep.subr.mxu0 0.0
  %1016 = vmatpush2.msra.mxu0 0.0
  %1017 = vmatprep.subr.mxu0 0.0
  %1018 = vmatpush2.msra.mxu0 0.0
  %1019 = vmatprep.subr.mxu0 0.0
  %1020 = vmatpush2.msra.mxu0 0.0
  %1021 = vmatprep.subr.mxu0 0.0
  %1022 = vmatpush2.msra.mxu0 0.0
  %1023 = vmatprep.subr.mxu0 0.0
  %1024 = vmatpush2.msra.mxu0 0.0
  %1025 = vmatprep.subr.mxu0 0.0
  %1026 = vmatpush2.msra.mxu0 0.0
  %1027 = vmatprep.subr.mxu0 0.0
  %1028 = vmatpush2.msra.mxu0 0.0
  %1029 = vmatprep.subr.mxu0 0.0
  %1030 = vmatpush2.msra.mxu0 0.0
  %1031 = vmatprep.subr.mxu0 0.0
  %1032 = vmatpush2.msra.mxu0 0.0
  %1033 = vmatprep.subr.mxu0 0.0
  %1034 = vmatpush2.msra.mxu0 0.0
  %1035 = vmatprep.subr.mxu0 0.0
  %1036 = vmatpush2.msra.mxu0 0.0
  %1037 = vmatprep.subr.mxu0 0.0
  %1038 = vmatpush2.msra.mxu0 0.0
  %1039 = vmatprep.subr.mxu0 0.0
  %1040 = vmatpush2.msra.mxu0 0.0
  %1041 = vmatprep.mubr.f32.mxu0 0.0
  %1042 = vmatmul.mubr.f32.gmra.mxu0 %v867
  %v1043 = vpop.f32.mrf.mxu0
  %v1044 = vadd.f32 0.0, %v1043
  %v1045 = vpop.f32.mrf.mxu0
  %1046 = vmatprep.mubr.f32.mxu0 0.0
  %1047 = vmatmul.mubr.f32.gmra.mxu0 %v868
  %v1048 = vpop.f32.mrf.mxu0
  %v1049 = vadd.f32 0.0, %v1048
  %v1050 = vpop.f32.mrf.mxu0
  %1051 = vdwg.mxu0
  %v1052 = vmax.f32 %v952, %v1044
  %v1053 = vmax.f32 %v957, %v1049
  %v1054 = vld [vmem:[%s6] sm:$0xff]
  %v1055 = vld [vmem:[%s6 + $0x8] sm:$0xff]
  %vm1056 = vcmask 130048
  %v1058 = vsel %vm1056, %v1054, 0
  %v1061 = vsel %vm1056, %v1055, 0
  %1063 = vmatprep.subr.mxu0 0.0
  %1064 = vmatpush1.msra.mxu0 0.0
  %1065 = vmatprep.subr.mxu0 0.0
  %1066 = vmatpush1.msra.mxu0 0.0
  %1067 = vmatprep.subr.mxu0 0.0
  %1068 = vmatpush1.msra.mxu0 0.0
  %1069 = vmatprep.subr.mxu0 0.0
  %1070 = vmatpush1.msra.mxu0 0.0
  %1071 = vmatprep.subr.mxu0 0.0
  %1072 = vmatpush1.msra.mxu0 0.0
  %1073 = vmatprep.subr.mxu0 0.0
  %1074 = vmatpush1.msra.mxu0 0.0
  %1075 = vmatprep.subr.mxu0 0.0
  %1076 = vmatpush1.msra.mxu0 0.0
  %1077 = vmatprep.subr.mxu0 0.0
  %1078 = vmatpush1.msra.mxu0 0.0
  %1079 = vmatprep.subr.mxu0 0.0
  %1080 = vmatpush1.msra.mxu0 0.0
  %1081 = vmatprep.subr.mxu0 0.0
  %1082 = vmatpush1.msra.mxu0 0.0
  %1083 = vmatprep.subr.mxu0 0.0
  %1084 = vmatpush1.msra.mxu0 0.0
  %1085 = vmatprep.subr.mxu0 0.0
  %1086 = vmatpush1.msra.mxu0 0.0
  %1087 = vmatprep.subr.mxu0 0.0
  %1088 = vmatpush1.msra.mxu0 0.0
  %1089 = vmatprep.subr.mxu0 0.0
  %1090 = vmatpush1.msra.mxu0 0.0
  %1091 = vmatprep.subr.mxu0 0.0
  %1092 = vmatpush1.msra.mxu0 %v1053
  %1093 = vmatprep.subr.mxu0 0.0
  %1094 = vmatpush1.msra.mxu0 %v1052
  %1095 = vmatprep.subr.mxu0 0.0
  %1096 = vmatpush2.msra.mxu0 0.0
  %1097 = vmatprep.subr.mxu0 0.0
  %1098 = vmatpush2.msra.mxu0 0.0
  %1099 = vmatprep.subr.mxu0 0.0
  %1100 = vmatpush2.msra.mxu0 0.0
  %1101 = vmatprep.subr.mxu0 0.0
  %1102 = vmatpush2.msra.mxu0 0.0
  %1103 = vmatprep.subr.mxu0 0.0
  %1104 = vmatpush2.msra.mxu0 0.0
  %1105 = vmatprep.subr.mxu0 0.0
  %1106 = vmatpush2.msra.mxu0 0.0
  %1107 = vmatprep.subr.mxu0 0.0
  %1108 = vmatpush2.msra.mxu0 0.0
  %1109 = vmatprep.subr.mxu0 0.0
  %1110 = vmatpush2.msra.mxu0 0.0
  %1111 = vmatprep.subr.mxu0 0.0
  %1112 = vmatpush2.msra.mxu0 0.0
  %1113 = vmatprep.subr.mxu0 0.0
  %1114 = vmatpush2.msra.mxu0 0.0
  %1115 = vmatprep.subr.mxu0 0.0
  %1116 = vmatpush2.msra.mxu0 0.0
  %1117 = vmatprep.subr.mxu0 0.0
  %1118 = vmatpush2.msra.mxu0 0.0
  %1119 = vmatprep.subr.mxu0 0.0
  %1120 = vmatpush2.msra.mxu0 0.0
  %1121 = vmatprep.subr.mxu0 0.0
  %1122 = vmatpush2.msra.mxu0 0.0
  %1123 = vmatprep.subr.mxu0 0.0
  %1124 = vmatpush2.msra.mxu0 0.0
  %1125 = vmatprep.subr.mxu0 0.0
  %1126 = vmatpush2.msra.mxu0 0.0
  %1127 = vmatprep.mubr.f32.mxu0 0.0
  %1128 = vmatmul.mubr.f32.gmra.mxu0 %v1058
  %v1129 = vpop.f32.mrf.mxu0
  %v1130 = vadd.f32 0.0, %v1129
  %v1131 = vpop.f32.mrf.mxu0
  %1132 = vmatprep.mubr.f32.mxu0 0.0
  %1133 = vmatmul.mubr.f32.gmra.mxu0 %v1061
  %v1134 = vpop.f32.mrf.mxu0
  %v1135 = vadd.f32 0.0, %v1134
  %v1136 = vpop.f32.mrf.mxu0
  %1137 = vdwg.mxu0
  %v1138 = vld [vmem:[%s7] sm:$0xff]
  %v1139 = vld [vmem:[%s7 + $0x8] sm:$0xff]
  %v1140 = vld [vmem:[%s7 + $0x10] sm:$0xff]
  %v1141 = vld [vmem:[%s7 + $0x18] sm:$0xff]
  %v1142 = vld [vmem:[%s7 + $0x20] sm:$0xff]
  %v1143 = vld [vmem:[%s7 + $0x28] sm:$0xff]
  %v1144 = vld [vmem:[%s7 + $0x30] sm:$0xff]
  %v1145 = vld [vmem:[%s7 + $0x38] sm:$0xff]
  %s1146 = scalar_lea.vmem %s6, 16
  %v1147 = vld [vmem:[%s1146] sm:$0xff]
  %v1148 = vld [vmem:[%s1146 + $0x8] sm:$0xff]
  %v1150 = vsel %vm1056, %v1147, 0
  %v1153 = vsel %vm1056, %v1148, 0
  %1155 = vmatprep.subr.mxu0 0.0
  %1156 = vmatpush1.msra.mxu0 0.0
  %1157 = vmatprep.subr.mxu0 0.0
  %1158 = vmatpush1.msra.mxu0 0.0
  %1159 = vmatprep.subr.mxu0 0.0
  %1160 = vmatpush1.msra.mxu0 0.0
  %1161 = vmatprep.subr.mxu0 0.0
  %1162 = vmatpush1.msra.mxu0 0.0
  %1163 = vmatprep.subr.mxu0 0.0
  %1164 = vmatpush1.msra.mxu0 0.0
  %1165 = vmatprep.subr.mxu0 0.0
  %1166 = vmatpush1.msra.mxu0 0.0
  %1167 = vmatprep.subr.mxu0 0.0
  %1168 = vmatpush1.msra.mxu0 0.0
  %1169 = vmatprep.subr.mxu0 0.0
  %1170 = vmatpush1.msra.mxu0 0.0
  %1171 = vmatprep.subr.mxu0 0.0
  %1172 = vmatpush1.msra.mxu0 0.0
  %1173 = vmatprep.subr.mxu0 0.0
  %1174 = vmatpush1.msra.mxu0 0.0
  %1175 = vmatprep.subr.mxu0 0.0
  %1176 = vmatpush1.msra.mxu0 0.0
  %1177 = vmatprep.subr.mxu0 0.0
  %1178 = vmatpush1.msra.mxu0 0.0
  %1179 = vmatprep.subr.mxu0 0.0
  %1180 = vmatpush1.msra.mxu0 0.0
  %1181 = vmatprep.subr.mxu0 0.0
  %1182 = vmatpush1.msra.mxu0 0.0
  %1183 = vmatprep.subr.mxu0 0.0
  %1184 = vmatpush1.msra.mxu0 %v1053
  %1185 = vmatprep.subr.mxu0 0.0
  %1186 = vmatpush1.msra.mxu0 %v1052
  %1187 = vmatprep.subr.mxu0 0.0
  %1188 = vmatpush2.msra.mxu0 0.0
  %1189 = vmatprep.subr.mxu0 0.0
  %1190 = vmatpush2.msra.mxu0 0.0
  %1191 = vmatprep.subr.mxu0 0.0
  %1192 = vmatpush2.msra.mxu0 0.0
  %1193 = vmatprep.subr.mxu0 0.0
  %1194 = vmatpush2.msra.mxu0 0.0
  %1195 = vmatprep.subr.mxu0 0.0
  %1196 = vmatpush2.msra.mxu0 0.0
  %1197 = vmatprep.subr.mxu0 0.0
  %1198 = vmatpush2.msra.mxu0 0.0
  %1199 = vmatprep.subr.mxu0 0.0
  %1200 = vmatpush2.msra.mxu0 0.0
  %1201 = vmatprep.subr.mxu0 0.0
  %1202 = vmatpush2.msra.mxu0 0.0
  %1203 = vmatprep.subr.mxu0 0.0
  %1204 = vmatpush2.msra.mxu0 0.0
  %1205 = vmatprep.subr.mxu0 0.0
  %1206 = vmatpush2.msra.mxu0 0.0
  %1207 = vmatprep.subr.mxu0 0.0
  %1208 = vmatpush2.msra.mxu0 0.0
  %1209 = vmatprep.subr.mxu0 0.0
  %1210 = vmatpush2.msra.mxu0 0.0
  %1211 = vmatprep.subr.mxu0 0.0
  %1212 = vmatpush2.msra.mxu0 0.0
  %1213 = vmatprep.subr.mxu0 0.0
  %1214 = vmatpush2.msra.mxu0 0.0
  %1215 = vmatprep.subr.mxu0 0.0
  %1216 = vmatpush2.msra.mxu0 0.0
  %1217 = vmatprep.subr.mxu0 0.0
  %1218 = vmatpush2.msra.mxu0 0.0
  %1219 = vmatprep.mubr.f32.mxu0 0.0
  %1220 = vmatmul.mubr.f32.gmra.mxu0 %v1150
  %v1221 = vpop.f32.mrf.mxu0
  %v1222 = vadd.f32 0.0, %v1221
  %v1223 = vpop.f32.mrf.mxu0
  %1224 = vmatprep.mubr.f32.mxu0 0.0
  %1225 = vmatmul.mubr.f32.gmra.mxu0 %v1153
  %v1226 = vpop.f32.mrf.mxu0
  %v1227 = vadd.f32 0.0, %v1226
  %v1228 = vpop.f32.mrf.mxu0
  %1229 = vdwg.mxu0
  %s1230 = scalar_lea.vmem %s7, 64
  %v1231 = vld [vmem:[%s1230] sm:$0xff]
  %v1232 = vld [vmem:[%s1230 + $0x8] sm:$0xff]
  %v1233 = vld [vmem:[%s1230 + $0x10] sm:$0xff]
  %v1234 = vld [vmem:[%s1230 + $0x18] sm:$0xff]
  %v1235 = vld [vmem:[%s1230 + $0x20] sm:$0xff]
  %v1236 = vld [vmem:[%s1230 + $0x28] sm:$0xff]
  %v1237 = vld [vmem:[%s1230 + $0x30] sm:$0xff]
  %v1238 = vld [vmem:[%s1230 + $0x38] sm:$0xff]
  %v1240 = vsel %vm278, %v1222, 0
  %v1243 = vsel %vm278, %v1227, 0
  %1245 = vmatprep.subr.mxu0 0.0
  %1246 = vmatpush1.msra.mxu0 0.0
  %1247 = vmatprep.subr.mxu0 0.0
  %1248 = vmatpush1.msra.mxu0 0.0
  %1249 = vmatprep.subr.mxu0 0.0
  %1250 = vmatpush1.msra.mxu0 0.0
  %1251 = vmatprep.subr.mxu0 0.0
  %1252 = vmatpush1.msra.mxu0 0.0
  %1253 = vmatprep.subr.mxu0 0.0
  %1254 = vmatpush1.msra.mxu0 0.0
  %1255 = vmatprep.subr.mxu0 0.0
  %1256 = vmatpush1.msra.mxu0 0.0
  %1257 = vmatprep.subr.mxu0 0.0
  %1258 = vmatpush1.msra.mxu0 0.0
  %1259 = vmatprep.subr.mxu0 0.0
  %1260 = vmatpush1.msra.mxu0 0.0
  %1261 = vmatprep.subr.mxu0 0.0
  %1262 = vmatpush1.msra.mxu0 %v1238
  %1263 = vmatprep.subr.mxu0 0.0
  %1264 = vmatpush1.msra.mxu0 %v1237
  %1265 = vmatprep.subr.mxu0 0.0
  %1266 = vmatpush1.msra.mxu0 %v1236
  %1267 = vmatprep.subr.mxu0 0.0
  %1268 = vmatpush1.msra.mxu0 %v1235
  %1269 = vmatprep.subr.mxu0 0.0
  %1270 = vmatpush1.msra.mxu0 %v1234
  %1271 = vmatprep.subr.mxu0 0.0
  %1272 = vmatpush1.msra.mxu0 %v1233
  %1273 = vmatprep.subr.mxu0 0.0
  %1274 = vmatpush1.msra.mxu0 %v1232
  %1275 = vmatprep.subr.mxu0 0.0
  %1276 = vmatpush1.msra.mxu0 %v1231
  %1277 = vmatprep.subr.mxu0 0.0
  %1278 = vmatpush2.msra.mxu0 0.0
  %1279 = vmatprep.subr.mxu0 0.0
  %1280 = vmatpush2.msra.mxu0 0.0
  %1281 = vmatprep.subr.mxu0 0.0
  %1282 = vmatpush2.msra.mxu0 0.0
  %1283 = vmatprep.subr.mxu0 0.0
  %1284 = vmatpush2.msra.mxu0 0.0
  %1285 = vmatprep.subr.mxu0 0.0
  %1286 = vmatpush2.msra.mxu0 0.0
  %1287 = vmatprep.subr.mxu0 0.0
  %1288 = vmatpush2.msra.mxu0 0.0
  %1289 = vmatprep.subr.mxu0 0.0
  %1290 = vmatpush2.msra.mxu0 0.0
  %1291 = vmatprep.subr.mxu0 0.0
  %1292 = vmatpush2.msra.mxu0 0.0
  %1293 = vmatprep.subr.mxu0 0.0
  %1294 = vmatpush2.msra.mxu0 0.0
  %1295 = vmatprep.subr.mxu0 0.0
  %1296 = vmatpush2.msra.mxu0 0.0
  %1297 = vmatprep.subr.mxu0 0.0
  %1298 = vmatpush2.msra.mxu0 0.0
  %1299 = vmatprep.subr.mxu0 0.0
  %1300 = vmatpush2.msra.mxu0 0.0
  %1301 = vmatprep.subr.mxu0 0.0
  %1302 = vmatpush2.msra.mxu0 0.0
  %1303 = vmatprep.subr.mxu0 0.0
  %1304 = vmatpush2.msra.mxu0 0.0
  %1305 = vmatprep.subr.mxu0 0.0
  %1306 = vmatpush2.msra.mxu0 0.0
  %1307 = vmatprep.subr.mxu0 0.0
  %1308 = vmatpush2.msra.mxu0 0.0
  %1309 = vmatprep.mubr.f32.mxu0 0.0
  %1310 = vmatmul.mubr.f32.gmra.mxu0 %v1240
  %v1311 = vpop.f32.mrf.mxu0
  %v1312 = vadd.f32 0.0, %v1311
  %v1313 = vpop.f32.mrf.mxu0
  %1314 = vmatprep.mubr.f32.mxu0 0.0
  %1315 = vmatmul.mubr.f32.gmra.mxu0 %v1243
  %v1316 = vpop.f32.mrf.mxu0
  %v1317 = vadd.f32 0.0, %v1316
  %v1318 = vpop.f32.mrf.mxu0
  %1319 = vdwg.mxu0
  %v1321 = vsel %vm278, %v1130, 0
  %v1324 = vsel %vm278, %v1135, 0
  %1326 = vmatprep.subr.mxu0 0.0
  %1327 = vmatpush1.msra.mxu0 0.0
  %1328 = vmatprep.subr.mxu0 0.0
  %1329 = vmatpush1.msra.mxu0 0.0
  %1330 = vmatprep.subr.mxu0 0.0
  %1331 = vmatpush1.msra.mxu0 0.0
  %1332 = vmatprep.subr.mxu0 0.0
  %1333 = vmatpush1.msra.mxu0 0.0
  %1334 = vmatprep.subr.mxu0 0.0
  %1335 = vmatpush1.msra.mxu0 0.0
  %1336 = vmatprep.subr.mxu0 0.0
  %1337 = vmatpush1.msra.mxu0 0.0
  %1338 = vmatprep.subr.mxu0 0.0
  %1339 = vmatpush1.msra.mxu0 0.0
  %1340 = vmatprep.subr.mxu0 0.0
  %1341 = vmatpush1.msra.mxu0 0.0
  %1342 = vmatprep.subr.mxu0 0.0
  %1343 = vmatpush1.msra.mxu0 %v1145
  %1344 = vmatprep.subr.mxu0 0.0
  %1345 = vmatpush1.msra.mxu0 %v1144
  %1346 = vmatprep.subr.mxu0 0.0
  %1347 = vmatpush1.msra.mxu0 %v1143
  %1348 = vmatprep.subr.mxu0 0.0
  %1349 = vmatpush1.msra.mxu0 %v1142
  %1350 = vmatprep.subr.mxu0 0.0
  %1351 = vmatpush1.msra.mxu0 %v1141
  %1352 = vmatprep.subr.mxu0 0.0
  %1353 = vmatpush1.msra.mxu0 %v1140
  %1354 = vmatprep.subr.mxu0 0.0
  %1355 = vmatpush1.msra.mxu0 %v1139
  %1356 = vmatprep.subr.mxu0 0.0
  %1357 = vmatpush1.msra.mxu0 %v1138
  %1358 = vmatprep.subr.mxu0 0.0
  %1359 = vmatpush2.msra.mxu0 0.0
  %1360 = vmatprep.subr.mxu0 0.0
  %1361 = vmatpush2.msra.mxu0 0.0
  %1362 = vmatprep.subr.mxu0 0.0
  %1363 = vmatpush2.msra.mxu0 0.0
  %1364 = vmatprep.subr.mxu0 0.0
  %1365 = vmatpush2.msra.mxu0 0.0
  %1366 = vmatprep.subr.mxu0 0.0
  %1367 = vmatpush2.msra.mxu0 0.0
  %1368 = vmatprep.subr.mxu0 0.0
  %1369 = vmatpush2.msra.mxu0 0.0
  %1370 = vmatprep.subr.mxu0 0.0
  %1371 = vmatpush2.msra.mxu0 0.0
  %1372 = vmatprep.subr.mxu0 0.0
  %1373 = vmatpush2.msra.mxu0 0.0
  %1374 = vmatprep.subr.mxu0 0.0
  %1375 = vmatpush2.msra.mxu0 0.0
  %1376 = vmatprep.subr.mxu0 0.0
  %1377 = vmatpush2.msra.mxu0 0.0
  %1378 = vmatprep.subr.mxu0 0.0
  %1379 = vmatpush2.msra.mxu0 0.0
  %1380 = vmatprep.subr.mxu0 0.0
  %1381 = vmatpush2.msra.mxu0 0.0
  %1382 = vmatprep.subr.mxu0 0.0
  %1383 = vmatpush2.msra.mxu0 0.0
  %1384 = vmatprep.subr.mxu0 0.0
  %1385 = vmatpush2.msra.mxu0 0.0
  %1386 = vmatprep.subr.mxu0 0.0
  %1387 = vmatpush2.msra.mxu0 0.0
  %1388 = vmatprep.subr.mxu0 0.0
  %1389 = vmatpush2.msra.mxu0 0.0
  %1390 = vmatprep.mubr.f32.mxu0 0.0
  %1391 = vmatmul.mubr.f32.gmra.mxu0 %v1321
  %v1392 = vpop.f32.mrf.mxu0
  %v1393 = vadd.f32 %v1312, %v1392
  %v1394 = vpop.f32.mrf.mxu0
  %1395 = vmatprep.mubr.f32.mxu0 0.0
  %1396 = vmatmul.mubr.f32.gmra.mxu0 %v1324
  %v1397 = vpop.f32.mrf.mxu0
  %v1398 = vadd.f32 %v1317, %v1397
  %v1399 = vpop.f32.mrf.mxu0
  %1400 = vdwg.mxu0
  %s1401 = scalar_lea.vmem %s6, 32
  %v1402 = vld [vmem:[%s1401] sm:$0xff]
  %v1403 = vld [vmem:[%s1401 + $0x8] sm:$0xff]
  %v1405 = vsel %vm1056, %v1402, 0
  %v1408 = vsel %vm1056, %v1403, 0
  %1410 = vmatprep.subr.mxu0 0.0
  %1411 = vmatpush1.msra.mxu0 0.0
  %1412 = vmatprep.subr.mxu0 0.0
  %1413 = vmatpush1.msra.mxu0 0.0
  %1414 = vmatprep.subr.mxu0 0.0
  %1415 = vmatpush1.msra.mxu0 0.0
  %1416 = vmatprep.subr.mxu0 0.0
  %1417 = vmatpush1.msra.mxu0 0.0
  %1418 = vmatprep.subr.mxu0 0.0
  %1419 = vmatpush1.msra.mxu0 0.0
  %1420 = vmatprep.subr.mxu0 0.0
  %1421 = vmatpush1.msra.mxu0 0.0
  %1422 = vmatprep.subr.mxu0 0.0
  %1423 = vmatpush1.msra.mxu0 0.0
  %1424 = vmatprep.subr.mxu0 0.0
  %1425 = vmatpush1.msra.mxu0 0.0
  %1426 = vmatprep.subr.mxu0 0.0
  %1427 = vmatpush1.msra.mxu0 0.0
  %1428 = vmatprep.subr.mxu0 0.0
  %1429 = vmatpush1.msra.mxu0 0.0
  %1430 = vmatprep.subr.mxu0 0.0
  %1431 = vmatpush1.msra.mxu0 0.0
  %1432 = vmatprep.subr.mxu0 0.0
  %1433 = vmatpush1.msra.mxu0 0.0
  %1434 = vmatprep.subr.mxu0 0.0
  %1435 = vmatpush1.msra.mxu0 0.0
  %1436 = vmatprep.subr.mxu0 0.0
  %1437 = vmatpush1.msra.mxu0 0.0
  %1438 = vmatprep.subr.mxu0 0.0
  %1439 = vmatpush1.msra.mxu0 %v1053
  %1440 = vmatprep.subr.mxu0 0.0
  %1441 = vmatpush1.msra.mxu0 %v1052
  %1442 = vmatprep.subr.mxu0 0.0
  %1443 = vmatpush2.msra.mxu0 0.0
  %1444 = vmatprep.subr.mxu0 0.0
  %1445 = vmatpush2.msra.mxu0 0.0
  %1446 = vmatprep.subr.mxu0 0.0
  %1447 = vmatpush2.msra.mxu0 0.0
  %1448 = vmatprep.subr.mxu0 0.0
  %1449 = vmatpush2.msra.mxu0 0.0
  %1450 = vmatprep.subr.mxu0 0.0
  %1451 = vmatpush2.msra.mxu0 0.0
  %1452 = vmatprep.subr.mxu0 0.0
  %1453 = vmatpush2.msra.mxu0 0.0
  %1454 = vmatprep.subr.mxu0 0.0
  %1455 = vmatpush2.msra.mxu0 0.0
  %1456 = vmatprep.subr.mxu0 0.0
  %1457 = vmatpush2.msra.mxu0 0.0
  %1458 = vmatprep.subr.mxu0 0.0
  %1459 = vmatpush2.msra.mxu0 0.0
  %1460 = vmatprep.subr.mxu0 0.0
  %1461 = vmatpush2.msra.mxu0 0.0
  %1462 = vmatprep.subr.mxu0 0.0
  %1463 = vmatpush2.msra.mxu0 0.0
  %1464 = vmatprep.subr.mxu0 0.0
  %1465 = vmatpush2.msra.mxu0 0.0
  %1466 = vmatprep.subr.mxu0 0.0
  %1467 = vmatpush2.msra.mxu0 0.0
  %1468 = vmatprep.subr.mxu0 0.0
  %1469 = vmatpush2.msra.mxu0 0.0
  %1470 = vmatprep.subr.mxu0 0.0
  %1471 = vmatpush2.msra.mxu0 0.0
  %1472 = vmatprep.subr.mxu0 0.0
  %1473 = vmatpush2.msra.mxu0 0.0
  %1474 = vmatprep.mubr.f32.mxu0 0.0
  %1475 = vmatmul.mubr.f32.gmra.mxu0 %v1405
  %v1476 = vpop.f32.mrf.mxu0
  %v1477 = vadd.f32 0.0, %v1476
  %v1478 = vpop.f32.mrf.mxu0
  %1479 = vmatprep.mubr.f32.mxu0 0.0
  %1480 = vmatmul.mubr.f32.gmra.mxu0 %v1408
  %v1481 = vpop.f32.mrf.mxu0
  %v1482 = vadd.f32 0.0, %v1481
  %v1483 = vpop.f32.mrf.mxu0
  %1484 = vdwg.mxu0
  %s1485 = scalar_lea.vmem %s7, 128
  %v1486 = vld [vmem:[%s1485] sm:$0xff]
  %v1487 = vld [vmem:[%s1485 + $0x8] sm:$0xff]
  %v1488 = vld [vmem:[%s1485 + $0x10] sm:$0xff]
  %v1489 = vld [vmem:[%s1485 + $0x18] sm:$0xff]
  %v1490 = vld [vmem:[%s1485 + $0x20] sm:$0xff]
  %v1491 = vld [vmem:[%s1485 + $0x28] sm:$0xff]
  %v1492 = vld [vmem:[%s1485 + $0x30] sm:$0xff]
  %v1493 = vld [vmem:[%s1485 + $0x38] sm:$0xff]
  %v1495 = vsel %vm278, %v1477, 0
  %v1498 = vsel %vm278, %v1482, 0
  %1500 = vmatprep.subr.mxu0 0.0
  %1501 = vmatpush1.msra.mxu0 0.0
  %1502 = vmatprep.subr.mxu0 0.0
  %1503 = vmatpush1.msra.mxu0 0.0
  %1504 = vmatprep.subr.mxu0 0.0
  %1505 = vmatpush1.msra.mxu0 0.0
  %1506 = vmatprep.subr.mxu0 0.0
  %1507 = vmatpush1.msra.mxu0 0.0
  %1508 = vmatprep.subr.mxu0 0.0
  %1509 = vmatpush1.msra.mxu0 0.0
  %1510 = vmatprep.subr.mxu0 0.0
  %1511 = vmatpush1.msra.mxu0 0.0
  %1512 = vmatprep.subr.mxu0 0.0
  %1513 = vmatpush1.msra.mxu0 0.0
  %1514 = vmatprep.subr.mxu0 0.0
  %1515 = vmatpush1.msra.mxu0 0.0
  %1516 = vmatprep.subr.mxu0 0.0
  %1517 = vmatpush1.msra.mxu0 %v1493
  %1518 = vmatprep.subr.mxu0 0.0
  %1519 = vmatpush1.msra.mxu0 %v1492
  %1520 = vmatprep.subr.mxu0 0.0
  %1521 = vmatpush1.msra.mxu0 %v1491
  %1522 = vmatprep.subr.mxu0 0.0
  %1523 = vmatpush1.msra.mxu0 %v1490
  %1524 = vmatprep.subr.mxu0 0.0
  %1525 = vmatpush1.msra.mxu0 %v1489
  %1526 = vmatprep.subr.mxu0 0.0
  %1527 = vmatpush1.msra.mxu0 %v1488
  %1528 = vmatprep.subr.mxu0 0.0
  %1529 = vmatpush1.msra.mxu0 %v1487
  %1530 = vmatprep.subr.mxu0 0.0
  %1531 = vmatpush1.msra.mxu0 %v1486
  %1532 = vmatprep.subr.mxu0 0.0
  %1533 = vmatpush2.msra.mxu0 0.0
  %1534 = vmatprep.subr.mxu0 0.0
  %1535 = vmatpush2.msra.mxu0 0.0
  %1536 = vmatprep.subr.mxu0 0.0
  %1537 = vmatpush2.msra.mxu0 0.0
  %1538 = vmatprep.subr.mxu0 0.0
  %1539 = vmatpush2.msra.mxu0 0.0
  %1540 = vmatprep.subr.mxu0 0.0
  %1541 = vmatpush2.msra.mxu0 0.0
  %1542 = vmatprep.subr.mxu0 0.0
  %1543 = vmatpush2.msra.mxu0 0.0
  %1544 = vmatprep.subr.mxu0 0.0
  %1545 = vmatpush2.msra.mxu0 0.0
  %1546 = vmatprep.subr.mxu0 0.0
  %1547 = vmatpush2.msra.mxu0 0.0
  %1548 = vmatprep.subr.mxu0 0.0
  %1549 = vmatpush2.msra.mxu0 0.0
  %1550 = vmatprep.subr.mxu0 0.0
  %1551 = vmatpush2.msra.mxu0 0.0
  %1552 = vmatprep.subr.mxu0 0.0
  %1553 = vmatpush2.msra.mxu0 0.0
  %1554 = vmatprep.subr.mxu0 0.0
  %1555 = vmatpush2.msra.mxu0 0.0
  %1556 = vmatprep.subr.mxu0 0.0
  %1557 = vmatpush2.msra.mxu0 0.0
  %1558 = vmatprep.subr.mxu0 0.0
  %1559 = vmatpush2.msra.mxu0 0.0
  %1560 = vmatprep.subr.mxu0 0.0
  %1561 = vmatpush2.msra.mxu0 0.0
  %1562 = vmatprep.subr.mxu0 0.0
  %1563 = vmatpush2.msra.mxu0 0.0
  %1564 = vmatprep.mubr.f32.mxu0 0.0
  %1565 = vmatmul.mubr.f32.gmra.mxu0 %v1495
  %v1566 = vpop.f32.mrf.mxu0
  %v1567 = vadd.f32 0.0, %v1566
  %v1568 = vpop.f32.mrf.mxu0
  %1569 = vmatprep.mubr.f32.mxu0 0.0
  %1570 = vmatmul.mubr.f32.gmra.mxu0 %v1498
  %v1571 = vpop.f32.mrf.mxu0
  %v1572 = vadd.f32 0.0, %v1571
  %v1573 = vpop.f32.mrf.mxu0
  %1574 = vdwg.mxu0
  %v1575 = vadd.f32 %v1393, %v1567
  %v1576 = vadd.f32 %v1398, %v1572
  %v1577 = vld [vmem:[%s8] sm:$0x1]
  %v1579 = vlaneseq
  %v1580 = vshrl.u32 %v1579, 7
  %v1581 = vsub.s32 0, %v1580
  %v1582 = vrot.slane %v1577, %v1581
  %v1584 = vadd.f32 %v1575, %v1582
  %v1585 = vadd.f32 %v1576, %v1582
  %v1586 = vmax.f32 %v1584, 0.0
  %v1587 = vmax.f32 %v1585, 0.0
  %v1588 = vld [vmem:[%s9] sm:$0xff]
  %v1590 = vsel %vm1056, %v1588, 0
  %1592 = vmatprep.subr.mxu0 0.0
  %1593 = vmatpush1.msra.mxu0 0.0
  %1594 = vmatprep.subr.mxu0 0.0
  %1595 = vmatpush1.msra.mxu0 0.0
  %1596 = vmatprep.subr.mxu0 0.0
  %1597 = vmatpush1.msra.mxu0 0.0
  %1598 = vmatprep.subr.mxu0 0.0
  %1599 = vmatpush1.msra.mxu0 0.0
  %1600 = vmatprep.subr.mxu0 0.0
  %1601 = vmatpush1.msra.mxu0 0.0
  %1602 = vmatprep.subr.mxu0 0.0
  %1603 = vmatpush1.msra.mxu0 0.0
  %1604 = vmatprep.subr.mxu0 0.0
  %1605 = vmatpush1.msra.mxu0 0.0
  %1606 = vmatprep.subr.mxu0 0.0
  %1607 = vmatpush1.msra.mxu0 0.0
  %1608 = vmatprep.subr.mxu0 0.0
  %1609 = vmatpush1.msra.mxu0 0.0
  %1610 = vmatprep.subr.mxu0 0.0
  %1611 = vmatpush1.msra.mxu0 0.0
  %1612 = vmatprep.subr.mxu0 0.0
  %1613 = vmatpush1.msra.mxu0 0.0
  %1614 = vmatprep.subr.mxu0 0.0
  %1615 = vmatpush1.msra.mxu0 0.0
  %1616 = vmatprep.subr.mxu0 0.0
  %1617 = vmatpush1.msra.mxu0 0.0
  %1618 = vmatprep.subr.mxu0 0.0
  %1619 = vmatpush1.msra.mxu0 0.0
  %1620 = vmatprep.subr.mxu0 0.0
  %1621 = vmatpush1.msra.mxu0 %v1587
  %1622 = vmatprep.subr.mxu0 0.0
  %1623 = vmatpush1.msra.mxu0 %v1586
  %1624 = vmatprep.subr.mxu0 0.0
  %1625 = vmatpush2.msra.mxu0 0.0
  %1626 = vmatprep.subr.mxu0 0.0
  %1627 = vmatpush2.msra.mxu0 0.0
  %1628 = vmatprep.subr.mxu0 0.0
  %1629 = vmatpush2.msra.mxu0 0.0
  %1630 = vmatprep.subr.mxu0 0.0
  %1631 = vmatpush2.msra.mxu0 0.0
  %1632 = vmatprep.subr.mxu0 0.0
  %1633 = vmatpush2.msra.mxu0 0.0
  %1634 = vmatprep.subr.mxu0 0.0
  %1635 = vmatpush2.msra.mxu0 0.0
  %1636 = vmatprep.subr.mxu0 0.0
  %1637 = vmatpush2.msra.mxu0 0.0
  %1638 = vmatprep.subr.mxu0 0.0
  %1639 = vmatpush2.msra.mxu0 0.0
  %1640 = vmatprep.subr.mxu0 0.0
  %1641 = vmatpush2.msra.mxu0 0.0
  %1642 = vmatprep.subr.mxu0 0.0
  %1643 = vmatpush2.msra.mxu0 0.0
  %1644 = vmatprep.subr.mxu0 0.0
  %1645 = vmatpush2.msra.mxu0 0.0
  %1646 = vmatprep.subr.mxu0 0.0
  %1647 = vmatpush2.msra.mxu0 0.0
  %1648 = vmatprep.subr.mxu0 0.0
  %1649 = vmatpush2.msra.mxu0 0.0
  %1650 = vmatprep.subr.mxu0 0.0
  %1651 = vmatpush2.msra.mxu0 0.0
  %1652 = vmatprep.subr.mxu0 0.0
  %1653 = vmatpush2.msra.mxu0 0.0
  %1654 = vmatprep.subr.mxu0 0.0
  %1655 = vmatpush2.msra.mxu0 0.0
  %1656 = vmatprep.mubr.f32.mxu0 0.0
  %1657 = vmatmul.mubr.f32.gmra.mxu0 %v1590
  %v1658 = vpop.f32.mrf.mxu0
  %v1659 = vadd.f32 0.0, %v1658
  %v1660 = vpop.f32.mrf.mxu0
  %1661 = vdwg.mxu0
  %s1662 = scalar_lea.vmem %s9, 8
  %v1663 = vld [vmem:[%s1662] sm:$0xff]
  %v1665 = vsel %vm1056, %v1663, 0
  %1667 = vmatprep.subr.mxu0 0.0
  %1668 = vmatpush1.msra.mxu0 0.0
  %1669 = vmatprep.subr.mxu0 0.0
  %1670 = vmatpush1.msra.mxu0 0.0
  %1671 = vmatprep.subr.mxu0 0.0
  %1672 = vmatpush1.msra.mxu0 0.0
  %1673 = vmatprep.subr.mxu0 0.0
  %1674 = vmatpush1.msra.mxu0 0.0
  %1675 = vmatprep.subr.mxu0 0.0
  %1676 = vmatpush1.msra.mxu0 0.0
  %1677 = vmatprep.subr.mxu0 0.0
  %1678 = vmatpush1.msra.mxu0 0.0
  %1679 = vmatprep.subr.mxu0 0.0
  %1680 = vmatpush1.msra.mxu0 0.0
  %1681 = vmatprep.subr.mxu0 0.0
  %1682 = vmatpush1.msra.mxu0 0.0
  %1683 = vmatprep.subr.mxu0 0.0
  %1684 = vmatpush1.msra.mxu0 0.0
  %1685 = vmatprep.subr.mxu0 0.0
  %1686 = vmatpush1.msra.mxu0 0.0
  %1687 = vmatprep.subr.mxu0 0.0
  %1688 = vmatpush1.msra.mxu0 0.0
  %1689 = vmatprep.subr.mxu0 0.0
  %1690 = vmatpush1.msra.mxu0 0.0
  %1691 = vmatprep.subr.mxu0 0.0
  %1692 = vmatpush1.msra.mxu0 0.0
  %1693 = vmatprep.subr.mxu0 0.0
  %1694 = vmatpush1.msra.mxu0 0.0
  %1695 = vmatprep.subr.mxu0 0.0
  %1696 = vmatpush1.msra.mxu0 %v1587
  %1697 = vmatprep.subr.mxu0 0.0
  %1698 = vmatpush1.msra.mxu0 %v1586
  %1699 = vmatprep.subr.mxu0 0.0
  %1700 = vmatpush2.msra.mxu0 0.0
  %1701 = vmatprep.subr.mxu0 0.0
  %1702 = vmatpush2.msra.mxu0 0.0
  %1703 = vmatprep.subr.mxu0 0.0
  %1704 = vmatpush2.msra.mxu0 0.0
  %1705 = vmatprep.subr.mxu0 0.0
  %1706 = vmatpush2.msra.mxu0 0.0
  %1707 = vmatprep.subr.mxu0 0.0
  %1708 = vmatpush2.msra.mxu0 0.0
  %1709 = vmatprep.subr.mxu0 0.0
  %1710 = vmatpush2.msra.mxu0 0.0
  %1711 = vmatprep.subr.mxu0 0.0
  %1712 = vmatpush2.msra.mxu0 0.0
  %1713 = vmatprep.subr.mxu0 0.0
  %1714 = vmatpush2.msra.mxu0 0.0
  %1715 = vmatprep.subr.mxu0 0.0
  %1716 = vmatpush2.msra.mxu0 0.0
  %1717 = vmatprep.subr.mxu0 0.0
  %1718 = vmatpush2.msra.mxu0 0.0
  %1719 = vmatprep.subr.mxu0 0.0
  %1720 = vmatpush2.msra.mxu0 0.0
  %1721 = vmatprep.subr.mxu0 0.0
  %1722 = vmatpush2.msra.mxu0 0.0
  %1723 = vmatprep.subr.mxu0 0.0
  %1724 = vmatpush2.msra.mxu0 0.0
  %1725 = vmatprep.subr.mxu0 0.0
  %1726 = vmatpush2.msra.mxu0 0.0
  %1727 = vmatprep.subr.mxu0 0.0
  %1728 = vmatpush2.msra.mxu0 0.0
  %1729 = vmatprep.subr.mxu0 0.0
  %1730 = vmatpush2.msra.mxu0 0.0
  %1731 = vmatprep.mubr.f32.mxu0 0.0
  %1732 = vmatmul.mubr.f32.gmra.mxu0 %v1665
  %v1733 = vpop.f32.mrf.mxu0
  %v1734 = vadd.f32 0.0, %v1733
  %v1735 = vpop.f32.mrf.mxu0
  %1736 = vdwg.mxu0
  %v1737 = vmax.f32 %v1659, %v1734
  %v1738 = vld [vmem:[%s10] sm:$0xff]
  %v1739 = vld [vmem:[%s10 + $0x8] sm:$0xff]
  %v1740 = vld [vmem:[%s10 + $0x10] sm:$0xff]
  %v1741 = vld [vmem:[%s10 + $0x18] sm:$0xff]
  %v1742 = vld [vmem:[%s10 + $0x20] sm:$0xff]
  %v1743 = vld [vmem:[%s10 + $0x28] sm:$0xff]
  %v1744 = vld [vmem:[%s10 + $0x30] sm:$0xff]
  %v1745 = vld [vmem:[%s10 + $0x38] sm:$0xff]
  %v1746 = vld [vmem:[%s10 + $0x40] sm:$0xff]
  %v1747 = vld [vmem:[%s10 + $0x48] sm:$0xff]
  %v1748 = vld [vmem:[%s10 + $0x50] sm:$0xff]
  %v1749 = vld [vmem:[%s10 + $0x58] sm:$0xff]
  %v1750 = vld [vmem:[%s10 + $0x60] sm:$0xff]
  %v1751 = vld [vmem:[%s10 + $0x68] sm:$0xff]
  %v1752 = vld [vmem:[%s10 + $0x70] sm:$0xff]
  %v1753 = vld [vmem:[%s10 + $0x78] sm:$0xff]
  %1754 = vmatprep.subr.mxu0 0.0
  %1755 = vmatpush1.msra.mxu0 %v1753
  %1756 = vmatprep.subr.mxu0 0.0
  %1757 = vmatpush1.msra.mxu0 %v1752
  %1758 = vmatprep.subr.mxu0 0.0
  %1759 = vmatpush1.msra.mxu0 %v1751
  %1760 = vmatprep.subr.mxu0 0.0
  %1761 = vmatpush1.msra.mxu0 %v1750
  %1762 = vmatprep.subr.mxu0 0.0
  %1763 = vmatpush1.msra.mxu0 %v1749
  %1764 = vmatprep.subr.mxu0 0.0
  %1765 = vmatpush1.msra.mxu0 %v1748
  %1766 = vmatprep.subr.mxu0 0.0
  %1767 = vmatpush1.msra.mxu0 %v1747
  %1768 = vmatprep.subr.mxu0 0.0
  %1769 = vmatpush1.msra.mxu0 %v1746
  %1770 = vmatprep.subr.mxu0 0.0
  %1771 = vmatpush1.msra.mxu0 %v1745
  %1772 = vmatprep.subr.mxu0 0.0
  %1773 = vmatpush1.msra.mxu0 %v1744
  %1774 = vmatprep.subr.mxu0 0.0
  %1775 = vmatpush1.msra.mxu0 %v1743
  %1776 = vmatprep.subr.mxu0 0.0
  %1777 = vmatpush1.msra.mxu0 %v1742
  %1778 = vmatprep.subr.mxu0 0.0
  %1779 = vmatpush1.msra.mxu0 %v1741
  %1780 = vmatprep.subr.mxu0 0.0
  %1781 = vmatpush1.msra.mxu0 %v1740
  %1782 = vmatprep.subr.mxu0 0.0
  %1783 = vmatpush1.msra.mxu0 %v1739
  %1784 = vmatprep.subr.mxu0 0.0
  %1785 = vmatpush1.msra.mxu0 %v1738
  %1786 = vmatprep.subr.mxu0 0.0
  %1787 = vmatpush2.msra.mxu0 0.0
  %1788 = vmatprep.subr.mxu0 0.0
  %1789 = vmatpush2.msra.mxu0 0.0
  %1790 = vmatprep.subr.mxu0 0.0
  %1791 = vmatpush2.msra.mxu0 0.0
  %1792 = vmatprep.subr.mxu0 0.0
  %1793 = vmatpush2.msra.mxu0 0.0
  %1794 = vmatprep.subr.mxu0 0.0
  %1795 = vmatpush2.msra.mxu0 0.0
  %1796 = vmatprep.subr.mxu0 0.0
  %1797 = vmatpush2.msra.mxu0 0.0
  %1798 = vmatprep.subr.mxu0 0.0
  %1799 = vmatpush2.msra.mxu0 0.0
  %1800 = vmatprep.subr.mxu0 0.0
  %1801 = vmatpush2.msra.mxu0 0.0
  %1802 = vmatprep.subr.mxu0 0.0
  %1803 = vmatpush2.msra.mxu0 0.0
  %1804 = vmatprep.subr.mxu0 0.0
  %1805 = vmatpush2.msra.mxu0 0.0
  %1806 = vmatprep.subr.mxu0 0.0
  %1807 = vmatpush2.msra.mxu0 0.0
  %1808 = vmatprep.subr.mxu0 0.0
  %1809 = vmatpush2.msra.mxu0 0.0
  %1810 = vmatprep.subr.mxu0 0.0
  %1811 = vmatpush2.msra.mxu0 0.0
  %1812 = vmatprep.subr.mxu0 0.0
  %1813 = vmatpush2.msra.mxu0 0.0
  %1814 = vmatprep.subr.mxu0 0.0
  %1815 = vmatpush2.msra.mxu0 0.0
  %1816 = vmatprep.subr.mxu0 0.0
  %1817 = vmatpush2.msra.mxu0 0.0
  %1818 = vmatprep.mubr.f32.mxu0 0.0
  %1819 = vmatmul.mubr.f32.gmra.mxu0 %v1737
  %v1820 = vpop.f32.mrf.mxu0
  %v1821 = vadd.f32 0.0, %v1820
  %v1822 = vpop.f32.mrf.mxu0
  %1823 = vdwg.mxu0
  %s1824 = scalar_lea.vmem %s10, 128
  %v1825 = vld [vmem:[%s1824] sm:$0xff]
  %v1826 = vld [vmem:[%s1824 + $0x8] sm:$0xff]
  %v1827 = vld [vmem:[%s1824 + $0x10] sm:$0xff]
  %v1828 = vld [vmem:[%s1824 + $0x18] sm:$0xff]
  %v1829 = vld [vmem:[%s1824 + $0x20] sm:$0xff]
  %v1830 = vld [vmem:[%s1824 + $0x28] sm:$0xff]
  %v1831 = vld [vmem:[%s1824 + $0x30] sm:$0xff]
  %v1832 = vld [vmem:[%s1824 + $0x38] sm:$0xff]
  %v1833 = vld [vmem:[%s1824 + $0x40] sm:$0xff]
  %v1834 = vld [vmem:[%s1824 + $0x48] sm:$0xff]
  %v1835 = vld [vmem:[%s1824 + $0x50] sm:$0xff]
  %v1836 = vld [vmem:[%s1824 + $0x58] sm:$0xff]
  %v1837 = vld [vmem:[%s1824 + $0x60] sm:$0xff]
  %v1838 = vld [vmem:[%s1824 + $0x68] sm:$0xff]
  %v1839 = vld [vmem:[%s1824 + $0x70] sm:$0xff]
  %v1840 = vld [vmem:[%s1824 + $0x78] sm:$0xff]
  %1841 = vmatprep.subr.mxu0 0.0
  %1842 = vmatpush1.msra.mxu0 %v1840
  %1843 = vmatprep.subr.mxu0 0.0
  %1844 = vmatpush1.msra.mxu0 %v1839
  %1845 = vmatprep.subr.mxu0 0.0
  %1846 = vmatpush1.msra.mxu0 %v1838
  %1847 = vmatprep.subr.mxu0 0.0
  %1848 = vmatpush1.msra.mxu0 %v1837
  %1849 = vmatprep.subr.mxu0 0.0
  %1850 = vmatpush1.msra.mxu0 %v1836
  %1851 = vmatprep.subr.mxu0 0.0
  %1852 = vmatpush1.msra.mxu0 %v1835
  %1853 = vmatprep.subr.mxu0 0.0
  %1854 = vmatpush1.msra.mxu0 %v1834
  %1855 = vmatprep.subr.mxu0 0.0
  %1856 = vmatpush1.msra.mxu0 %v1833
  %1857 = vmatprep.subr.mxu0 0.0
  %1858 = vmatpush1.msra.mxu0 %v1832
  %1859 = vmatprep.subr.mxu0 0.0
  %1860 = vmatpush1.msra.mxu0 %v1831
  %1861 = vmatprep.subr.mxu0 0.0
  %1862 = vmatpush1.msra.mxu0 %v1830
  %1863 = vmatprep.subr.mxu0 0.0
  %1864 = vmatpush1.msra.mxu0 %v1829
  %1865 = vmatprep.subr.mxu0 0.0
  %1866 = vmatpush1.msra.mxu0 %v1828
  %1867 = vmatprep.subr.mxu0 0.0
  %1868 = vmatpush1.msra.mxu0 %v1827
  %1869 = vmatprep.subr.mxu0 0.0
  %1870 = vmatpush1.msra.mxu0 %v1826
  %1871 = vmatprep.subr.mxu0 0.0
  %1872 = vmatpush1.msra.mxu0 %v1825
  %1873 = vmatprep.subr.mxu0 0.0
  %1874 = vmatpush2.msra.mxu0 0.0
  %1875 = vmatprep.subr.mxu0 0.0
  %1876 = vmatpush2.msra.mxu0 0.0
  %1877 = vmatprep.subr.mxu0 0.0
  %1878 = vmatpush2.msra.mxu0 0.0
  %1879 = vmatprep.subr.mxu0 0.0
  %1880 = vmatpush2.msra.mxu0 0.0
  %1881 = vmatprep.subr.mxu0 0.0
  %1882 = vmatpush2.msra.mxu0 0.0
  %1883 = vmatprep.subr.mxu0 0.0
  %1884 = vmatpush2.msra.mxu0 0.0
  %1885 = vmatprep.subr.mxu0 0.0
  %1886 = vmatpush2.msra.mxu0 0.0
  %1887 = vmatprep.subr.mxu0 0.0
  %1888 = vmatpush2.msra.mxu0 0.0
  %1889 = vmatprep.subr.mxu0 0.0
  %1890 = vmatpush2.msra.mxu0 0.0
  %1891 = vmatprep.subr.mxu0 0.0
  %1892 = vmatpush2.msra.mxu0 0.0
  %1893 = vmatprep.subr.mxu0 0.0
  %1894 = vmatpush2.msra.mxu0 0.0
  %1895 = vmatprep.subr.mxu0 0.0
  %1896 = vmatpush2.msra.mxu0 0.0
  %1897 = vmatprep.subr.mxu0 0.0
  %1898 = vmatpush2.msra.mxu0 0.0
  %1899 = vmatprep.subr.mxu0 0.0
  %1900 = vmatpush2.msra.mxu0 0.0
  %1901 = vmatprep.subr.mxu0 0.0
  %1902 = vmatpush2.msra.mxu0 0.0
  %1903 = vmatprep.subr.mxu0 0.0
  %1904 = vmatpush2.msra.mxu0 0.0
  %1905 = vmatprep.mubr.f32.mxu0 0.0
  %1906 = vmatmul.mubr.f32.gmra.mxu0 %v1737
  %v1907 = vpop.f32.mrf.mxu0
  %v1908 = vadd.f32 0.0, %v1907
  %v1909 = vpop.f32.mrf.mxu0
  %1910 = vdwg.mxu0
  %v1911 = vmax.f32 %v1821, %v1908
  %v1912 = vld [vmem:[%s11] sm:$0xff]
  %vm1913 = vcmask 64512
  %v1915 = vsel %vm1913, %v1912, 0
  %1917 = vmatprep.subr.mxu0 0.0
  %1918 = vmatpush1.msra.mxu0 0.0
  %1919 = vmatprep.subr.mxu0 0.0
  %1920 = vmatpush1.msra.mxu0 0.0
  %1921 = vmatprep.subr.mxu0 0.0
  %1922 = vmatpush1.msra.mxu0 0.0
  %1923 = vmatprep.subr.mxu0 0.0
  %1924 = vmatpush1.msra.mxu0 0.0
  %1925 = vmatprep.subr.mxu0 0.0
  %1926 = vmatpush1.msra.mxu0 0.0
  %1927 = vmatprep.subr.mxu0 0.0
  %1928 = vmatpush1.msra.mxu0 0.0
  %1929 = vmatprep.subr.mxu0 0.0
  %1930 = vmatpush1.msra.mxu0 0.0
  %1931 = vmatprep.subr.mxu0 0.0
  %1932 = vmatpush1.msra.mxu0 0.0
  %1933 = vmatprep.subr.mxu0 0.0
  %1934 = vmatpush1.msra.mxu0 0.0
  %1935 = vmatprep.subr.mxu0 0.0
  %1936 = vmatpush1.msra.mxu0 0.0
  %1937 = vmatprep.subr.mxu0 0.0
  %1938 = vmatpush1.msra.mxu0 0.0
  %1939 = vmatprep.subr.mxu0 0.0
  %1940 = vmatpush1.msra.mxu0 0.0
  %1941 = vmatprep.subr.mxu0 0.0
  %1942 = vmatpush1.msra.mxu0 0.0
  %1943 = vmatprep.subr.mxu0 0.0
  %1944 = vmatpush1.msra.mxu0 0.0
  %1945 = vmatprep.subr.mxu0 0.0
  %1946 = vmatpush1.msra.mxu0 0.0
  %1947 = vmatprep.subr.mxu0 0.0
  %1948 = vmatpush1.msra.mxu0 %v1911
  %1949 = vmatprep.subr.mxu0 0.0
  %1950 = vmatpush2.msra.mxu0 0.0
  %1951 = vmatprep.subr.mxu0 0.0
  %1952 = vmatpush2.msra.mxu0 0.0
  %1953 = vmatprep.subr.mxu0 0.0
  %1954 = vmatpush2.msra.mxu0 0.0
  %1955 = vmatprep.subr.mxu0 0.0
  %1956 = vmatpush2.msra.mxu0 0.0
  %1957 = vmatprep.subr.mxu0 0.0
  %1958 = vmatpush2.msra.mxu0 0.0
  %1959 = vmatprep.subr.mxu0 0.0
  %1960 = vmatpush2.msra.mxu0 0.0
  %1961 = vmatprep.subr.mxu0 0.0
  %1962 = vmatpush2.msra.mxu0 0.0
  %1963 = vmatprep.subr.mxu0 0.0
  %1964 = vmatpush2.msra.mxu0 0.0
  %1965 = vmatprep.subr.mxu0 0.0
  %1966 = vmatpush2.msra.mxu0 0.0
  %1967 = vmatprep.subr.mxu0 0.0
  %1968 = vmatpush2.msra.mxu0 0.0
  %1969 = vmatprep.subr.mxu0 0.0
  %1970 = vmatpush2.msra.mxu0 0.0
  %1971 = vmatprep.subr.mxu0 0.0
  %1972 = vmatpush2.msra.mxu0 0.0
  %1973 = vmatprep.subr.mxu0 0.0
  %1974 = vmatpush2.msra.mxu0 0.0
  %1975 = vmatprep.subr.mxu0 0.0
  %1976 = vmatpush2.msra.mxu0 0.0
  %1977 = vmatprep.subr.mxu0 0.0
  %1978 = vmatpush2.msra.mxu0 0.0
  %1979 = vmatprep.subr.mxu0 0.0
  %1980 = vmatpush2.msra.mxu0 0.0
  %1981 = vmatprep.mubr.f32.mxu0 0.0
  %1982 = vmatmul.mubr.f32.gmra.mxu0 %v1915
  %v1983 = vpop.f32.mrf.mxu0
  %v1984 = vadd.f32 0.0, %v1983
  %v1985 = vpop.f32.mrf.mxu0
  %1986 = vdwg.mxu0
  %v1987 = vld [vmem:[%s12] sm:$0xff]
  %v1988 = vld [vmem:[%s12 + $0x8] sm:$0xff]
  %v1989 = vld [vmem:[%s12 + $0x10] sm:$0xff]
  %v1990 = vld [vmem:[%s12 + $0x18] sm:$0xff]
  %v1991 = vld [vmem:[%s12 + $0x20] sm:$0xff]
  %v1992 = vld [vmem:[%s12 + $0x28] sm:$0xff]
  %v1993 = vld [vmem:[%s12 + $0x30] sm:$0xff]
  %v1994 = vld [vmem:[%s12 + $0x38] sm:$0xff]
  %s1995 = scalar_lea.vmem %s11, 8
  %v1996 = vld [vmem:[%s1995] sm:$0xff]
  %v1998 = vsel %vm1913, %v1996, 0
  %2000 = vmatprep.subr.mxu0 0.0
  %2001 = vmatpush1.msra.mxu0 0.0
  %2002 = vmatprep.subr.mxu0 0.0
  %2003 = vmatpush1.msra.mxu0 0.0
  %2004 = vmatprep.subr.mxu0 0.0
  %2005 = vmatpush1.msra.mxu0 0.0
  %2006 = vmatprep.subr.mxu0 0.0
  %2007 = vmatpush1.msra.mxu0 0.0
  %2008 = vmatprep.subr.mxu0 0.0
  %2009 = vmatpush1.msra.mxu0 0.0
  %2010 = vmatprep.subr.mxu0 0.0
  %2011 = vmatpush1.msra.mxu0 0.0
  %2012 = vmatprep.subr.mxu0 0.0
  %2013 = vmatpush1.msra.mxu0 0.0
  %2014 = vmatprep.subr.mxu0 0.0
  %2015 = vmatpush1.msra.mxu0 0.0
  %2016 = vmatprep.subr.mxu0 0.0
  %2017 = vmatpush1.msra.mxu0 0.0
  %2018 = vmatprep.subr.mxu0 0.0
  %2019 = vmatpush1.msra.mxu0 0.0
  %2020 = vmatprep.subr.mxu0 0.0
  %2021 = vmatpush1.msra.mxu0 0.0
  %2022 = vmatprep.subr.mxu0 0.0
  %2023 = vmatpush1.msra.mxu0 0.0
  %2024 = vmatprep.subr.mxu0 0.0
  %2025 = vmatpush1.msra.mxu0 0.0
  %2026 = vmatprep.subr.mxu0 0.0
  %2027 = vmatpush1.msra.mxu0 0.0
  %2028 = vmatprep.subr.mxu0 0.0
  %2029 = vmatpush1.msra.mxu0 0.0
  %2030 = vmatprep.subr.mxu0 0.0
  %2031 = vmatpush1.msra.mxu0 %v1911
  %2032 = vmatprep.subr.mxu0 0.0
  %2033 = vmatpush2.msra.mxu0 0.0
  %2034 = vmatprep.subr.mxu0 0.0
  %2035 = vmatpush2.msra.mxu0 0.0
  %2036 = vmatprep.subr.mxu0 0.0
  %2037 = vmatpush2.msra.mxu0 0.0
  %2038 = vmatprep.subr.mxu0 0.0
  %2039 = vmatpush2.msra.mxu0 0.0
  %2040 = vmatprep.subr.mxu0 0.0
  %2041 = vmatpush2.msra.mxu0 0.0
  %2042 = vmatprep.subr.mxu0 0.0
  %2043 = vmatpush2.msra.mxu0 0.0
  %2044 = vmatprep.subr.mxu0 0.0
  %2045 = vmatpush2.msra.mxu0 0.0
  %2046 = vmatprep.subr.mxu0 0.0
  %2047 = vmatpush2.msra.mxu0 0.0
  %2048 = vmatprep.subr.mxu0 0.0
  %2049 = vmatpush2.msra.mxu0 0.0
  %2050 = vmatprep.subr.mxu0 0.0
  %2051 = vmatpush2.msra.mxu0 0.0
  %2052 = vmatprep.subr.mxu0 0.0
  %2053 = vmatpush2.msra.mxu0 0.0
  %2054 = vmatprep.subr.mxu0 0.0
  %2055 = vmatpush2.msra.mxu0 0.0
  %2056 = vmatprep.subr.mxu0 0.0
  %2057 = vmatpush2.msra.mxu0 0.0
  %2058 = vmatprep.subr.mxu0 0.0
  %2059 = vmatpush2.msra.mxu0 0.0
  %2060 = vmatprep.subr.mxu0 0.0
  %2061 = vmatpush2.msra.mxu0 0.0
  %2062 = vmatprep.subr.mxu0 0.0
  %2063 = vmatpush2.msra.mxu0 0.0
  %2064 = vmatprep.mubr.f32.mxu0 0.0
  %2065 = vmatmul.mubr.f32.gmra.mxu0 %v1998
  %v2066 = vpop.f32.mrf.mxu0
  %v2067 = vadd.f32 0.0, %v2066
  %v2068 = vpop.f32.mrf.mxu0
  %2069 = vdwg.mxu0
  %s2070 = scalar_lea.vmem %s12, 64
  %v2071 = vld [vmem:[%s2070] sm:$0xff]
  %v2072 = vld [vmem:[%s2070 + $0x8] sm:$0xff]
  %v2073 = vld [vmem:[%s2070 + $0x10] sm:$0xff]
  %v2074 = vld [vmem:[%s2070 + $0x18] sm:$0xff]
  %v2075 = vld [vmem:[%s2070 + $0x20] sm:$0xff]
  %v2076 = vld [vmem:[%s2070 + $0x28] sm:$0xff]
  %v2077 = vld [vmem:[%s2070 + $0x30] sm:$0xff]
  %v2078 = vld [vmem:[%s2070 + $0x38] sm:$0xff]
  %v2080 = vsel %vm278, %v2067, 0
  %2082 = vmatprep.subr.mxu0 0.0
  %2083 = vmatpush1.msra.mxu0 0.0
  %2084 = vmatprep.subr.mxu0 0.0
  %2085 = vmatpush1.msra.mxu0 0.0
  %2086 = vmatprep.subr.mxu0 0.0
  %2087 = vmatpush1.msra.mxu0 0.0
  %2088 = vmatprep.subr.mxu0 0.0
  %2089 = vmatpush1.msra.mxu0 0.0
  %2090 = vmatprep.subr.mxu0 0.0
  %2091 = vmatpush1.msra.mxu0 0.0
  %2092 = vmatprep.subr.mxu0 0.0
  %2093 = vmatpush1.msra.mxu0 0.0
  %2094 = vmatprep.subr.mxu0 0.0
  %2095 = vmatpush1.msra.mxu0 0.0
  %2096 = vmatprep.subr.mxu0 0.0
  %2097 = vmatpush1.msra.mxu0 0.0
  %2098 = vmatprep.subr.mxu0 0.0
  %2099 = vmatpush1.msra.mxu0 %v2078
  %2100 = vmatprep.subr.mxu0 0.0
  %2101 = vmatpush1.msra.mxu0 %v2077
  %2102 = vmatprep.subr.mxu0 0.0
  %2103 = vmatpush1.msra.mxu0 %v2076
  %2104 = vmatprep.subr.mxu0 0.0
  %2105 = vmatpush1.msra.mxu0 %v2075
  %2106 = vmatprep.subr.mxu0 0.0
  %2107 = vmatpush1.msra.mxu0 %v2074
  %2108 = vmatprep.subr.mxu0 0.0
  %2109 = vmatpush1.msra.mxu0 %v2073
  %2110 = vmatprep.subr.mxu0 0.0
  %2111 = vmatpush1.msra.mxu0 %v2072
  %2112 = vmatprep.subr.mxu0 0.0
  %2113 = vmatpush1.msra.mxu0 %v2071
  %2114 = vmatprep.subr.mxu0 0.0
  %2115 = vmatpush2.msra.mxu0 0.0
  %2116 = vmatprep.subr.mxu0 0.0
  %2117 = vmatpush2.msra.mxu0 0.0
  %2118 = vmatprep.subr.mxu0 0.0
  %2119 = vmatpush2.msra.mxu0 0.0
  %2120 = vmatprep.subr.mxu0 0.0
  %2121 = vmatpush2.msra.mxu0 0.0
  %2122 = vmatprep.subr.mxu0 0.0
  %2123 = vmatpush2.msra.mxu0 0.0
  %2124 = vmatprep.subr.mxu0 0.0
  %2125 = vmatpush2.msra.mxu0 0.0
  %2126 = vmatprep.subr.mxu0 0.0
  %2127 = vmatpush2.msra.mxu0 0.0
  %2128 = vmatprep.subr.mxu0 0.0
  %2129 = vmatpush2.msra.mxu0 0.0
  %2130 = vmatprep.subr.mxu0 0.0
  %2131 = vmatpush2.msra.mxu0 0.0
  %2132 = vmatprep.subr.mxu0 0.0
  %2133 = vmatpush2.msra.mxu0 0.0
  %2134 = vmatprep.subr.mxu0 0.0
  %2135 = vmatpush2.msra.mxu0 0.0
  %2136 = vmatprep.subr.mxu0 0.0
  %2137 = vmatpush2.msra.mxu0 0.0
  %2138 = vmatprep.subr.mxu0 0.0
  %2139 = vmatpush2.msra.mxu0 0.0
  %2140 = vmatprep.subr.mxu0 0.0
  %2141 = vmatpush2.msra.mxu0 0.0
  %2142 = vmatprep.subr.mxu0 0.0
  %2143 = vmatpush2.msra.mxu0 0.0
  %2144 = vmatprep.subr.mxu0 0.0
  %2145 = vmatpush2.msra.mxu0 0.0
  %2146 = vmatprep.mubr.f32.mxu0 0.0
  %2147 = vmatmul.mubr.f32.gmra.mxu0 %v2080
  %v2148 = vpop.f32.mrf.mxu0
  %v2149 = vadd.f32 0.0, %v2148
  %v2150 = vpop.f32.mrf.mxu0
  %2151 = vdwg.mxu0
  %v2153 = vsel %vm278, %v1984, 0
  %2155 = vmatprep.subr.mxu0 0.0
  %2156 = vmatpush1.msra.mxu0 0.0
  %2157 = vmatprep.subr.mxu0 0.0
  %2158 = vmatpush1.msra.mxu0 0.0
  %2159 = vmatprep.subr.mxu0 0.0
  %2160 = vmatpush1.msra.mxu0 0.0
  %2161 = vmatprep.subr.mxu0 0.0
  %2162 = vmatpush1.msra.mxu0 0.0
  %2163 = vmatprep.subr.mxu0 0.0
  %2164 = vmatpush1.msra.mxu0 0.0
  %2165 = vmatprep.subr.mxu0 0.0
  %2166 = vmatpush1.msra.mxu0 0.0
  %2167 = vmatprep.subr.mxu0 0.0
  %2168 = vmatpush1.msra.mxu0 0.0
  %2169 = vmatprep.subr.mxu0 0.0
  %2170 = vmatpush1.msra.mxu0 0.0
  %2171 = vmatprep.subr.mxu0 0.0
  %2172 = vmatpush1.msra.mxu0 %v1994
  %2173 = vmatprep.subr.mxu0 0.0
  %2174 = vmatpush1.msra.mxu0 %v1993
  %2175 = vmatprep.subr.mxu0 0.0
  %2176 = vmatpush1.msra.mxu0 %v1992
  %2177 = vmatprep.subr.mxu0 0.0
  %2178 = vmatpush1.msra.mxu0 %v1991
  %2179 = vmatprep.subr.mxu0 0.0
  %2180 = vmatpush1.msra.mxu0 %v1990
  %2181 = vmatprep.subr.mxu0 0.0
  %2182 = vmatpush1.msra.mxu0 %v1989
  %2183 = vmatprep.subr.mxu0 0.0
  %2184 = vmatpush1.msra.mxu0 %v1988
  %2185 = vmatprep.subr.mxu0 0.0
  %2186 = vmatpush1.msra.mxu0 %v1987
  %2187 = vmatprep.subr.mxu0 0.0
  %2188 = vmatpush2.msra.mxu0 0.0
  %2189 = vmatprep.subr.mxu0 0.0
  %2190 = vmatpush2.msra.mxu0 0.0
  %2191 = vmatprep.subr.mxu0 0.0
  %2192 = vmatpush2.msra.mxu0 0.0
  %2193 = vmatprep.subr.mxu0 0.0
  %2194 = vmatpush2.msra.mxu0 0.0
  %2195 = vmatprep.subr.mxu0 0.0
  %2196 = vmatpush2.msra.mxu0 0.0
  %2197 = vmatprep.subr.mxu0 0.0
  %2198 = vmatpush2.msra.mxu0 0.0
  %2199 = vmatprep.subr.mxu0 0.0
  %2200 = vmatpush2.msra.mxu0 0.0
  %2201 = vmatprep.subr.mxu0 0.0
  %2202 = vmatpush2.msra.mxu0 0.0
  %2203 = vmatprep.subr.mxu0 0.0
  %2204 = vmatpush2.msra.mxu0 0.0
  %2205 = vmatprep.subr.mxu0 0.0
  %2206 = vmatpush2.msra.mxu0 0.0
  %2207 = vmatprep.subr.mxu0 0.0
  %2208 = vmatpush2.msra.mxu0 0.0
  %2209 = vmatprep.subr.mxu0 0.0
  %2210 = vmatpush2.msra.mxu0 0.0
  %2211 = vmatprep.subr.mxu0 0.0
  %2212 = vmatpush2.msra.mxu0 0.0
  %2213 = vmatprep.subr.mxu0 0.0
  %2214 = vmatpush2.msra.mxu0 0.0
  %2215 = vmatprep.subr.mxu0 0.0
  %2216 = vmatpush2.msra.mxu0 0.0
  %2217 = vmatprep.subr.mxu0 0.0
  %2218 = vmatpush2.msra.mxu0 0.0
  %2219 = vmatprep.mubr.f32.mxu0 0.0
  %2220 = vmatmul.mubr.f32.gmra.mxu0 %v2153
  %v2221 = vpop.f32.mrf.mxu0
  %v2222 = vadd.f32 %v2149, %v2221
  %v2223 = vpop.f32.mrf.mxu0
  %2224 = vdwg.mxu0
  %s2225 = scalar_lea.vmem %s11, 16
  %v2226 = vld [vmem:[%s2225] sm:$0xff]
  %v2228 = vsel %vm1913, %v2226, 0
  %2230 = vmatprep.subr.mxu0 0.0
  %2231 = vmatpush1.msra.mxu0 0.0
  %2232 = vmatprep.subr.mxu0 0.0
  %2233 = vmatpush1.msra.mxu0 0.0
  %2234 = vmatprep.subr.mxu0 0.0
  %2235 = vmatpush1.msra.mxu0 0.0
  %2236 = vmatprep.subr.mxu0 0.0
  %2237 = vmatpush1.msra.mxu0 0.0
  %2238 = vmatprep.subr.mxu0 0.0
  %2239 = vmatpush1.msra.mxu0 0.0
  %2240 = vmatprep.subr.mxu0 0.0
  %2241 = vmatpush1.msra.mxu0 0.0
  %2242 = vmatprep.subr.mxu0 0.0
  %2243 = vmatpush1.msra.mxu0 0.0
  %2244 = vmatprep.subr.mxu0 0.0
  %2245 = vmatpush1.msra.mxu0 0.0
  %2246 = vmatprep.subr.mxu0 0.0
  %2247 = vmatpush1.msra.mxu0 0.0
  %2248 = vmatprep.subr.mxu0 0.0
  %2249 = vmatpush1.msra.mxu0 0.0
  %2250 = vmatprep.subr.mxu0 0.0
  %2251 = vmatpush1.msra.mxu0 0.0
  %2252 = vmatprep.subr.mxu0 0.0
  %2253 = vmatpush1.msra.mxu0 0.0
  %2254 = vmatprep.subr.mxu0 0.0
  %2255 = vmatpush1.msra.mxu0 0.0
  %2256 = vmatprep.subr.mxu0 0.0
  %2257 = vmatpush1.msra.mxu0 0.0
  %2258 = vmatprep.subr.mxu0 0.0
  %2259 = vmatpush1.msra.mxu0 0.0
  %2260 = vmatprep.subr.mxu0 0.0
  %2261 = vmatpush1.msra.mxu0 %v1911
  %2262 = vmatprep.subr.mxu0 0.0
  %2263 = vmatpush2.msra.mxu0 0.0
  %2264 = vmatprep.subr.mxu0 0.0
  %2265 = vmatpush2.msra.mxu0 0.0
  %2266 = vmatprep.subr.mxu0 0.0
  %2267 = vmatpush2.msra.mxu0 0.0
  %2268 = vmatprep.subr.mxu0 0.0
  %2269 = vmatpush2.msra.mxu0 0.0
  %2270 = vmatprep.subr.mxu0 0.0
  %2271 = vmatpush2.msra.mxu0 0.0
  %2272 = vmatprep.subr.mxu0 0.0
  %2273 = vmatpush2.msra.mxu0 0.0
  %2274 = vmatprep.subr.mxu0 0.0
  %2275 = vmatpush2.msra.mxu0 0.0
  %2276 = vmatprep.subr.mxu0 0.0
  %2277 = vmatpush2.msra.mxu0 0.0
  %2278 = vmatprep.subr.mxu0 0.0
  %2279 = vmatpush2.msra.mxu0 0.0
  %2280 = vmatprep.subr.mxu0 0.0
  %2281 = vmatpush2.msra.mxu0 0.0
  %2282 = vmatprep.subr.mxu0 0.0
  %2283 = vmatpush2.msra.mxu0 0.0
  %2284 = vmatprep.subr.mxu0 0.0
  %2285 = vmatpush2.msra.mxu0 0.0
  %2286 = vmatprep.subr.mxu0 0.0
  %2287 = vmatpush2.msra.mxu0 0.0
  %2288 = vmatprep.subr.mxu0 0.0
  %2289 = vmatpush2.msra.mxu0 0.0
  %2290 = vmatprep.subr.mxu0 0.0
  %2291 = vmatpush2.msra.mxu0 0.0
  %2292 = vmatprep.subr.mxu0 0.0
  %2293 = vmatpush2.msra.mxu0 0.0
  %2294 = vmatprep.mubr.f32.mxu0 0.0
  %2295 = vmatmul.mubr.f32.gmra.mxu0 %v2228
  %v2296 = vpop.f32.mrf.mxu0
  %v2297 = vadd.f32 0.0, %v2296
  %v2298 = vpop.f32.mrf.mxu0
  %2299 = vdwg.mxu0
  %s2300 = scalar_lea.vmem %s12, 128
  %v2301 = vld [vmem:[%s2300] sm:$0xff]
  %v2302 = vld [vmem:[%s2300 + $0x8] sm:$0xff]
  %v2303 = vld [vmem:[%s2300 + $0x10] sm:$0xff]
  %v2304 = vld [vmem:[%s2300 + $0x18] sm:$0xff]
  %v2305 = vld [vmem:[%s2300 + $0x20] sm:$0xff]
  %v2306 = vld [vmem:[%s2300 + $0x28] sm:$0xff]
  %v2307 = vld [vmem:[%s2300 + $0x30] sm:$0xff]
  %v2308 = vld [vmem:[%s2300 + $0x38] sm:$0xff]
  %v2310 = vsel %vm278, %v2297, 0
  %2312 = vmatprep.subr.mxu0 0.0
  %2313 = vmatpush1.msra.mxu0 0.0
  %2314 = vmatprep.subr.mxu0 0.0
  %2315 = vmatpush1.msra.mxu0 0.0
  %2316 = vmatprep.subr.mxu0 0.0
  %2317 = vmatpush1.msra.mxu0 0.0
  %2318 = vmatprep.subr.mxu0 0.0
  %2319 = vmatpush1.msra.mxu0 0.0
  %2320 = vmatprep.subr.mxu0 0.0
  %2321 = vmatpush1.msra.mxu0 0.0
  %2322 = vmatprep.subr.mxu0 0.0
  %2323 = vmatpush1.msra.mxu0 0.0
  %2324 = vmatprep.subr.mxu0 0.0
  %2325 = vmatpush1.msra.mxu0 0.0
  %2326 = vmatprep.subr.mxu0 0.0
  %2327 = vmatpush1.msra.mxu0 0.0
  %2328 = vmatprep.subr.mxu0 0.0
  %2329 = vmatpush1.msra.mxu0 %v2308
  %2330 = vmatprep.subr.mxu0 0.0
  %2331 = vmatpush1.msra.mxu0 %v2307
  %2332 = vmatprep.subr.mxu0 0.0
  %2333 = vmatpush1.msra.mxu0 %v2306
  %2334 = vmatprep.subr.mxu0 0.0
  %2335 = vmatpush1.msra.mxu0 %v2305
  %2336 = vmatprep.subr.mxu0 0.0
  %2337 = vmatpush1.msra.mxu0 %v2304
  %2338 = vmatprep.subr.mxu0 0.0
  %2339 = vmatpush1.msra.mxu0 %v2303
  %2340 = vmatprep.subr.mxu0 0.0
  %2341 = vmatpush1.msra.mxu0 %v2302
  %2342 = vmatprep.subr.mxu0 0.0
  %2343 = vmatpush1.msra.mxu0 %v2301
  %2344 = vmatprep.subr.mxu0 0.0
  %2345 = vmatpush2.msra.mxu0 0.0
  %2346 = vmatprep.subr.mxu0 0.0
  %2347 = vmatpush2.msra.mxu0 0.0
  %2348 = vmatprep.subr.mxu0 0.0
  %2349 = vmatpush2.msra.mxu0 0.0
  %2350 = vmatprep.subr.mxu0 0.0
  %2351 = vmatpush2.msra.mxu0 0.0
  %2352 = vmatprep.subr.mxu0 0.0
  %2353 = vmatpush2.msra.mxu0 0.0
  %2354 = vmatprep.subr.mxu0 0.0
  %2355 = vmatpush2.msra.mxu0 0.0
  %2356 = vmatprep.subr.mxu0 0.0
  %2357 = vmatpush2.msra.mxu0 0.0
  %2358 = vmatprep.subr.mxu0 0.0
  %2359 = vmatpush2.msra.mxu0 0.0
  %2360 = vmatprep.subr.mxu0 0.0
  %2361 = vmatpush2.msra.mxu0 0.0
  %2362 = vmatprep.subr.mxu0 0.0
  %2363 = vmatpush2.msra.mxu0 0.0
  %2364 = vmatprep.subr.mxu0 0.0
  %2365 = vmatpush2.msra.mxu0 0.0
  %2366 = vmatprep.subr.mxu0 0.0
  %2367 = vmatpush2.msra.mxu0 0.0
  %2368 = vmatprep.subr.mxu0 0.0
  %2369 = vmatpush2.msra.mxu0 0.0
  %2370 = vmatprep.subr.mxu0 0.0
  %2371 = vmatpush2.msra.mxu0 0.0
  %2372 = vmatprep.subr.mxu0 0.0
  %2373 = vmatpush2.msra.mxu0 0.0
  %2374 = vmatprep.subr.mxu0 0.0
  %2375 = vmatpush2.msra.mxu0 0.0
  %2376 = vmatprep.mubr.f32.mxu0 0.0
  %2377 = vmatmul.mubr.f32.gmra.mxu0 %v2310
  %v2378 = vpop.f32.mrf.mxu0
  %v2379 = vadd.f32 0.0, %v2378
  %v2380 = vpop.f32.mrf.mxu0
  %2381 = vdwg.mxu0
  %v2382 = vadd.f32 %v2222, %v2379
  %s2383 = scalar_lea.vmem %s11, 24
  %v2384 = vld [vmem:[%s2383] sm:$0xff]
  %v2386 = vsel %vm1913, %v2384, 0
  %2388 = vmatprep.subr.mxu0 0.0
  %2389 = vmatpush1.msra.mxu0 0.0
  %2390 = vmatprep.subr.mxu0 0.0
  %2391 = vmatpush1.msra.mxu0 0.0
  %2392 = vmatprep.subr.mxu0 0.0
  %2393 = vmatpush1.msra.mxu0 0.0
  %2394 = vmatprep.subr.mxu0 0.0
  %2395 = vmatpush1.msra.mxu0 0.0
  %2396 = vmatprep.subr.mxu0 0.0
  %2397 = vmatpush1.msra.mxu0 0.0
  %2398 = vmatprep.subr.mxu0 0.0
  %2399 = vmatpush1.msra.mxu0 0.0
  %2400 = vmatprep.subr.mxu0 0.0
  %2401 = vmatpush1.msra.mxu0 0.0
  %2402 = vmatprep.subr.mxu0 0.0
  %2403 = vmatpush1.msra.mxu0 0.0
  %2404 = vmatprep.subr.mxu0 0.0
  %2405 = vmatpush1.msra.mxu0 0.0
  %2406 = vmatprep.subr.mxu0 0.0
  %2407 = vmatpush1.msra.mxu0 0.0
  %2408 = vmatprep.subr.mxu0 0.0
  %2409 = vmatpush1.msra.mxu0 0.0
  %2410 = vmatprep.subr.mxu0 0.0
  %2411 = vmatpush1.msra.mxu0 0.0
  %2412 = vmatprep.subr.mxu0 0.0
  %2413 = vmatpush1.msra.mxu0 0.0
  %2414 = vmatprep.subr.mxu0 0.0
  %2415 = vmatpush1.msra.mxu0 0.0
  %2416 = vmatprep.subr.mxu0 0.0
  %2417 = vmatpush1.msra.mxu0 0.0
  %2418 = vmatprep.subr.mxu0 0.0
  %2419 = vmatpush1.msra.mxu0 %v1911
  %2420 = vmatprep.subr.mxu0 0.0
  %2421 = vmatpush2.msra.mxu0 0.0
  %2422 = vmatprep.subr.mxu0 0.0
  %2423 = vmatpush2.msra.mxu0 0.0
  %2424 = vmatprep.subr.mxu0 0.0
  %2425 = vmatpush2.msra.mxu0 0.0
  %2426 = vmatprep.subr.mxu0 0.0
  %2427 = vmatpush2.msra.mxu0 0.0
  %2428 = vmatprep.subr.mxu0 0.0
  %2429 = vmatpush2.msra.mxu0 0.0
  %2430 = vmatprep.subr.mxu0 0.0
  %2431 = vmatpush2.msra.mxu0 0.0
  %2432 = vmatprep.subr.mxu0 0.0
  %2433 = vmatpush2.msra.mxu0 0.0
  %2434 = vmatprep.subr.mxu0 0.0
  %2435 = vmatpush2.msra.mxu0 0.0
  %2436 = vmatprep.subr.mxu0 0.0
  %2437 = vmatpush2.msra.mxu0 0.0
  %2438 = vmatprep.subr.mxu0 0.0
  %2439 = vmatpush2.msra.mxu0 0.0
  %2440 = vmatprep.subr.mxu0 0.0
  %2441 = vmatpush2.msra.mxu0 0.0
  %2442 = vmatprep.subr.mxu0 0.0
  %2443 = vmatpush2.msra.mxu0 0.0
  %2444 = vmatprep.subr.mxu0 0.0
  %2445 = vmatpush2.msra.mxu0 0.0
  %2446 = vmatprep.subr.mxu0 0.0
  %2447 = vmatpush2.msra.mxu0 0.0
  %2448 = vmatprep.subr.mxu0 0.0
  %2449 = vmatpush2.msra.mxu0 0.0
  %2450 = vmatprep.subr.mxu0 0.0
  %2451 = vmatpush2.msra.mxu0 0.0
  %2452 = vmatprep.mubr.f32.mxu0 0.0
  %2453 = vmatmul.mubr.f32.gmra.mxu0 %v2386
  %v2454 = vpop.f32.mrf.mxu0
  %v2455 = vadd.f32 0.0, %v2454
  %v2456 = vpop.f32.mrf.mxu0
  %2457 = vdwg.mxu0
  %s2458 = scalar_lea.vmem %s12, 192
  %v2459 = vld [vmem:[%s2458] sm:$0xff]
  %v2460 = vld [vmem:[%s2458 + $0x8] sm:$0xff]
  %v2461 = vld [vmem:[%s2458 + $0x10] sm:$0xff]
  %v2462 = vld [vmem:[%s2458 + $0x18] sm:$0xff]
  %v2463 = vld [vmem:[%s2458 + $0x20] sm:$0xff]
  %v2464 = vld [vmem:[%s2458 + $0x28] sm:$0xff]
  %v2465 = vld [vmem:[%s2458 + $0x30] sm:$0xff]
  %v2466 = vld [vmem:[%s2458 + $0x38] sm:$0xff]
  %v2468 = vsel %vm278, %v2455, 0
  %2470 = vmatprep.subr.mxu0 0.0
  %2471 = vmatpush1.msra.mxu0 0.0
  %2472 = vmatprep.subr.mxu0 0.0
  %2473 = vmatpush1.msra.mxu0 0.0
  %2474 = vmatprep.subr.mxu0 0.0
  %2475 = vmatpush1.msra.mxu0 0.0
  %2476 = vmatprep.subr.mxu0 0.0
  %2477 = vmatpush1.msra.mxu0 0.0
  %2478 = vmatprep.subr.mxu0 0.0
  %2479 = vmatpush1.msra.mxu0 0.0
  %2480 = vmatprep.subr.mxu0 0.0
  %2481 = vmatpush1.msra.mxu0 0.0
  %2482 = vmatprep.subr.mxu0 0.0
  %2483 = vmatpush1.msra.mxu0 0.0
  %2484 = vmatprep.subr.mxu0 0.0
  %2485 = vmatpush1.msra.mxu0 0.0
  %2486 = vmatprep.subr.mxu0 0.0
  %2487 = vmatpush1.msra.mxu0 %v2466
  %2488 = vmatprep.subr.mxu0 0.0
  %2489 = vmatpush1.msra.mxu0 %v2465
  %2490 = vmatprep.subr.mxu0 0.0
  %2491 = vmatpush1.msra.mxu0 %v2464
  %2492 = vmatprep.subr.mxu0 0.0
  %2493 = vmatpush1.msra.mxu0 %v2463
  %2494 = vmatprep.subr.mxu0 0.0
  %2495 = vmatpush1.msra.mxu0 %v2462
  %2496 = vmatprep.subr.mxu0 0.0
  %2497 = vmatpush1.msra.mxu0 %v2461
  %2498 = vmatprep.subr.mxu0 0.0
  %2499 = vmatpush1.msra.mxu0 %v2460
  %2500 = vmatprep.subr.mxu0 0.0
  %2501 = vmatpush1.msra.mxu0 %v2459
  %2502 = vmatprep.subr.mxu0 0.0
  %2503 = vmatpush2.msra.mxu0 0.0
  %2504 = vmatprep.subr.mxu0 0.0
  %2505 = vmatpush2.msra.mxu0 0.0
  %2506 = vmatprep.subr.mxu0 0.0
  %2507 = vmatpush2.msra.mxu0 0.0
  %2508 = vmatprep.subr.mxu0 0.0
  %2509 = vmatpush2.msra.mxu0 0.0
  %2510 = vmatprep.subr.mxu0 0.0
  %2511 = vmatpush2.msra.mxu0 0.0
  %2512 = vmatprep.subr.mxu0 0.0
  %2513 = vmatpush2.msra.mxu0 0.0
  %2514 = vmatprep.subr.mxu0 0.0
  %2515 = vmatpush2.msra.mxu0 0.0
  %2516 = vmatprep.subr.mxu0 0.0
  %2517 = vmatpush2.msra.mxu0 0.0
  %2518 = vmatprep.subr.mxu0 0.0
  %2519 = vmatpush2.msra.mxu0 0.0
  %2520 = vmatprep.subr.mxu0 0.0
  %2521 = vmatpush2.msra.mxu0 0.0
  %2522 = vmatprep.subr.mxu0 0.0
  %2523 = vmatpush2.msra.mxu0 0.0
  %2524 = vmatprep.subr.mxu0 0.0
  %2525 = vmatpush2.msra.mxu0 0.0
  %2526 = vmatprep.subr.mxu0 0.0
  %2527 = vmatpush2.msra.mxu0 0.0
  %2528 = vmatprep.subr.mxu0 0.0
  %2529 = vmatpush2.msra.mxu0 0.0
  %2530 = vmatprep.subr.mxu0 0.0
  %2531 = vmatpush2.msra.mxu0 0.0
  %2532 = vmatprep.subr.mxu0 0.0
  %2533 = vmatpush2.msra.mxu0 0.0
  %2534 = vmatprep.mubr.f32.mxu0 0.0
  %2535 = vmatmul.mubr.f32.gmra.mxu0 %v2468
  %v2536 = vpop.f32.mrf.mxu0
  %v2537 = vadd.f32 0.0, %v2536
  %v2538 = vpop.f32.mrf.mxu0
  %2539 = vdwg.mxu0
  %v2540 = vadd.f32 %v2382, %v2537
  %v2541 = vld [vmem:[%s13] sm:$0x1]
  %v2543 = vlaneseq
  %v2544 = vshrl.u32 %v2543, 7
  %v2545 = vsub.s32 0, %v2544
  %v2546 = vrot.slane %v2541, %v2545
  %v2548 = vadd.f32 %v2540, %v2546
  %v2549 = vmax.f32 %v2548, 0.0
  %v2550 = vld [vmem:[%s14] sm:$0xff]
  %v2551 = vld [vmem:[%s14 + $0x8] sm:$0xff]
  %v2552 = vld [vmem:[%s14 + $0x10] sm:$0xff]
  %v2553 = vld [vmem:[%s14 + $0x18] sm:$0xff]
  %v2554 = vld [vmem:[%s15] sm:$0x1]
  %v2556 = vlaneseq
  %v2557 = vshrl.u32 %v2556, 7
  %v2558 = vsub.s32 0, %v2557
  %v2559 = vrot.slane %v2554, %v2558
  %v2562 = vsel %vm61, %v2549, 0
  %2564 = vmatprep.subr.mxu0 0.0
  %2565 = vmatpush1.msra.mxu0 0.0
  %2566 = vmatprep.subr.mxu0 0.0
  %2567 = vmatpush1.msra.mxu0 0.0
  %2568 = vmatprep.subr.mxu0 0.0
  %2569 = vmatpush1.msra.mxu0 0.0
  %2570 = vmatprep.subr.mxu0 0.0
  %2571 = vmatpush1.msra.mxu0 0.0
  %2572 = vmatprep.subr.mxu0 0.0
  %2573 = vmatpush1.msra.mxu0 0.0
  %2574 = vmatprep.subr.mxu0 0.0
  %2575 = vmatpush1.msra.mxu0 0.0
  %2576 = vmatprep.subr.mxu0 0.0
  %2577 = vmatpush1.msra.mxu0 0.0
  %2578 = vmatprep.subr.mxu0 0.0
  %2579 = vmatpush1.msra.mxu0 0.0
  %2580 = vmatprep.subr.mxu0 0.0
  %2581 = vmatpush1.msra.mxu0 0.0
  %2582 = vmatprep.subr.mxu0 0.0
  %2583 = vmatpush1.msra.mxu0 0.0
  %2584 = vmatprep.subr.mxu0 0.0
  %2585 = vmatpush1.msra.mxu0 0.0
  %2586 = vmatprep.subr.mxu0 0.0
  %2587 = vmatpush1.msra.mxu0 0.0
  %2588 = vmatprep.subr.mxu0 0.0
  %2589 = vmatpush1.msra.mxu0 %v2553
  %2590 = vmatprep.subr.mxu0 0.0
  %2591 = vmatpush1.msra.mxu0 %v2552
  %2592 = vmatprep.subr.mxu0 0.0
  %2593 = vmatpush1.msra.mxu0 %v2551
  %2594 = vmatprep.subr.mxu0 0.0
  %2595 = vmatpush1.msra.mxu0 %v2550
  %2596 = vmatprep.subr.mxu0 0.0
  %2597 = vmatpush2.msra.mxu0 0.0
  %2598 = vmatprep.subr.mxu0 0.0
  %2599 = vmatpush2.msra.mxu0 0.0
  %2600 = vmatprep.subr.mxu0 0.0
  %2601 = vmatpush2.msra.mxu0 0.0
  %2602 = vmatprep.subr.mxu0 0.0
  %2603 = vmatpush2.msra.mxu0 0.0
  %2604 = vmatprep.subr.mxu0 0.0
  %2605 = vmatpush2.msra.mxu0 0.0
  %2606 = vmatprep.subr.mxu0 0.0
  %2607 = vmatpush2.msra.mxu0 0.0
  %2608 = vmatprep.subr.mxu0 0.0
  %2609 = vmatpush2.msra.mxu0 0.0
  %2610 = vmatprep.subr.mxu0 0.0
  %2611 = vmatpush2.msra.mxu0 0.0
  %2612 = vmatprep.subr.mxu0 0.0
  %2613 = vmatpush2.msra.mxu0 0.0
  %2614 = vmatprep.subr.mxu0 0.0
  %2615 = vmatpush2.msra.mxu0 0.0
  %2616 = vmatprep.subr.mxu0 0.0
  %2617 = vmatpush2.msra.mxu0 0.0
  %2618 = vmatprep.subr.mxu0 0.0
  %2619 = vmatpush2.msra.mxu0 0.0
  %2620 = vmatprep.subr.mxu0 0.0
  %2621 = vmatpush2.msra.mxu0 0.0
  %2622 = vmatprep.subr.mxu0 0.0
  %2623 = vmatpush2.msra.mxu0 0.0
  %2624 = vmatprep.subr.mxu0 0.0
  %2625 = vmatpush2.msra.mxu0 0.0
  %2626 = vmatprep.subr.mxu0 0.0
  %2627 = vmatpush2.msra.mxu0 0.0
  %2628 = vmatprep.mubr.f32.mxu0 0.0
  %2629 = vmatmul.mubr.f32.gmra.mxu0 %v2562
  %v2630 = vpop.f32.mrf.mxu0
  %v2631 = vadd.f32 %v2559, %v2630
  %v2632 = vpop.f32.mrf.mxu0
  %2633 = vdwg.mxu0
  %2634 = vst [vmem:[%s16] sm:$0xff] %v2631
  // Predicated region
  $region66: #{model_cnn_forward.1} parent=0 // pred_check
    _
  $region67: #{model_cnn_forward.1} parent=0 // pred_check_branch
    %2636 = sbr.rel (0) target = $region69
  $region68: #{model_cnn_forward.1} parent=0 // pred_region
    _
  $region69: #{model_cnn_forward.1} parent=0 // pred_fallthru
    _
  // Predicated region
  $region70: #{model_cnn_forward.1} parent=0 // pred_check
    _
  $region71: #{model_cnn_forward.1} parent=0 // pred_check_branch
    %2638 = sbr.rel (0) target = $region73
  $region72: #{model_cnn_forward.1} parent=0 // pred_region
    _
  $region73: #{model_cnn_forward.1} parent=0 // pred_fallthru
    _

</llo_original>
